<compile_context>
chip_gen: v5e
topology: v5e:2x2
jax: 0.10.0
libtpu: 0.0.40
codegen_flags: <defaults>
</compile_context>

<pallas_src>
import functools

import jax
import jax.numpy as jnp
from jax.experimental import pallas as pl
from jax.experimental.pallas import tpu as pltpu


# ---------------------------------------------------------------------------
# Fused im2col + matmul kernel (one batch element per grid step)
# ---------------------------------------------------------------------------
def _make_conv_kernel(HH, WW, stride, H_out, W_out, F_pad):
    s = stride

    def kernel(x_ref, w_ref, o_ref):
        # x_ref: (s*s, H_ph, W_ph, C) bf16 — phase-decomposed padded image
        # w_ref: (HH*WW, C, F_pad)    bf16 — flattened weights (resident block)
        # o_ref: (H_out, W_out, F_pad) f32
        M = H_out * W_out
        acc = jnp.zeros((M, F_pad), jnp.float32)
        for kh in range(HH):            # small static loops: unrolled, HH*WW dots
            for kw in range(WW):
                phase = (kh % s) * s + (kw % s)
                # Unit-stride shifted slab == the im2col column for this (kh, kw).
                slab = x_ref[phase,
                             pl.ds(kh // s, H_out),
                             pl.ds(kw // s, W_out),
                             :]                                  # (H_out, W_out, C)
                a = slab.reshape(M, slab.shape[-1])               # (M, C) bf16
                acc = acc + jnp.dot(a, w_ref[kh * WW + kw],
                                    preferred_element_type=jnp.float32)
        o_ref[...] = acc.reshape(H_out, W_out, F_pad)

    return kernel


# ---------------------------------------------------------------------------
# Wrapper reproducing MyConvFunction.forward semantics
# ---------------------------------------------------------------------------
@functools.partial(jax.jit, static_argnames=("stride", "padding"))
def my_conv_forward(x, w, b, *, stride, padding):
    """x: (N, C, H, W); w: (F, C, HH, WW); b unused (as in the reference)."""
    del b  # reference forward never adds bias

    N, C, H, W = x.shape
    F, _, HH, WW = w.shape
    s = int(stride)
    pad = int(padding)
    H_out = 1 + (H + 2 * pad - HH) // s
    W_out = 1 + (W + 2 * pad - WW) // s

    LANE = 128
    F_pad = pl.cdiv(F, LANE) * LANE            # lane-dense output columns

    # NHWC + bf16 for the MXU (accumulation stays f32 inside the kernel).
    x_nhwc = jnp.transpose(x, (0, 2, 3, 1)).astype(jnp.bfloat16)

    # Spatial zero-pad; round padded dims up to a multiple of the stride so the
    # phase decomposition is uniform (the extra rows/cols are never read).
    H_padded = H + 2 * pad
    W_padded = W + 2 * pad
    H_pad_r = pl.cdiv(H_padded, s) * s
    W_pad_r = pl.cdiv(W_padded, s) * s
    x_p = jnp.pad(
        x_nhwc,
        ((0, 0), (pad, H_pad_r - H - pad), (pad, W_pad_r - W - pad), (0, 0)),
    )

    # Phase (space-to-depth) decomposition: x_ph[n, a*s+b, i, j, c] ==
    # x_pad[n, i*s+a, j*s+b, c], turning strided conv windows into unit-stride
    # slices inside the kernel.  For stride==1 this is a trivial reshape.
    H_ph, W_ph = H_pad_r // s, W_pad_r // s
    x_ph = x_p.reshape(N, H_ph, s, W_ph, s, C)
    x_ph = x_ph.transpose(0, 2, 4, 1, 3, 5).reshape(N, s * s, H_ph, W_ph, C)

    # Weights: OIHW -> (HH*WW, C, F_pad) bf16, zero-padded on F (lane dim).
    w_r = jnp.transpose(w, (2, 3, 1, 0)).reshape(HH * WW, C, F)
    w_r = jnp.pad(w_r, ((0, 0), (0, 0), (0, F_pad - F))).astype(jnp.bfloat16)

    kernel = _make_conv_kernel(HH, WW, s, H_out, W_out, F_pad)

    out_nhwf = pl.pallas_call(
        kernel,
        out_shape=jax.ShapeDtypeStruct((N, H_out, W_out, F_pad), jnp.float32),
        grid_spec=pltpu.PrefetchScalarGridSpec(
            num_scalar_prefetch=0,
            grid=(N,),
            in_specs=[
                # One padded image per step (batch dim squeezed out).
                pl.BlockSpec((None, s * s, H_ph, W_ph, C),
                             lambda n: (n, 0, 0, 0, 0)),
                # Weights: constant index_map -> resident across the grid.
                pl.BlockSpec((HH * WW, C, F_pad), lambda n: (0, 0, 0)),
            ],
            out_specs=pl.BlockSpec((None, H_out, W_out, F_pad),
                                   lambda n: (n, 0, 0, 0)),
        ),
        compiler_params=pltpu.CompilerParams(
            dimension_semantics=("parallel",),   # megacore: batch split across TCs
        ),
    )(x_ph, w_r)

    out = out_nhwf[..., :F]                     # drop F lane padding
    # Reference module returns NCHW float32; one layout pass at the boundary.
    return jnp.transpose(out, (0, 3, 1, 2))


# ---------------------------------------------------------------------------
# Demo / sanity check
# ---------------------------------------------------------------------------
if __name__ == "__main__":
    key = jax.random.PRNGKey(0)
    kx, kw_, kb = jax.random.split(key, 3)

    # Small shapes consistent with the module: NCHW input, OIHW weight.
    N, C, H, W = 2, 4, 16, 16
    F, HH, WW = 8, 3, 3

    x = jax.random.normal(kx, (N, C, H, W), dtype=jnp.float32)
    w = jax.random.normal(kw_, (F, C, HH, WW), dtype=jnp.float32) * 0.1
    b = jax.random.normal(kb, (F,), dtype=jnp.float32)  # unused, as in reference

    for stride, padding in ((1, 1), (2, 1)):
        out = my_conv_forward(x, w, b, stride=stride, padding=padding)
        out = jax.block_until_ready(out)

        H_out = 1 + (H + 2 * padding - HH) // stride
        W_out = 1 + (W + 2 * padding - WW) // stride
        assert out.shape == (N, F, H_out, W_out)
        assert out.dtype == jnp.float32

        # Same math as the reference triple loop; bf16 MXU inputs with f32
        # accumulation => allow small numeric drift vs the f32 reference.
        ref = jax.lax.conv_general_dilated(
            x, w, window_strides=(stride, stride),
            padding=((padding, padding), (padding, padding)),
            dimension_numbers=("NCHW", "OIHW", "NCHW"),
        )
        assert jnp.allclose(out, ref, atol=5e-2, rtol=5e-2), (
            f"mismatch vs reference conv (stride={stride}, padding={padding})"
        )

    print("KERNEL_OK")
</pallas_src>

<mosaic_0001>
module attributes {stable_mosaic.version = 11 : i64} {
  func.func @kernel(%arg0: i32, %arg1: memref<1x1x18x18x4xbf16, #tpu.memory_space<vmem>>, %arg2: memref<9x4x128xbf16, #tpu.memory_space<vmem>>, %arg3: memref<1x16x16x128xf32, #tpu.memory_space<vmem>>) attributes {dimension_semantics = [#tpu.dimension_semantics<parallel>], iteration_bounds = array<i64: 2>, scalar_prefetch = 0 : i64, scratch_operands = 0 : i64, tpu.core_type = #tpu.core_type<tc>, window_params = [{transform_indices = @transform_0, window_bounds = array<i64: 1, 1, 18, 18, 4>}, {pipeline_mode = #tpu.pipeline_mode<synchronous>, transform_indices = @transform_1, window_bounds = array<i64: 9, 4, 128>}, {transform_indices = @transform_2, window_bounds = array<i64: 1, 16, 16, 128>}]} {
    %cst = arith.constant 0.000000e+00 : f32
    %0 = vector.broadcast %cst : f32 to vector<256x128xf32>
    %c0 = arith.constant 0 : index
    %c0_0 = arith.constant 0 : index
    %c0_1 = arith.constant 0 : index
    %c0_2 = arith.constant 0 : index
    %c0_3 = arith.constant 0 : index
    %1 = vector.load %arg1[%c0, %c0_0, %c0_1, %c0_2, %c0_3] : memref<1x1x18x18x4xbf16, #tpu.memory_space<vmem>>, vector<1x1x16x16x4xbf16>
    %2 = vector.shape_cast %1 : vector<1x1x16x16x4xbf16> to vector<16x16x4xbf16>
    %3 = vector.shape_cast %2 : vector<16x16x4xbf16> to vector<256x4xbf16>
    %c0_4 = arith.constant 0 : index
    %c0_5 = arith.constant 0 : index
    %c0_6 = arith.constant 0 : index
    %4 = vector.load %arg2[%c0_4, %c0_5, %c0_6] : memref<9x4x128xbf16, #tpu.memory_space<vmem>>, vector<1x4x128xbf16>
    %5 = vector.shape_cast %4 : vector<1x4x128xbf16> to vector<4x128xbf16>
    %cst_7 = arith.constant dense<0.000000e+00> : vector<256x128xf32>
    %6 = tpu.matmul %3, %5, %cst_7 {dimension_numbers = #tpu.dot_dimension_numbers<[1], [0], [0], [1], [0, 0, 1, 1], [], []>} : vector<256x4xbf16>, vector<4x128xbf16>, vector<256x128xf32> -> vector<256x128xf32>
    %7 = arith.addf %0, %6 : vector<256x128xf32>
    %c0_8 = arith.constant 0 : index
    %c0_9 = arith.constant 0 : index
    %c0_10 = arith.constant 0 : index
    %c1 = arith.constant 1 : index
    %c0_11 = arith.constant 0 : index
    %8 = vector.load %arg1[%c0_8, %c0_9, %c0_10, %c1, %c0_11] : memref<1x1x18x18x4xbf16, #tpu.memory_space<vmem>>, vector<1x1x16x16x4xbf16>
    %9 = vector.shape_cast %8 : vector<1x1x16x16x4xbf16> to vector<16x16x4xbf16>
    %10 = vector.shape_cast %9 : vector<16x16x4xbf16> to vector<256x4xbf16>
    %c1_12 = arith.constant 1 : index
    %c0_13 = arith.constant 0 : index
    %c0_14 = arith.constant 0 : index
    %11 = vector.load %arg2[%c1_12, %c0_13, %c0_14] : memref<9x4x128xbf16, #tpu.memory_space<vmem>>, vector<1x4x128xbf16>
    %12 = vector.shape_cast %11 : vector<1x4x128xbf16> to vector<4x128xbf16>
    %cst_15 = arith.constant dense<0.000000e+00> : vector<256x128xf32>
    %13 = tpu.matmul %10, %12, %cst_15 {dimension_numbers = #tpu.dot_dimension_numbers<[1], [0], [0], [1], [0, 0, 1, 1], [], []>} : vector<256x4xbf16>, vector<4x128xbf16>, vector<256x128xf32> -> vector<256x128xf32>
    %14 = arith.addf %7, %13 : vector<256x128xf32>
    %c0_16 = arith.constant 0 : index
    %c0_17 = arith.constant 0 : index
    %c0_18 = arith.constant 0 : index
    %c2 = arith.constant 2 : index
    %c0_19 = arith.constant 0 : index
    %15 = vector.load %arg1[%c0_16, %c0_17, %c0_18, %c2, %c0_19] : memref<1x1x18x18x4xbf16, #tpu.memory_space<vmem>>, vector<1x1x16x16x4xbf16>
    %16 = vector.shape_cast %15 : vector<1x1x16x16x4xbf16> to vector<16x16x4xbf16>
    %17 = vector.shape_cast %16 : vector<16x16x4xbf16> to vector<256x4xbf16>
    %c2_20 = arith.constant 2 : index
    %c0_21 = arith.constant 0 : index
    %c0_22 = arith.constant 0 : index
    %18 = vector.load %arg2[%c2_20, %c0_21, %c0_22] : memref<9x4x128xbf16, #tpu.memory_space<vmem>>, vector<1x4x128xbf16>
    %19 = vector.shape_cast %18 : vector<1x4x128xbf16> to vector<4x128xbf16>
    %cst_23 = arith.constant dense<0.000000e+00> : vector<256x128xf32>
    %20 = tpu.matmul %17, %19, %cst_23 {dimension_numbers = #tpu.dot_dimension_numbers<[1], [0], [0], [1], [0, 0, 1, 1], [], []>} : vector<256x4xbf16>, vector<4x128xbf16>, vector<256x128xf32> -> vector<256x128xf32>
    %21 = arith.addf %14, %20 : vector<256x128xf32>
    %c0_24 = arith.constant 0 : index
    %c0_25 = arith.constant 0 : index
    %c1_26 = arith.constant 1 : index
    %c0_27 = arith.constant 0 : index
    %c0_28 = arith.constant 0 : index
    %22 = vector.load %arg1[%c0_24, %c0_25, %c1_26, %c0_27, %c0_28] : memref<1x1x18x18x4xbf16, #tpu.memory_space<vmem>>, vector<1x1x16x16x4xbf16>
    %23 = vector.shape_cast %22 : vector<1x1x16x16x4xbf16> to vector<16x16x4xbf16>
    %24 = vector.shape_cast %23 : vector<16x16x4xbf16> to vector<256x4xbf16>
    %c3 = arith.constant 3 : index
    %c0_29 = arith.constant 0 : index
    %c0_30 = arith.constant 0 : index
    %25 = vector.load %arg2[%c3, %c0_29, %c0_30] : memref<9x4x128xbf16, #tpu.memory_space<vmem>>, vector<1x4x128xbf16>
    %26 = vector.shape_cast %25 : vector<1x4x128xbf16> to vector<4x128xbf16>
    %cst_31 = arith.constant dense<0.000000e+00> : vector<256x128xf32>
    %27 = tpu.matmul %24, %26, %cst_31 {dimension_numbers = #tpu.dot_dimension_numbers<[1], [0], [0], [1], [0, 0, 1, 1], [], []>} : vector<256x4xbf16>, vector<4x128xbf16>, vector<256x128xf32> -> vector<256x128xf32>
    %28 = arith.addf %21, %27 : vector<256x128xf32>
    %c0_32 = arith.constant 0 : index
    %c0_33 = arith.constant 0 : index
    %c1_34 = arith.constant 1 : index
    %c1_35 = arith.constant 1 : index
    %c0_36 = arith.constant 0 : index
    %29 = vector.load %arg1[%c0_32, %c0_33, %c1_34, %c1_35, %c0_36] : memref<1x1x18x18x4xbf16, #tpu.memory_space<vmem>>, vector<1x1x16x16x4xbf16>
    %30 = vector.shape_cast %29 : vector<1x1x16x16x4xbf16> to vector<16x16x4xbf16>
    %31 = vector.shape_cast %30 : vector<16x16x4xbf16> to vector<256x4xbf16>
    %c4 = arith.constant 4 : index
    %c0_37 = arith.constant 0 : index
    %c0_38 = arith.constant 0 : index
    %32 = vector.load %arg2[%c4, %c0_37, %c0_38] : memref<9x4x128xbf16, #tpu.memory_space<vmem>>, vector<1x4x128xbf16>
    %33 = vector.shape_cast %32 : vector<1x4x128xbf16> to vector<4x128xbf16>
    %cst_39 = arith.constant dense<0.000000e+00> : vector<256x128xf32>
    %34 = tpu.matmul %31, %33, %cst_39 {dimension_numbers = #tpu.dot_dimension_numbers<[1], [0], [0], [1], [0, 0, 1, 1], [], []>} : vector<256x4xbf16>, vector<4x128xbf16>, vector<256x128xf32> -> vector<256x128xf32>
    %35 = arith.addf %28, %34 : vector<256x128xf32>
    %c0_40 = arith.constant 0 : index
    %c0_41 = arith.constant 0 : index
    %c1_42 = arith.constant 1 : index
    %c2_43 = arith.constant 2 : index
    %c0_44 = arith.constant 0 : index
    %36 = vector.load %arg1[%c0_40, %c0_41, %c1_42, %c2_43, %c0_44] : memref<1x1x18x18x4xbf16, #tpu.memory_space<vmem>>, vector<1x1x16x16x4xbf16>
    %37 = vector.shape_cast %36 : vector<1x1x16x16x4xbf16> to vector<16x16x4xbf16>
    %38 = vector.shape_cast %37 : vector<16x16x4xbf16> to vector<256x4xbf16>
    %c5 = arith.constant 5 : index
    %c0_45 = arith.constant 0 : index
    %c0_46 = arith.constant 0 : index
    %39 = vector.load %arg2[%c5, %c0_45, %c0_46] : memref<9x4x128xbf16, #tpu.memory_space<vmem>>, vector<1x4x128xbf16>
    %40 = vector.shape_cast %39 : vector<1x4x128xbf16> to vector<4x128xbf16>
    %cst_47 = arith.constant dense<0.000000e+00> : vector<256x128xf32>
    %41 = tpu.matmul %38, %40, %cst_47 {dimension_numbers = #tpu.dot_dimension_numbers<[1], [0], [0], [1], [0, 0, 1, 1], [], []>} : vector<256x4xbf16>, vector<4x128xbf16>, vector<256x128xf32> -> vector<256x128xf32>
    %42 = arith.addf %35, %41 : vector<256x128xf32>
    %c0_48 = arith.constant 0 : index
    %c0_49 = arith.constant 0 : index
    %c2_50 = arith.constant 2 : index
    %c0_51 = arith.constant 0 : index
    %c0_52 = arith.constant 0 : index
    %43 = vector.load %arg1[%c0_48, %c0_49, %c2_50, %c0_51, %c0_52] : memref<1x1x18x18x4xbf16, #tpu.memory_space<vmem>>, vector<1x1x16x16x4xbf16>
    %44 = vector.shape_cast %43 : vector<1x1x16x16x4xbf16> to vector<16x16x4xbf16>
    %45 = vector.shape_cast %44 : vector<16x16x4xbf16> to vector<256x4xbf16>
    %c6 = arith.constant 6 : index
    %c0_53 = arith.constant 0 : index
    %c0_54 = arith.constant 0 : index
    %46 = vector.load %arg2[%c6, %c0_53, %c0_54] : memref<9x4x128xbf16, #tpu.memory_space<vmem>>, vector<1x4x128xbf16>
    %47 = vector.shape_cast %46 : vector<1x4x128xbf16> to vector<4x128xbf16>
    %cst_55 = arith.constant dense<0.000000e+00> : vector<256x128xf32>
    %48 = tpu.matmul %45, %47, %cst_55 {dimension_numbers = #tpu.dot_dimension_numbers<[1], [0], [0], [1], [0, 0, 1, 1], [], []>} : vector<256x4xbf16>, vector<4x128xbf16>, vector<256x128xf32> -> vector<256x128xf32>
    %49 = arith.addf %42, %48 : vector<256x128xf32>
    %c0_56 = arith.constant 0 : index
    %c0_57 = arith.constant 0 : index
    %c2_58 = arith.constant 2 : index
    %c1_59 = arith.constant 1 : index
    %c0_60 = arith.constant 0 : index
    %50 = vector.load %arg1[%c0_56, %c0_57, %c2_58, %c1_59, %c0_60] : memref<1x1x18x18x4xbf16, #tpu.memory_space<vmem>>, vector<1x1x16x16x4xbf16>
    %51 = vector.shape_cast %50 : vector<1x1x16x16x4xbf16> to vector<16x16x4xbf16>
    %52 = vector.shape_cast %51 : vector<16x16x4xbf16> to vector<256x4xbf16>
    %c7 = arith.constant 7 : index
    %c0_61 = arith.constant 0 : index
    %c0_62 = arith.constant 0 : index
    %53 = vector.load %arg2[%c7, %c0_61, %c0_62] : memref<9x4x128xbf16, #tpu.memory_space<vmem>>, vector<1x4x128xbf16>
    %54 = vector.shape_cast %53 : vector<1x4x128xbf16> to vector<4x128xbf16>
    %cst_63 = arith.constant dense<0.000000e+00> : vector<256x128xf32>
    %55 = tpu.matmul %52, %54, %cst_63 {dimension_numbers = #tpu.dot_dimension_numbers<[1], [0], [0], [1], [0, 0, 1, 1], [], []>} : vector<256x4xbf16>, vector<4x128xbf16>, vector<256x128xf32> -> vector<256x128xf32>
    %56 = arith.addf %49, %55 : vector<256x128xf32>
    %c0_64 = arith.constant 0 : index
    %c0_65 = arith.constant 0 : index
    %c2_66 = arith.constant 2 : index
    %c2_67 = arith.constant 2 : index
    %c0_68 = arith.constant 0 : index
    %57 = vector.load %arg1[%c0_64, %c0_65, %c2_66, %c2_67, %c0_68] : memref<1x1x18x18x4xbf16, #tpu.memory_space<vmem>>, vector<1x1x16x16x4xbf16>
    %58 = vector.shape_cast %57 : vector<1x1x16x16x4xbf16> to vector<16x16x4xbf16>
    %59 = vector.shape_cast %58 : vector<16x16x4xbf16> to vector<256x4xbf16>
    %c8 = arith.constant 8 : index
    %c0_69 = arith.constant 0 : index
    %c0_70 = arith.constant 0 : index
    %60 = vector.load %arg2[%c8, %c0_69, %c0_70] : memref<9x4x128xbf16, #tpu.memory_space<vmem>>, vector<1x4x128xbf16>
    %61 = vector.shape_cast %60 : vector<1x4x128xbf16> to vector<4x128xbf16>
    %cst_71 = arith.constant dense<0.000000e+00> : vector<256x128xf32>
    %62 = tpu.matmul %59, %61, %cst_71 {dimension_numbers = #tpu.dot_dimension_numbers<[1], [0], [0], [1], [0, 0, 1, 1], [], []>} : vector<256x4xbf16>, vector<4x128xbf16>, vector<256x128xf32> -> vector<256x128xf32>
    %63 = arith.addf %56, %62 : vector<256x128xf32>
    %64 = vector.shape_cast %63 : vector<256x128xf32> to vector<16x16x128xf32>
    %c0_72 = arith.constant 0 : index
    %c0_73 = arith.constant 0 : index
    %c0_74 = arith.constant 0 : index
    %c0_75 = arith.constant 0 : index
    %65 = vector.load %arg3[%c0_72, %c0_73, %c0_74, %c0_75] : memref<1x16x16x128xf32, #tpu.memory_space<vmem>>, vector<1x16x16x128xf32>
    %66 = vector.shape_cast %65 : vector<1x16x16x128xf32> to vector<16x16x128xf32>
    %67 = vector.shape_cast %64 : vector<16x16x128xf32> to vector<1x16x16x128xf32>
    tpu.vector_store %arg3[%c0_72, %c0_73, %c0_74, %c0_75], %67 {strides = array<i32>} : memref<1x16x16x128xf32, #tpu.memory_space<vmem>>, vector<1x16x16x128xf32>,
    return
  }
  func.func @transform_0(%arg0: i32) -> (i32, i32, i32, i32, i32) {
    %c0_i32 = arith.constant 0 : i32
    %c0_i32_0 = arith.constant 0 : i32
    %c0_i32_1 = arith.constant 0 : i32
    %c0_i32_2 = arith.constant 0 : i32
    %c0_i32_3 = arith.constant 0 : i32
    return %arg0, %c0_i32, %c0_i32_0, %c0_i32_1, %c0_i32_2 : i32, i32, i32, i32, i32
  }
  func.func @transform_1(%arg0: i32) -> (i32, i32, i32) {
    %c0_i32 = arith.constant 0 : i32
    %c0_i32_0 = arith.constant 0 : i32
    %c0_i32_1 = arith.constant 0 : i32
    %c0_i32_2 = arith.constant 0 : i32
    return %c0_i32, %c0_i32_0, %c0_i32_1 : i32, i32, i32
  }
  func.func @transform_2(%arg0: i32) -> (i32, i32, i32, i32) {
    %c0_i32 = arith.constant 0 : i32
    %c0_i32_0 = arith.constant 0 : i32
    %c0_i32_1 = arith.constant 0 : i32
    %c0_i32_2 = arith.constant 0 : i32
    return %arg0, %c0_i32, %c0_i32_0, %c0_i32_1 : i32, i32, i32, i32
  }
}

</mosaic_0001>

<llo_original>
// kernel: my_conv_forward.1
$region0: #{my_conv_forward.1}
  #allocation0 [shape = 'u32[]', space=smem, size = 0x4, offset = 0x4, fixed_abs, tag = 'smem constant byte address 0x4 - core index']
  #allocation1 [shape = 'u32[72,128]{1,0:T(1,128)}', space=vmem, size = 0x9000, scoped, tag = 'internal scratch']
  %s0 = inlined_call_operand.vmem [shape: bf16[2,1,18,18,4], index: 0, kind: input, shape index: {}]
  %s1 = inlined_call_operand.vmem [shape: bf16[9,4,128], index: 1, kind: input, shape index: {}]
  %s2 = inlined_call_operand.vmem [shape: f32[2,16,16,128], index: 2, kind: output, shape index: {}]
  %s3 = sld [smem:[#allocation0]]
  $region41: #{my_conv_forward.1} parent=0
    _
  %s5 = ssub.s32 1, %s3
  %s6 = scalar_select 0, %s5, %s3
  loop: start=0, step=1, limit=4
  $region2: #{my_conv_forward.1} parent=0 // loop_pre_header
    _
  $region3: #{my_conv_forward.1} parent=0 // loop_header
    %s8 = sphi 0, %s12
    %p9 = scmp.ge.s32.totalorder %s8, 4
    %s18 = sphi 0, %s20
    %s21 = sphi 0, %s18
    %s22 = sphi 0, %s21
    %s38 = sphi 0, %s22
    %s42 = sphi 0, %s42
    %s44 = sphi 0, %s42
    %s45 = sphi 0, %s44
    %s59 = sphi 0, %s45
    %s65 = sphi 0, %s67
    %s68 = sphi 0, %s65
    %s69 = sphi 0, %s68
    %s85 = sphi 0, %s69
  $region4: #{my_conv_forward.1} parent=0 // loop_header_branch
    %11 = sbr.rel (%p9) target = $region8
  $region5: #{my_conv_forward.1} parent=0 // loop_body
    %s13 = ssub.s32 %s8, 1
    %s14 = ssub.s32 %s8, 2
    %s15 = sadd.s32 %s8, 1
    %s16 = ssub.s32 %s8, %s15
    %p17 = scmp.eq.s32.totalorder %s16, 0
    %s19 = sadd.s32 %s18, 1
    %s20 = scalar_select %p17, %s18, %s19
    %p23 = pneg %p17
    %p24 = scmp.eq.s32.totalorder %s8, 1
    %p25 = por %p23, %p24
    %p26 = scmp.ne.s32.totalorder %s18, %s21
    %p27 = scmp.eq.s32.totalorder %s8, 0
    %p28 = por %p26, %p27
    %p29 = scmp.ne.s32.totalorder %s18, %s21
    %p30 = scmp.eq.s32.totalorder %s13, 1
    %p31 = por %p29, %p30
    %p32 = scmp.ne.s32.totalorder %s21, %s22
    %p33 = scmp.eq.s32.totalorder %s13, 0
    %p34 = por %p32, %p33
    %p35 = scmp.ne.s32.totalorder %s21, %s22
    %p36 = scmp.eq.s32.totalorder %s14, 1
    %p37 = por %p35, %p36
    %p39 = scmp.ne.s32.totalorder %s22, %s38
    %p40 = scmp.eq.s32.totalorder %s14, 0
    %p41 = por %p39, %p40
    %s43 = sadd.s32 %s42, 1
    %p46 = scmp.eq.s32.totalorder %s8, 1
    %p47 = scmp.ne.s32.totalorder %s42, %s44
    %p48 = scmp.eq.s32.totalorder %s8, 0
    %p49 = por %p47, %p48
    %p50 = scmp.ne.s32.totalorder %s42, %s44
    %p51 = scmp.eq.s32.totalorder %s13, 1
    %p52 = por %p50, %p51
    %p53 = scmp.ne.s32.totalorder %s44, %s45
    %p54 = scmp.eq.s32.totalorder %s13, 0
    %p55 = por %p53, %p54
    %p56 = scmp.ne.s32.totalorder %s44, %s45
    %p57 = scmp.eq.s32.totalorder %s14, 1
    %p58 = por %p56, %p57
    %p60 = scmp.ne.s32.totalorder %s45, %s59
    %p61 = scmp.eq.s32.totalorder %s14, 0
    %p62 = por %p60, %p61
    %s63 = ssub.s32 %s8, %s15
    %p64 = scmp.eq.s32.totalorder %s63, 0
    %s66 = sadd.s32 %s65, 1
    %s67 = scalar_select %p64, %s65, %s66
    %p70 = pneg %p64
    %p71 = scmp.eq.s32.totalorder %s8, 1
    %p72 = por %p70, %p71
    %p73 = scmp.ne.s32.totalorder %s65, %s68
    %p74 = scmp.eq.s32.totalorder %s8, 0
    %p75 = por %p73, %p74
    %p76 = scmp.ne.s32.totalorder %s65, %s68
    %p77 = scmp.eq.s32.totalorder %s13, 1
    %p78 = por %p76, %p77
    %p79 = scmp.ne.s32.totalorder %s68, %s69
    %p80 = scmp.eq.s32.totalorder %s13, 0
    %p81 = por %p79, %p80
    %p82 = scmp.ne.s32.totalorder %s68, %s69
    %p83 = scmp.eq.s32.totalorder %s14, 1
    %p84 = por %p82, %p83
    %p86 = scmp.ne.s32.totalorder %s69, %s85
    %p87 = scmp.eq.s32.totalorder %s14, 0
    %p88 = por %p86, %p87
    %p89 = scmp.le.s32.totalorder 1, %s8
    %p90 = scmp.lt.s32.totalorder %s8, 3
    %p91 = pnand %p89, %p90
    %p92 = pneg %p91
    // Predicated region
    $region9: #{my_conv_forward.1} parent=5 // pred_check
      _
    $region10: #{my_conv_forward.1} parent=5 // pred_check_branch
      %94 = sbr.rel (%p91) target = $region12
    $region11: #{my_conv_forward.1} parent=5 // pred_region
      %s95 = ssub.s32 %s8, 1
      // Predicated region
      $region13: #{my_conv_forward.1} parent=11 // pred_check
        %p96 = pneg %p55
      $region14: #{my_conv_forward.1} parent=11 // pred_check_branch
        %98 = sbr.rel (%p96) target = $region16
      $region15: #{my_conv_forward.1} parent=11 // pred_region
        _
      $region16: #{my_conv_forward.1} parent=11 // pred_fallthru
        _
    $region12: #{my_conv_forward.1} parent=5 // pred_fallthru
      _
    %p99 = scmp.lt.s32.totalorder %s8, 2
    // Predicated region
    $region17: #{my_conv_forward.1} parent=5 // pred_check
      %p100 = pneg %p99
    $region18: #{my_conv_forward.1} parent=5 // pred_check_branch
      %102 = sbr.rel (%p100) target = $region20
    $region19: #{my_conv_forward.1} parent=5 // pred_region
      // Predicated region
      $region21: #{my_conv_forward.1} parent=19 // pred_check
        %p103 = pneg %p28
      $region22: #{my_conv_forward.1} parent=19 // pred_check_branch
        %105 = sbr.rel (%p103) target = $region24
      $region23: #{my_conv_forward.1} parent=19 // pred_region
        %p106 = scmp.lt.s32.totalorder %s8, 1
        %s107 = scalar_select %p106, %s8, 1
        %s108 = smul.addr %s107, 54
        %s109 = smul.addr %s108, 4
        %s110 = scalar_lea.vmem %s0, %s109
      $region24: #{my_conv_forward.1} parent=19 // pred_fallthru
        _
    $region20: #{my_conv_forward.1} parent=5 // pred_fallthru
      _
    %p111 = scmp.le.s32.totalorder 1, %s8
    %p112 = scmp.lt.s32.totalorder %s8, 3
    %p113 = pnand %p111, %p112
    %p114 = pneg %p113
    // Predicated region
    $region25: #{my_conv_forward.1} parent=5 // pred_check
      _
    $region26: #{my_conv_forward.1} parent=5 // pred_check_branch
      %116 = sbr.rel (%p113) target = $region28
    $region27: #{my_conv_forward.1} parent=5 // pred_region
      %s117 = ssub.s32 %s8, 1
      %p118 = scmp.lt.s32.totalorder %s13, 1
      %s119 = scalar_select %p118, %s13, 1
      %s120 = smul.addr %s119, 54
      %s121 = smul.addr %s120, 4
      %s122 = scalar_lea.vmem %s0, %s121
      %p123 = pneg %p34
      %p124 = pneg %p31
      %p125 = pneg %p55
      %p126 = pneg %p52
      %p127 = pneg %p81
      %p128 = pneg %p78
      %p129 = scmp.lt.s32.totalorder %s13, 1
      %s130 = scalar_select %p129, %s13, 1
      %s131 = smul.addr %s130, 32
      %s132 = smul.addr %s131, 8
      %s133 = scalar_lea.vmem %s2, %s132
      %p134 = scmp.lt.s32.totalorder %s13, 1
      %s135 = scalar_select %p134, %s13, 1
      %s136 = smul.addr %s135, 54
      %s137 = smul.addr %s136, 4
      %s138 = scalar_lea.vmem %s0, %s137
      %p139 = scmp.lt.s32.totalorder %s13, 1
      %s140 = scalar_select %p139, %s13, 1
      %s141 = smul.addr %s140, 32
      %s142 = smul.addr %s141, 8
      %s143 = scalar_lea.vmem %s2, %s142
      %v145 = vld [vmem:[%s138] sm:$0xf]
      %v146 = vld [vmem:[%s138 + $0x4] sm:$0xf]
      %v147 = vld [vmem:[%s138 + $0xc] sm:$0xf]
      %v148 = vld [vmem:[%s138 + $0x10] sm:$0xf]
      %v149 = vld [vmem:[%s138 + $0x18] sm:$0xf]
      %v150 = vld [vmem:[%s138 + $0x1c] sm:$0xf]
      %v151 = vld [vmem:[%s138 + $0x24] sm:$0xf]
      %v152 = vld [vmem:[%s138 + $0x28] sm:$0xf]
      %v153 = vld [vmem:[%s138 + $0x30] sm:$0xf]
      %v154 = vld [vmem:[%s138 + $0x34] sm:$0xf]
      %v155 = vld [vmem:[%s138 + $0x3c] sm:$0xf]
      %v156 = vld [vmem:[%s138 + $0x40] sm:$0xf]
      %v157 = vld [vmem:[%s138 + $0x48] sm:$0xf]
      %v158 = vld [vmem:[%s138 + $0x4c] sm:$0xf]
      %v159 = vld [vmem:[%s138 + $0x54] sm:$0xf]
      %v160 = vld [vmem:[%s138 + $0x58] sm:$0xf]
      %v161 = vld [vmem:[%s138 + $0x60] sm:$0xf]
      %v162 = vld [vmem:[%s138 + $0x64] sm:$0xf]
      %v163 = vld [vmem:[%s138 + $0x6c] sm:$0xf]
      %v164 = vld [vmem:[%s138 + $0x70] sm:$0xf]
      %v165 = vld [vmem:[%s138 + $0x78] sm:$0xf]
      %v166 = vld [vmem:[%s138 + $0x7c] sm:$0xf]
      %v167 = vld [vmem:[%s138 + $0x84] sm:$0xf]
      %v168 = vld [vmem:[%s138 + $0x88] sm:$0xf]
      %v169 = vld [vmem:[%s138 + $0x90] sm:$0xf]
      %v170 = vld [vmem:[%s138 + $0x94] sm:$0xf]
      %v171 = vld [vmem:[%s138 + $0x9c] sm:$0xf]
      %v172 = vld [vmem:[%s138 + $0xa0] sm:$0xf]
      %v173 = vld [vmem:[%s138 + $0xa8] sm:$0xf]
      %v174 = vld [vmem:[%s138 + $0xac] sm:$0xf]
      %v175 = vld [vmem:[%s138 + $0xb4] sm:$0xf]
      %v176 = vld [vmem:[%s138 + $0xb8] sm:$0xf]
      %v177 = vld [vmem:[%s1] sm:$0x3]
      %v178 = vld [vmem:[%s138 + $0x8] sm:$0x1]
      %v179 = vld [vmem:[%s138 + $0x14] sm:$0x1]
      %v180 = vld [vmem:[%s138 + $0x20] sm:$0x1]
      %v181 = vld [vmem:[%s138 + $0x2c] sm:$0x1]
      %v182 = vld [vmem:[%s138 + $0x38] sm:$0x1]
      %v183 = vld [vmem:[%s138 + $0x44] sm:$0x1]
      %v184 = vld [vmem:[%s138 + $0x50] sm:$0x1]
      %v185 = vld [vmem:[%s138 + $0x5c] sm:$0x1]
      %v186 = vld [vmem:[%s138 + $0x68] sm:$0x1]
      %v187 = vld [vmem:[%s138 + $0x74] sm:$0x1]
      %v188 = vld [vmem:[%s138 + $0x80] sm:$0x1]
      %v189 = vld [vmem:[%s138 + $0x8c] sm:$0x1]
      %v190 = vld [vmem:[%s138 + $0x98] sm:$0x1]
      %v191 = vld [vmem:[%s138 + $0xa4] sm:$0x1]
      %v192 = vld [vmem:[%s138 + $0xb0] sm:$0x1]
      %v193 = vld [vmem:[%s138 + $0xbc] sm:$0x1]
      %vm194 = vsmask.f32 3328
      %vm195 = vsmask.f32 7440
      %vm196 = vmor %vm194, %vm195
      %v198 = vshrl.u32 %v145, 16
      %v200 = vrot.slane %v198, 4
      %v201 = vshll.u32 %v145, 16
      %v203 = vrot.slane %v201, 5
      %v204 = vor.u32 %v200, %v203
      %v205 = vrot.slane %v204, 4
      %v207 = vshll.u32 %v146, 16
      %v209 = vrot.slane %v207, 5
      %v210 = vsel %vm196, %v205, %v209
      %v211 = vshrl.u32 %v146, 16
      %v213 = vrot.slane %v211, 4
      %v214 = vor.u32 %v213, %v209
      %v215 = vrot.slane %v214, 4
      %v217 = vshll.u32 %v178, 16
      %v219 = vrot.slane %v217, 5
      %v220 = vsel %vm196, %v215, %v219
      %v222 = vshrl.u32 %v147, 16
      %v224 = vrot.slane %v222, 4
      %v225 = vshll.u32 %v147, 16
      %v227 = vrot.slane %v225, 5
      %v228 = vor.u32 %v224, %v227
      %v229 = vrot.slane %v228, 4
      %v231 = vshll.u32 %v148, 16
      %v233 = vrot.slane %v231, 5
      %v234 = vsel %vm196, %v229, %v233
      %v235 = vshrl.u32 %v148, 16
      %v237 = vrot.slane %v235, 4
      %v238 = vor.u32 %v237, %v233
      %v239 = vrot.slane %v238, 4
      %v241 = vshll.u32 %v179, 16
      %v243 = vrot.slane %v241, 5
      %v244 = vsel %vm196, %v239, %v243
      %v246 = vshrl.u32 %v149, 16
      %v248 = vrot.slane %v246, 4
      %v249 = vshll.u32 %v149, 16
      %v251 = vrot.slane %v249, 5
      %v252 = vor.u32 %v248, %v251
      %v253 = vrot.slane %v252, 4
      %v255 = vshll.u32 %v150, 16
      %v257 = vrot.slane %v255, 5
      %v258 = vsel %vm196, %v253, %v257
      %v259 = vshrl.u32 %v150, 16
      %v261 = vrot.slane %v259, 4
      %v262 = vor.u32 %v261, %v257
      %v263 = vrot.slane %v262, 4
      %v265 = vshll.u32 %v180, 16
      %v267 = vrot.slane %v265, 5
      %v268 = vsel %vm196, %v263, %v267
      %v270 = vshrl.u32 %v151, 16
      %v272 = vrot.slane %v270, 4
      %v273 = vshll.u32 %v151, 16
      %v275 = vrot.slane %v273, 5
      %v276 = vor.u32 %v272, %v275
      %v277 = vrot.slane %v276, 4
      %v279 = vshll.u32 %v152, 16
      %v281 = vrot.slane %v279, 5
      %v282 = vsel %vm196, %v277, %v281
      %v283 = vshrl.u32 %v152, 16
      %v285 = vrot.slane %v283, 4
      %v286 = vor.u32 %v285, %v281
      %v287 = vrot.slane %v286, 4
      %v289 = vshll.u32 %v181, 16
      %v291 = vrot.slane %v289, 5
      %v292 = vsel %vm196, %v287, %v291
      %v294 = vshrl.u32 %v153, 16
      %v296 = vrot.slane %v294, 4
      %v297 = vshll.u32 %v153, 16
      %v299 = vrot.slane %v297, 5
      %v300 = vor.u32 %v296, %v299
      %v301 = vrot.slane %v300, 4
      %v303 = vshll.u32 %v154, 16
      %v305 = vrot.slane %v303, 5
      %v306 = vsel %vm196, %v301, %v305
      %v307 = vshrl.u32 %v154, 16
      %v309 = vrot.slane %v307, 4
      %v310 = vor.u32 %v309, %v305
      %v311 = vrot.slane %v310, 4
      %v313 = vshll.u32 %v182, 16
      %v315 = vrot.slane %v313, 5
      %v316 = vsel %vm196, %v311, %v315
      %v318 = vshrl.u32 %v155, 16
      %v320 = vrot.slane %v318, 4
      %v321 = vshll.u32 %v155, 16
      %v323 = vrot.slane %v321, 5
      %v324 = vor.u32 %v320, %v323
      %v325 = vrot.slane %v324, 4
      %v327 = vshll.u32 %v156, 16
      %v329 = vrot.slane %v327, 5
      %v330 = vsel %vm196, %v325, %v329
      %v331 = vshrl.u32 %v156, 16
      %v333 = vrot.slane %v331, 4
      %v334 = vor.u32 %v333, %v329
      %v335 = vrot.slane %v334, 4
      %v337 = vshll.u32 %v183, 16
      %v339 = vrot.slane %v337, 5
      %v340 = vsel %vm196, %v335, %v339
      %v342 = vshrl.u32 %v157, 16
      %v344 = vrot.slane %v342, 4
      %v345 = vshll.u32 %v157, 16
      %v347 = vrot.slane %v345, 5
      %v348 = vor.u32 %v344, %v347
      %v349 = vrot.slane %v348, 4
      %v351 = vshll.u32 %v158, 16
      %v353 = vrot.slane %v351, 5
      %v354 = vsel %vm196, %v349, %v353
      %v355 = vshrl.u32 %v158, 16
      %v357 = vrot.slane %v355, 4
      %v358 = vor.u32 %v357, %v353
      %v359 = vrot.slane %v358, 4
      %v361 = vshll.u32 %v184, 16
      %v363 = vrot.slane %v361, 5
      %v364 = vsel %vm196, %v359, %v363
      %v366 = vshrl.u32 %v159, 16
      %v368 = vrot.slane %v366, 4
      %v369 = vshll.u32 %v159, 16
      %v371 = vrot.slane %v369, 5
      %v372 = vor.u32 %v368, %v371
      %v373 = vrot.slane %v372, 4
      %v375 = vshll.u32 %v160, 16
      %v377 = vrot.slane %v375, 5
      %v378 = vsel %vm196, %v373, %v377
      %v379 = vshrl.u32 %v160, 16
      %v381 = vrot.slane %v379, 4
      %v382 = vor.u32 %v381, %v377
      %v383 = vrot.slane %v382, 4
      %v385 = vshll.u32 %v185, 16
      %v387 = vrot.slane %v385, 5
      %v388 = vsel %vm196, %v383, %v387
      %v390 = vshrl.u32 %v161, 16
      %v392 = vrot.slane %v390, 4
      %v393 = vshll.u32 %v161, 16
      %v395 = vrot.slane %v393, 5
      %v396 = vor.u32 %v392, %v395
      %v397 = vrot.slane %v396, 4
      %v399 = vshll.u32 %v162, 16
      %v401 = vrot.slane %v399, 5
      %v402 = vsel %vm196, %v397, %v401
      %v403 = vshrl.u32 %v162, 16
      %v405 = vrot.slane %v403, 4
      %v406 = vor.u32 %v405, %v401
      %v407 = vrot.slane %v406, 4
      %v409 = vshll.u32 %v186, 16
      %v411 = vrot.slane %v409, 5
      %v412 = vsel %vm196, %v407, %v411
      %v414 = vshrl.u32 %v163, 16
      %v416 = vrot.slane %v414, 4
      %v417 = vshll.u32 %v163, 16
      %v419 = vrot.slane %v417, 5
      %v420 = vor.u32 %v416, %v419
      %v421 = vrot.slane %v420, 4
      %v423 = vshll.u32 %v164, 16
      %v425 = vrot.slane %v423, 5
      %v426 = vsel %vm196, %v421, %v425
      %v427 = vshrl.u32 %v164, 16
      %v429 = vrot.slane %v427, 4
      %v430 = vor.u32 %v429, %v425
      %v431 = vrot.slane %v430, 4
      %v433 = vshll.u32 %v187, 16
      %v435 = vrot.slane %v433, 5
      %v436 = vsel %vm196, %v431, %v435
      %v438 = vshrl.u32 %v165, 16
      %v440 = vrot.slane %v438, 4
      %v441 = vshll.u32 %v165, 16
      %v443 = vrot.slane %v441, 5
      %v444 = vor.u32 %v440, %v443
      %v445 = vrot.slane %v444, 4
      %v447 = vshll.u32 %v166, 16
      %v449 = vrot.slane %v447, 5
      %v450 = vsel %vm196, %v445, %v449
      %v451 = vshrl.u32 %v166, 16
      %v453 = vrot.slane %v451, 4
      %v454 = vor.u32 %v453, %v449
      %v455 = vrot.slane %v454, 4
      %v457 = vshll.u32 %v188, 16
      %v459 = vrot.slane %v457, 5
      %v460 = vsel %vm196, %v455, %v459
      %v462 = vshrl.u32 %v167, 16
      %v464 = vrot.slane %v462, 4
      %v465 = vshll.u32 %v167, 16
      %v467 = vrot.slane %v465, 5
      %v468 = vor.u32 %v464, %v467
      %v469 = vrot.slane %v468, 4
      %v471 = vshll.u32 %v168, 16
      %v473 = vrot.slane %v471, 5
      %v474 = vsel %vm196, %v469, %v473
      %v475 = vshrl.u32 %v168, 16
      %v477 = vrot.slane %v475, 4
      %v478 = vor.u32 %v477, %v473
      %v479 = vrot.slane %v478, 4
      %v481 = vshll.u32 %v189, 16
      %v483 = vrot.slane %v481, 5
      %v484 = vsel %vm196, %v479, %v483
      %v486 = vshrl.u32 %v169, 16
      %v488 = vrot.slane %v486, 4
      %v489 = vshll.u32 %v169, 16
      %v491 = vrot.slane %v489, 5
      %v492 = vor.u32 %v488, %v491
      %v493 = vrot.slane %v492, 4
      %v495 = vshll.u32 %v170, 16
      %v497 = vrot.slane %v495, 5
      %v498 = vsel %vm196, %v493, %v497
      %v499 = vshrl.u32 %v170, 16
      %v501 = vrot.slane %v499, 4
      %v502 = vor.u32 %v501, %v497
      %v503 = vrot.slane %v502, 4
      %v505 = vshll.u32 %v190, 16
      %v507 = vrot.slane %v505, 5
      %v508 = vsel %vm196, %v503, %v507
      %v510 = vshrl.u32 %v171, 16
      %v512 = vrot.slane %v510, 4
      %v513 = vshll.u32 %v171, 16
      %v515 = vrot.slane %v513, 5
      %v516 = vor.u32 %v512, %v515
      %v517 = vrot.slane %v516, 4
      %v519 = vshll.u32 %v172, 16
      %v521 = vrot.slane %v519, 5
      %v522 = vsel %vm196, %v517, %v521
      %v523 = vshrl.u32 %v172, 16
      %v525 = vrot.slane %v523, 4
      %v526 = vor.u32 %v525, %v521
      %v527 = vrot.slane %v526, 4
      %v529 = vshll.u32 %v191, 16
      %v531 = vrot.slane %v529, 5
      %v532 = vsel %vm196, %v527, %v531
      %v534 = vshrl.u32 %v173, 16
      %v536 = vrot.slane %v534, 4
      %v537 = vshll.u32 %v173, 16
      %v539 = vrot.slane %v537, 5
      %v540 = vor.u32 %v536, %v539
      %v541 = vrot.slane %v540, 4
      %v543 = vshll.u32 %v174, 16
      %v545 = vrot.slane %v543, 5
      %v546 = vsel %vm196, %v541, %v545
      %v547 = vshrl.u32 %v174, 16
      %v549 = vrot.slane %v547, 4
      %v550 = vor.u32 %v549, %v545
      %v551 = vrot.slane %v550, 4
      %v553 = vshll.u32 %v192, 16
      %v555 = vrot.slane %v553, 5
      %v556 = vsel %vm196, %v551, %v555
      %v558 = vshrl.u32 %v175, 16
      %v560 = vrot.slane %v558, 4
      %v561 = vshll.u32 %v175, 16
      %v563 = vrot.slane %v561, 5
      %v564 = vor.u32 %v560, %v563
      %v565 = vrot.slane %v564, 4
      %v567 = vshll.u32 %v176, 16
      %v569 = vrot.slane %v567, 5
      %v570 = vsel %vm196, %v565, %v569
      %v571 = vshrl.u32 %v176, 16
      %v573 = vrot.slane %v571, 4
      %v574 = vor.u32 %v573, %v569
      %v575 = vrot.slane %v574, 4
      %v577 = vshll.u32 %v193, 16
      %v579 = vrot.slane %v577, 5
      %v580 = vsel %vm196, %v575, %v579
      %s581 = scalar_lea.vmem %s1, 2
      %v582 = vld [vmem:[%s581] sm:$0x3]
      %v583 = vunpack.c.l.b16 %v210
      %v584 = vunpack.c.l.b16 %v220
      %v585 = vunpack.c.l.b16 %v234
      %v586 = vunpack.c.l.b16 %v244
      %v587 = vunpack.c.l.b16 %v258
      %v588 = vunpack.c.l.b16 %v268
      %v589 = vunpack.c.l.b16 %v282
      %v590 = vunpack.c.l.b16 %v292
      %v591 = vunpack.c.l.b16 %v306
      %v592 = vunpack.c.l.b16 %v316
      %v593 = vunpack.c.l.b16 %v330
      %v594 = vunpack.c.l.b16 %v340
      %v595 = vunpack.c.l.b16 %v354
      %v596 = vunpack.c.l.b16 %v364
      %v597 = vunpack.c.l.b16 %v378
      %v598 = vunpack.c.l.b16 %v388
      %v599 = vunpack.c.l.b16 %v402
      %v600 = vunpack.c.l.b16 %v412
      %v601 = vunpack.c.l.b16 %v426
      %v602 = vunpack.c.l.b16 %v436
      %v603 = vunpack.c.l.b16 %v450
      %v604 = vunpack.c.l.b16 %v460
      %v605 = vunpack.c.l.b16 %v474
      %v606 = vunpack.c.l.b16 %v484
      %v607 = vunpack.c.l.b16 %v498
      %v608 = vunpack.c.l.b16 %v508
      %v609 = vunpack.c.l.b16 %v522
      %v610 = vunpack.c.l.b16 %v532
      %v611 = vunpack.c.l.b16 %v546
      %v612 = vunpack.c.l.b16 %v556
      %v613 = vunpack.c.l.b16 %v570
      %v614 = vunpack.c.l.b16 %v580
      %v615 = vpack.c.b16 %v584, %v583
      %v616 = vpack.c.b16 %v586, %v585
      %v617 = vpack.c.b16 %v588, %v587
      %v618 = vpack.c.b16 %v590, %v589
      %v619 = vpack.c.b16 %v592, %v591
      %v620 = vpack.c.b16 %v594, %v593
      %v621 = vpack.c.b16 %v596, %v595
      %v622 = vpack.c.b16 %v598, %v597
      %v623 = vpack.c.b16 %v600, %v599
      %v624 = vpack.c.b16 %v602, %v601
      %v625 = vpack.c.b16 %v604, %v603
      %v626 = vpack.c.b16 %v606, %v605
      %v627 = vpack.c.b16 %v608, %v607
      %v628 = vpack.c.b16 %v610, %v609
      %v629 = vpack.c.b16 %v612, %v611
      %v630 = vpack.c.b16 %v614, %v613
      %vm631 = vcmask 31744
      %v633 = vsel %vm631, %v615, 0
      %v636 = vsel %vm631, %v616, 0
      %v639 = vsel %vm631, %v617, 0
      %v642 = vsel %vm631, %v618, 0
      %v645 = vsel %vm631, %v619, 0
      %v648 = vsel %vm631, %v620, 0
      %v651 = vsel %vm631, %v621, 0
      %v654 = vsel %vm631, %v622, 0
      %v657 = vsel %vm631, %v623, 0
      %v660 = vsel %vm631, %v624, 0
      %v663 = vsel %vm631, %v625, 0
      %v666 = vsel %vm631, %v626, 0
      %v669 = vsel %vm631, %v627, 0
      %v672 = vsel %vm631, %v628, 0
      %v675 = vsel %vm631, %v629, 0
      %v678 = vsel %vm631, %v630, 0
      %vm680 = vcmask 1041408
      %v682 = vsel %vm680, %v582, 0
      %684 = vmatpush.bf16.msra.mxu0 0
      %685 = vmatpush.bf16.msra.mxu0 0
      %686 = vmatpush.bf16.msra.mxu0 0
      %687 = vmatpush.bf16.msra.mxu0 0
      %688 = vmatpush.bf16.msra.mxu0 0
      %689 = vmatpush.bf16.msra.mxu0 0
      %690 = vmatpush.bf16.msra.mxu0 0
      %691 = vmatpush.bf16.msra.mxu0 %v682
      %692 = vmatmul.bf16.gmra.mxu0 %v633
      %v693 = vpop.f32.mrf.mxu0
      %v694 = vadd.f32 0.0, %v693
      %v695 = vpop.f32.mrf.mxu0
      %v696 = vadd.f32 0.0, %v695
      %697 = vmatmul.bf16.gmra.mxu0 %v636
      %v698 = vpop.f32.mrf.mxu0
      %v699 = vadd.f32 0.0, %v698
      %v700 = vpop.f32.mrf.mxu0
      %v701 = vadd.f32 0.0, %v700
      %702 = vmatmul.bf16.gmra.mxu0 %v639
      %v703 = vpop.f32.mrf.mxu0
      %v704 = vadd.f32 0.0, %v703
      %v705 = vpop.f32.mrf.mxu0
      %v706 = vadd.f32 0.0, %v705
      %707 = vmatmul.bf16.gmra.mxu0 %v642
      %v708 = vpop.f32.mrf.mxu0
      %v709 = vadd.f32 0.0, %v708
      %v710 = vpop.f32.mrf.mxu0
      %v711 = vadd.f32 0.0, %v710
      %712 = vmatmul.bf16.gmra.mxu0 %v645
      %v713 = vpop.f32.mrf.mxu0
      %v714 = vadd.f32 0.0, %v713
      %v715 = vpop.f32.mrf.mxu0
      %v716 = vadd.f32 0.0, %v715
      %717 = vmatmul.bf16.gmra.mxu0 %v648
      %v718 = vpop.f32.mrf.mxu0
      %v719 = vadd.f32 0.0, %v718
      %v720 = vpop.f32.mrf.mxu0
      %v721 = vadd.f32 0.0, %v720
      %722 = vmatmul.bf16.gmra.mxu0 %v651
      %v723 = vpop.f32.mrf.mxu0
      %v724 = vadd.f32 0.0, %v723
      %v725 = vpop.f32.mrf.mxu0
      %v726 = vadd.f32 0.0, %v725
      %727 = vmatmul.bf16.gmra.mxu0 %v654
      %v728 = vpop.f32.mrf.mxu0
      %v729 = vadd.f32 0.0, %v728
      %v730 = vpop.f32.mrf.mxu0
      %v731 = vadd.f32 0.0, %v730
      %732 = vmatmul.bf16.gmra.mxu0 %v657
      %v733 = vpop.f32.mrf.mxu0
      %v734 = vadd.f32 0.0, %v733
      %v735 = vpop.f32.mrf.mxu0
      %v736 = vadd.f32 0.0, %v735
      %737 = vmatmul.bf16.gmra.mxu0 %v660
      %v738 = vpop.f32.mrf.mxu0
      %v739 = vadd.f32 0.0, %v738
      %v740 = vpop.f32.mrf.mxu0
      %v741 = vadd.f32 0.0, %v740
      %742 = vmatmul.bf16.gmra.mxu0 %v663
      %v743 = vpop.f32.mrf.mxu0
      %v744 = vadd.f32 0.0, %v743
      %v745 = vpop.f32.mrf.mxu0
      %v746 = vadd.f32 0.0, %v745
      %747 = vmatmul.bf16.gmra.mxu0 %v666
      %v748 = vpop.f32.mrf.mxu0
      %v749 = vadd.f32 0.0, %v748
      %v750 = vpop.f32.mrf.mxu0
      %v751 = vadd.f32 0.0, %v750
      %752 = vmatmul.bf16.gmra.mxu0 %v669
      %v753 = vpop.f32.mrf.mxu0
      %v754 = vadd.f32 0.0, %v753
      %v755 = vpop.f32.mrf.mxu0
      %v756 = vadd.f32 0.0, %v755
      %757 = vmatmul.bf16.gmra.mxu0 %v672
      %v758 = vpop.f32.mrf.mxu0
      %v759 = vadd.f32 0.0, %v758
      %v760 = vpop.f32.mrf.mxu0
      %v761 = vadd.f32 0.0, %v760
      %762 = vmatmul.bf16.gmra.mxu0 %v675
      %v763 = vpop.f32.mrf.mxu0
      %v764 = vadd.f32 0.0, %v763
      %v765 = vpop.f32.mrf.mxu0
      %v766 = vadd.f32 0.0, %v765
      %767 = vmatmul.bf16.gmra.mxu0 %v678
      %v768 = vpop.f32.mrf.mxu0
      %v769 = vadd.f32 0.0, %v768
      %v770 = vpop.f32.mrf.mxu0
      %v771 = vadd.f32 0.0, %v770
      %772 = vdwg.mxu0
      %v805 = vunpack.c.l.b16 %v145
      %v806 = vunpack.c.l.b16 %v146
      %v807 = vunpack.c.l.b16 %v147
      %v808 = vunpack.c.l.b16 %v148
      %v809 = vunpack.c.l.b16 %v149
      %v810 = vunpack.c.l.b16 %v150
      %v811 = vunpack.c.l.b16 %v151
      %v812 = vunpack.c.l.b16 %v152
      %v813 = vunpack.c.l.b16 %v153
      %v814 = vunpack.c.l.b16 %v154
      %v815 = vunpack.c.l.b16 %v155
      %v816 = vunpack.c.l.b16 %v156
      %v817 = vunpack.c.l.b16 %v157
      %v818 = vunpack.c.l.b16 %v158
      %v819 = vunpack.c.l.b16 %v159
      %v820 = vunpack.c.l.b16 %v160
      %v821 = vunpack.c.l.b16 %v161
      %v822 = vunpack.c.l.b16 %v162
      %v823 = vunpack.c.l.b16 %v163
      %v824 = vunpack.c.l.b16 %v164
      %v825 = vunpack.c.l.b16 %v165
      %v826 = vunpack.c.l.b16 %v166
      %v827 = vunpack.c.l.b16 %v167
      %v828 = vunpack.c.l.b16 %v168
      %v829 = vunpack.c.l.b16 %v169
      %v830 = vunpack.c.l.b16 %v170
      %v831 = vunpack.c.l.b16 %v171
      %v832 = vunpack.c.l.b16 %v172
      %v833 = vunpack.c.l.b16 %v173
      %v834 = vunpack.c.l.b16 %v174
      %v835 = vunpack.c.l.b16 %v175
      %v836 = vunpack.c.l.b16 %v176
      %v837 = vpack.c.b16 %v806, %v805
      %v838 = vpack.c.b16 %v808, %v807
      %v839 = vpack.c.b16 %v810, %v809
      %v840 = vpack.c.b16 %v812, %v811
      %v841 = vpack.c.b16 %v814, %v813
      %v842 = vpack.c.b16 %v816, %v815
      %v843 = vpack.c.b16 %v818, %v817
      %v844 = vpack.c.b16 %v820, %v819
      %v845 = vpack.c.b16 %v822, %v821
      %v846 = vpack.c.b16 %v824, %v823
      %v847 = vpack.c.b16 %v826, %v825
      %v848 = vpack.c.b16 %v828, %v827
      %v849 = vpack.c.b16 %v830, %v829
      %v850 = vpack.c.b16 %v832, %v831
      %v851 = vpack.c.b16 %v834, %v833
      %v852 = vpack.c.b16 %v836, %v835
      %v854 = vsel %vm631, %v837, 0
      %v857 = vsel %vm631, %v838, 0
      %v860 = vsel %vm631, %v839, 0
      %v863 = vsel %vm631, %v840, 0
      %v866 = vsel %vm631, %v841, 0
      %v869 = vsel %vm631, %v842, 0
      %v872 = vsel %vm631, %v843, 0
      %v875 = vsel %vm631, %v844, 0
      %v878 = vsel %vm631, %v845, 0
      %v881 = vsel %vm631, %v846, 0
      %v884 = vsel %vm631, %v847, 0
      %v887 = vsel %vm631, %v848, 0
      %v890 = vsel %vm631, %v849, 0
      %v893 = vsel %vm631, %v850, 0
      %v896 = vsel %vm631, %v851, 0
      %v899 = vsel %vm631, %v852, 0
      %v902 = vsel %vm680, %v177, 0
      %904 = vmatpush.bf16.msra.mxu0 0
      %905 = vmatpush.bf16.msra.mxu0 0
      %906 = vmatpush.bf16.msra.mxu0 0
      %907 = vmatpush.bf16.msra.mxu0 0
      %908 = vmatpush.bf16.msra.mxu0 0
      %909 = vmatpush.bf16.msra.mxu0 0
      %910 = vmatpush.bf16.msra.mxu0 0
      %911 = vmatpush.bf16.msra.mxu0 %v902
      %912 = vmatmul.bf16.gmra.mxu0 %v854
      %v913 = vpop.f32.mrf.mxu0
      %v914 = vadd.f32 %v694, %v913
      %v915 = vpop.f32.mrf.mxu0
      %v916 = vadd.f32 %v696, %v915
      %917 = vmatmul.bf16.gmra.mxu0 %v857
      %v918 = vpop.f32.mrf.mxu0
      %v919 = vadd.f32 %v699, %v918
      %v920 = vpop.f32.mrf.mxu0
      %v921 = vadd.f32 %v701, %v920
      %922 = vmatmul.bf16.gmra.mxu0 %v860
      %v923 = vpop.f32.mrf.mxu0
      %v924 = vadd.f32 %v704, %v923
      %v925 = vpop.f32.mrf.mxu0
      %v926 = vadd.f32 %v706, %v925
      %927 = vmatmul.bf16.gmra.mxu0 %v863
      %v928 = vpop.f32.mrf.mxu0
      %v929 = vadd.f32 %v709, %v928
      %v930 = vpop.f32.mrf.mxu0
      %v931 = vadd.f32 %v711, %v930
      %932 = vmatmul.bf16.gmra.mxu0 %v866
      %v933 = vpop.f32.mrf.mxu0
      %v934 = vadd.f32 %v714, %v933
      %v935 = vpop.f32.mrf.mxu0
      %v936 = vadd.f32 %v716, %v935
      %937 = vmatmul.bf16.gmra.mxu0 %v869
      %v938 = vpop.f32.mrf.mxu0
      %v939 = vadd.f32 %v719, %v938
      %v940 = vpop.f32.mrf.mxu0
      %v941 = vadd.f32 %v721, %v940
      %942 = vmatmul.bf16.gmra.mxu0 %v872
      %v943 = vpop.f32.mrf.mxu0
      %v944 = vadd.f32 %v724, %v943
      %v945 = vpop.f32.mrf.mxu0
      %v946 = vadd.f32 %v726, %v945
      %947 = vmatmul.bf16.gmra.mxu0 %v875
      %v948 = vpop.f32.mrf.mxu0
      %v949 = vadd.f32 %v729, %v948
      %v950 = vpop.f32.mrf.mxu0
      %v951 = vadd.f32 %v731, %v950
      %952 = vmatmul.bf16.gmra.mxu0 %v878
      %v953 = vpop.f32.mrf.mxu0
      %v954 = vadd.f32 %v734, %v953
      %v955 = vpop.f32.mrf.mxu0
      %v956 = vadd.f32 %v736, %v955
      %957 = vmatmul.bf16.gmra.mxu0 %v881
      %v958 = vpop.f32.mrf.mxu0
      %v959 = vadd.f32 %v739, %v958
      %v960 = vpop.f32.mrf.mxu0
      %v961 = vadd.f32 %v741, %v960
      %962 = vmatmul.bf16.gmra.mxu0 %v884
      %v963 = vpop.f32.mrf.mxu0
      %v964 = vadd.f32 %v744, %v963
      %v965 = vpop.f32.mrf.mxu0
      %v966 = vadd.f32 %v746, %v965
      %967 = vmatmul.bf16.gmra.mxu0 %v887
      %v968 = vpop.f32.mrf.mxu0
      %v969 = vadd.f32 %v749, %v968
      %v970 = vpop.f32.mrf.mxu0
      %v971 = vadd.f32 %v751, %v970
      %972 = vmatmul.bf16.gmra.mxu0 %v890
      %v973 = vpop.f32.mrf.mxu0
      %v974 = vadd.f32 %v754, %v973
      %v975 = vpop.f32.mrf.mxu0
      %v976 = vadd.f32 %v756, %v975
      %977 = vmatmul.bf16.gmra.mxu0 %v893
      %v978 = vpop.f32.mrf.mxu0
      %v979 = vadd.f32 %v759, %v978
      %v980 = vpop.f32.mrf.mxu0
      %v981 = vadd.f32 %v761, %v980
      %982 = vmatmul.bf16.gmra.mxu0 %v896
      %v983 = vpop.f32.mrf.mxu0
      %v984 = vadd.f32 %v764, %v983
      %v985 = vpop.f32.mrf.mxu0
      %v986 = vadd.f32 %v766, %v985
      %987 = vmatmul.bf16.gmra.mxu0 %v899
      %v988 = vpop.f32.mrf.mxu0
      %v989 = vadd.f32 %v769, %v988
      %v990 = vpop.f32.mrf.mxu0
      %v991 = vadd.f32 %v771, %v990
      %992 = vdwg.mxu0
      %v993 = vld [vmem:[%s138] sm:$0xe]
      %v994 = vld [vmem:[%s138 + $0xc] sm:$0xe]
      %v995 = vld [vmem:[%s138 + $0x18] sm:$0xe]
      %v996 = vld [vmem:[%s138 + $0x24] sm:$0xe]
      %v997 = vld [vmem:[%s138 + $0x30] sm:$0xe]
      %v998 = vld [vmem:[%s138 + $0x3c] sm:$0xe]
      %v999 = vld [vmem:[%s138 + $0x48] sm:$0xe]
      %v1000 = vld [vmem:[%s138 + $0x54] sm:$0xe]
      %v1001 = vld [vmem:[%s138 + $0x60] sm:$0xe]
      %v1002 = vld [vmem:[%s138 + $0x6c] sm:$0xe]
      %v1003 = vld [vmem:[%s138 + $0x78] sm:$0xe]
      %v1004 = vld [vmem:[%s138 + $0x84] sm:$0xe]
      %v1005 = vld [vmem:[%s138 + $0x90] sm:$0xe]
      %v1006 = vld [vmem:[%s138 + $0x9c] sm:$0xe]
      %v1007 = vld [vmem:[%s138 + $0xa8] sm:$0xe]
      %v1008 = vld [vmem:[%s138 + $0xb4] sm:$0xe]
      %vm1041 = vcmask 1042432
      %vm1042 = vcmask 1046532
      %vm1043 = vmor %vm1041, %vm1042
      %v1044 = vrot.slane %v993, 5
      %v1045 = vrot.slane %v1044, 4
      %v1046 = vrot.slane %v146, 5
      %v1047 = vsel %vm1043, %v1045, %v1046
      %v1048 = vrot.slane %v1046, 4
      %v1049 = vrot.slane %v178, 5
      %v1050 = vsel %vm1043, %v1048, %v1049
      %v1051 = vrot.slane %v994, 5
      %v1052 = vrot.slane %v1051, 4
      %v1053 = vrot.slane %v148, 5
      %v1054 = vsel %vm1043, %v1052, %v1053
      %v1055 = vrot.slane %v1053, 4
      %v1056 = vrot.slane %v179, 5
      %v1057 = vsel %vm1043, %v1055, %v1056
      %v1058 = vrot.slane %v995, 5
      %v1059 = vrot.slane %v1058, 4
      %v1060 = vrot.slane %v150, 5
      %v1061 = vsel %vm1043, %v1059, %v1060
      %v1062 = vrot.slane %v1060, 4
      %v1063 = vrot.slane %v180, 5
      %v1064 = vsel %vm1043, %v1062, %v1063
      %v1065 = vrot.slane %v996, 5
      %v1066 = vrot.slane %v1065, 4
      %v1067 = vrot.slane %v152, 5
      %v1068 = vsel %vm1043, %v1066, %v1067
      %v1069 = vrot.slane %v1067, 4
      %v1070 = vrot.slane %v181, 5
      %v1071 = vsel %vm1043, %v1069, %v1070
      %v1072 = vrot.slane %v997, 5
      %v1073 = vrot.slane %v1072, 4
      %v1074 = vrot.slane %v154, 5
      %v1075 = vsel %vm1043, %v1073, %v1074
      %v1076 = vrot.slane %v1074, 4
      %v1077 = vrot.slane %v182, 5
      %v1078 = vsel %vm1043, %v1076, %v1077
      %v1079 = vrot.slane %v998, 5
      %v1080 = vrot.slane %v1079, 4
      %v1081 = vrot.slane %v156, 5
      %v1082 = vsel %vm1043, %v1080, %v1081
      %v1083 = vrot.slane %v1081, 4
      %v1084 = vrot.slane %v183, 5
      %v1085 = vsel %vm1043, %v1083, %v1084
      %v1086 = vrot.slane %v999, 5
      %v1087 = vrot.slane %v1086, 4
      %v1088 = vrot.slane %v158, 5
      %v1089 = vsel %vm1043, %v1087, %v1088
      %v1090 = vrot.slane %v1088, 4
      %v1091 = vrot.slane %v184, 5
      %v1092 = vsel %vm1043, %v1090, %v1091
      %v1093 = vrot.slane %v1000, 5
      %v1094 = vrot.slane %v1093, 4
      %v1095 = vrot.slane %v160, 5
      %v1096 = vsel %vm1043, %v1094, %v1095
      %v1097 = vrot.slane %v1095, 4
      %v1098 = vrot.slane %v185, 5
      %v1099 = vsel %vm1043, %v1097, %v1098
      %v1100 = vrot.slane %v1001, 5
      %v1101 = vrot.slane %v1100, 4
      %v1102 = vrot.slane %v162, 5
      %v1103 = vsel %vm1043, %v1101, %v1102
      %v1104 = vrot.slane %v1102, 4
      %v1105 = vrot.slane %v186, 5
      %v1106 = vsel %vm1043, %v1104, %v1105
      %v1107 = vrot.slane %v1002, 5
      %v1108 = vrot.slane %v1107, 4
      %v1109 = vrot.slane %v164, 5
      %v1110 = vsel %vm1043, %v1108, %v1109
      %v1111 = vrot.slane %v1109, 4
      %v1112 = vrot.slane %v187, 5
      %v1113 = vsel %vm1043, %v1111, %v1112
      %v1114 = vrot.slane %v1003, 5
      %v1115 = vrot.slane %v1114, 4
      %v1116 = vrot.slane %v166, 5
      %v1117 = vsel %vm1043, %v1115, %v1116
      %v1118 = vrot.slane %v1116, 4
      %v1119 = vrot.slane %v188, 5
      %v1120 = vsel %vm1043, %v1118, %v1119
      %v1121 = vrot.slane %v1004, 5
      %v1122 = vrot.slane %v1121, 4
      %v1123 = vrot.slane %v168, 5
      %v1124 = vsel %vm1043, %v1122, %v1123
      %v1125 = vrot.slane %v1123, 4
      %v1126 = vrot.slane %v189, 5
      %v1127 = vsel %vm1043, %v1125, %v1126
      %v1128 = vrot.slane %v1005, 5
      %v1129 = vrot.slane %v1128, 4
      %v1130 = vrot.slane %v170, 5
      %v1131 = vsel %vm1043, %v1129, %v1130
      %v1132 = vrot.slane %v1130, 4
      %v1133 = vrot.slane %v190, 5
      %v1134 = vsel %vm1043, %v1132, %v1133
      %v1135 = vrot.slane %v1006, 5
      %v1136 = vrot.slane %v1135, 4
      %v1137 = vrot.slane %v172, 5
      %v1138 = vsel %vm1043, %v1136, %v1137
      %v1139 = vrot.slane %v1137, 4
      %v1140 = vrot.slane %v191, 5
      %v1141 = vsel %vm1043, %v1139, %v1140
      %v1142 = vrot.slane %v1007, 5
      %v1143 = vrot.slane %v1142, 4
      %v1144 = vrot.slane %v174, 5
      %v1145 = vsel %vm1043, %v1143, %v1144
      %v1146 = vrot.slane %v1144, 4
      %v1147 = vrot.slane %v192, 5
      %v1148 = vsel %vm1043, %v1146, %v1147
      %v1149 = vrot.slane %v1008, 5
      %v1150 = vrot.slane %v1149, 4
      %v1151 = vrot.slane %v176, 5
      %v1152 = vsel %vm1043, %v1150, %v1151
      %v1153 = vrot.slane %v1151, 4
      %v1154 = vrot.slane %v193, 5
      %v1155 = vsel %vm1043, %v1153, %v1154
      %s1156 = scalar_lea.vmem %s1, 4
      %v1157 = vld [vmem:[%s1156] sm:$0x3]
      %v1158 = vunpack.c.l.b16 %v1047
      %v1159 = vunpack.c.l.b16 %v1050
      %v1160 = vunpack.c.l.b16 %v1054
      %v1161 = vunpack.c.l.b16 %v1057
      %v1162 = vunpack.c.l.b16 %v1061
      %v1163 = vunpack.c.l.b16 %v1064
      %v1164 = vunpack.c.l.b16 %v1068
      %v1165 = vunpack.c.l.b16 %v1071
      %v1166 = vunpack.c.l.b16 %v1075
      %v1167 = vunpack.c.l.b16 %v1078
      %v1168 = vunpack.c.l.b16 %v1082
      %v1169 = vunpack.c.l.b16 %v1085
      %v1170 = vunpack.c.l.b16 %v1089
      %v1171 = vunpack.c.l.b16 %v1092
      %v1172 = vunpack.c.l.b16 %v1096
      %v1173 = vunpack.c.l.b16 %v1099
      %v1174 = vunpack.c.l.b16 %v1103
      %v1175 = vunpack.c.l.b16 %v1106
      %v1176 = vunpack.c.l.b16 %v1110
      %v1177 = vunpack.c.l.b16 %v1113
      %v1178 = vunpack.c.l.b16 %v1117
      %v1179 = vunpack.c.l.b16 %v1120
      %v1180 = vunpack.c.l.b16 %v1124
      %v1181 = vunpack.c.l.b16 %v1127
      %v1182 = vunpack.c.l.b16 %v1131
      %v1183 = vunpack.c.l.b16 %v1134
      %v1184 = vunpack.c.l.b16 %v1138
      %v1185 = vunpack.c.l.b16 %v1141
      %v1186 = vunpack.c.l.b16 %v1145
      %v1187 = vunpack.c.l.b16 %v1148
      %v1188 = vunpack.c.l.b16 %v1152
      %v1189 = vunpack.c.l.b16 %v1155
      %v1190 = vpack.c.b16 %v1159, %v1158
      %v1191 = vpack.c.b16 %v1161, %v1160
      %v1192 = vpack.c.b16 %v1163, %v1162
      %v1193 = vpack.c.b16 %v1165, %v1164
      %v1194 = vpack.c.b16 %v1167, %v1166
      %v1195 = vpack.c.b16 %v1169, %v1168
      %v1196 = vpack.c.b16 %v1171, %v1170
      %v1197 = vpack.c.b16 %v1173, %v1172
      %v1198 = vpack.c.b16 %v1175, %v1174
      %v1199 = vpack.c.b16 %v1177, %v1176
      %v1200 = vpack.c.b16 %v1179, %v1178
      %v1201 = vpack.c.b16 %v1181, %v1180
      %v1202 = vpack.c.b16 %v1183, %v1182
      %v1203 = vpack.c.b16 %v1185, %v1184
      %v1204 = vpack.c.b16 %v1187, %v1186
      %v1205 = vpack.c.b16 %v1189, %v1188
      %v1207 = vsel %vm631, %v1190, 0
      %v1210 = vsel %vm631, %v1191, 0
      %v1213 = vsel %vm631, %v1192, 0
      %v1216 = vsel %vm631, %v1193, 0
      %v1219 = vsel %vm631, %v1194, 0
      %v1222 = vsel %vm631, %v1195, 0
      %v1225 = vsel %vm631, %v1196, 0
      %v1228 = vsel %vm631, %v1197, 0
      %v1231 = vsel %vm631, %v1198, 0
      %v1234 = vsel %vm631, %v1199, 0
      %v1237 = vsel %vm631, %v1200, 0
      %v1240 = vsel %vm631, %v1201, 0
      %v1243 = vsel %vm631, %v1202, 0
      %v1246 = vsel %vm631, %v1203, 0
      %v1249 = vsel %vm631, %v1204, 0
      %v1252 = vsel %vm631, %v1205, 0
      %v1255 = vsel %vm680, %v1157, 0
      %1257 = vmatpush.bf16.msra.mxu0 0
      %1258 = vmatpush.bf16.msra.mxu0 0
      %1259 = vmatpush.bf16.msra.mxu0 0
      %1260 = vmatpush.bf16.msra.mxu0 0
      %1261 = vmatpush.bf16.msra.mxu0 0
      %1262 = vmatpush.bf16.msra.mxu0 0
      %1263 = vmatpush.bf16.msra.mxu0 0
      %1264 = vmatpush.bf16.msra.mxu0 %v1255
      %1265 = vmatmul.bf16.gmra.mxu0 %v1207
      %v1266 = vpop.f32.mrf.mxu0
      %v1267 = vadd.f32 0.0, %v1266
      %v1268 = vpop.f32.mrf.mxu0
      %v1269 = vadd.f32 0.0, %v1268
      %1270 = vmatmul.bf16.gmra.mxu0 %v1210
      %v1271 = vpop.f32.mrf.mxu0
      %v1272 = vadd.f32 0.0, %v1271
      %v1273 = vpop.f32.mrf.mxu0
      %v1274 = vadd.f32 0.0, %v1273
      %1275 = vmatmul.bf16.gmra.mxu0 %v1213
      %v1276 = vpop.f32.mrf.mxu0
      %v1277 = vadd.f32 0.0, %v1276
      %v1278 = vpop.f32.mrf.mxu0
      %v1279 = vadd.f32 0.0, %v1278
      %1280 = vmatmul.bf16.gmra.mxu0 %v1216
      %v1281 = vpop.f32.mrf.mxu0
      %v1282 = vadd.f32 0.0, %v1281
      %v1283 = vpop.f32.mrf.mxu0
      %v1284 = vadd.f32 0.0, %v1283
      %1285 = vmatmul.bf16.gmra.mxu0 %v1219
      %v1286 = vpop.f32.mrf.mxu0
      %v1287 = vadd.f32 0.0, %v1286
      %v1288 = vpop.f32.mrf.mxu0
      %v1289 = vadd.f32 0.0, %v1288
      %1290 = vmatmul.bf16.gmra.mxu0 %v1222
      %v1291 = vpop.f32.mrf.mxu0
      %v1292 = vadd.f32 0.0, %v1291
      %v1293 = vpop.f32.mrf.mxu0
      %v1294 = vadd.f32 0.0, %v1293
      %1295 = vmatmul.bf16.gmra.mxu0 %v1225
      %v1296 = vpop.f32.mrf.mxu0
      %v1297 = vadd.f32 0.0, %v1296
      %v1298 = vpop.f32.mrf.mxu0
      %v1299 = vadd.f32 0.0, %v1298
      %1300 = vmatmul.bf16.gmra.mxu0 %v1228
      %v1301 = vpop.f32.mrf.mxu0
      %v1302 = vadd.f32 0.0, %v1301
      %v1303 = vpop.f32.mrf.mxu0
      %v1304 = vadd.f32 0.0, %v1303
      %1305 = vmatmul.bf16.gmra.mxu0 %v1231
      %v1306 = vpop.f32.mrf.mxu0
      %v1307 = vadd.f32 0.0, %v1306
      %v1308 = vpop.f32.mrf.mxu0
      %v1309 = vadd.f32 0.0, %v1308
      %1310 = vmatmul.bf16.gmra.mxu0 %v1234
      %v1311 = vpop.f32.mrf.mxu0
      %v1312 = vadd.f32 0.0, %v1311
      %v1313 = vpop.f32.mrf.mxu0
      %v1314 = vadd.f32 0.0, %v1313
      %1315 = vmatmul.bf16.gmra.mxu0 %v1237
      %v1316 = vpop.f32.mrf.mxu0
      %v1317 = vadd.f32 0.0, %v1316
      %v1318 = vpop.f32.mrf.mxu0
      %v1319 = vadd.f32 0.0, %v1318
      %1320 = vmatmul.bf16.gmra.mxu0 %v1240
      %v1321 = vpop.f32.mrf.mxu0
      %v1322 = vadd.f32 0.0, %v1321
      %v1323 = vpop.f32.mrf.mxu0
      %v1324 = vadd.f32 0.0, %v1323
      %1325 = vmatmul.bf16.gmra.mxu0 %v1243
      %v1326 = vpop.f32.mrf.mxu0
      %v1327 = vadd.f32 0.0, %v1326
      %v1328 = vpop.f32.mrf.mxu0
      %v1329 = vadd.f32 0.0, %v1328
      %1330 = vmatmul.bf16.gmra.mxu0 %v1246
      %v1331 = vpop.f32.mrf.mxu0
      %v1332 = vadd.f32 0.0, %v1331
      %v1333 = vpop.f32.mrf.mxu0
      %v1334 = vadd.f32 0.0, %v1333
      %1335 = vmatmul.bf16.gmra.mxu0 %v1249
      %v1336 = vpop.f32.mrf.mxu0
      %v1337 = vadd.f32 0.0, %v1336
      %v1338 = vpop.f32.mrf.mxu0
      %v1339 = vadd.f32 0.0, %v1338
      %1340 = vmatmul.bf16.gmra.mxu0 %v1252
      %v1341 = vpop.f32.mrf.mxu0
      %v1342 = vadd.f32 0.0, %v1341
      %v1343 = vpop.f32.mrf.mxu0
      %v1344 = vadd.f32 0.0, %v1343
      %1345 = vdwg.mxu0
      %v1346 = vadd.f32 %v914, %v1267
      %v1347 = vadd.f32 %v916, %v1269
      %v1348 = vadd.f32 %v919, %v1272
      %v1349 = vadd.f32 %v921, %v1274
      %v1350 = vadd.f32 %v924, %v1277
      %v1351 = vadd.f32 %v926, %v1279
      %v1352 = vadd.f32 %v929, %v1282
      %v1353 = vadd.f32 %v931, %v1284
      %v1354 = vadd.f32 %v934, %v1287
      %v1355 = vadd.f32 %v936, %v1289
      %v1356 = vadd.f32 %v939, %v1292
      %v1357 = vadd.f32 %v941, %v1294
      %v1358 = vadd.f32 %v944, %v1297
      %v1359 = vadd.f32 %v946, %v1299
      %v1360 = vadd.f32 %v949, %v1302
      %v1361 = vadd.f32 %v951, %v1304
      %v1362 = vadd.f32 %v954, %v1307
      %v1363 = vadd.f32 %v956, %v1309
      %v1364 = vadd.f32 %v959, %v1312
      %v1365 = vadd.f32 %v961, %v1314
      %v1366 = vadd.f32 %v964, %v1317
      %v1367 = vadd.f32 %v966, %v1319
      %v1368 = vadd.f32 %v969, %v1322
      %v1369 = vadd.f32 %v971, %v1324
      %v1370 = vadd.f32 %v974, %v1327
      %v1371 = vadd.f32 %v976, %v1329
      %v1372 = vadd.f32 %v979, %v1332
      %v1373 = vadd.f32 %v981, %v1334
      %v1374 = vadd.f32 %v984, %v1337
      %v1375 = vadd.f32 %v986, %v1339
      %v1376 = vadd.f32 %v989, %v1342
      %v1377 = vadd.f32 %v991, %v1344
      %s1378 = scalar_lea.vmem %s138, 12
      %v1379 = vld [vmem:[%s1378] sm:$0xf]
      %v1380 = vld [vmem:[%s1378 + $0x4] sm:$0xf]
      %v1381 = vld [vmem:[%s1378 + $0xc] sm:$0xf]
      %v1382 = vld [vmem:[%s1378 + $0x10] sm:$0xf]
      %v1383 = vld [vmem:[%s1378 + $0x18] sm:$0xf]
      %v1384 = vld [vmem:[%s1378 + $0x1c] sm:$0xf]
      %v1385 = vld [vmem:[%s1378 + $0x24] sm:$0xf]
      %v1386 = vld [vmem:[%s1378 + $0x28] sm:$0xf]
      %v1387 = vld [vmem:[%s1378 + $0x30] sm:$0xf]
      %v1388 = vld [vmem:[%s1378 + $0x34] sm:$0xf]
      %v1389 = vld [vmem:[%s1378 + $0x3c] sm:$0xf]
      %v1390 = vld [vmem:[%s1378 + $0x40] sm:$0xf]
      %v1391 = vld [vmem:[%s1378 + $0x48] sm:$0xf]
      %v1392 = vld [vmem:[%s1378 + $0x4c] sm:$0xf]
      %v1393 = vld [vmem:[%s1378 + $0x54] sm:$0xf]
      %v1394 = vld [vmem:[%s1378 + $0x58] sm:$0xf]
      %v1395 = vld [vmem:[%s1378 + $0x60] sm:$0xf]
      %v1396 = vld [vmem:[%s1378 + $0x64] sm:$0xf]
      %v1397 = vld [vmem:[%s1378 + $0x6c] sm:$0xf]
      %v1398 = vld [vmem:[%s1378 + $0x70] sm:$0xf]
      %v1399 = vld [vmem:[%s1378 + $0x78] sm:$0xf]
      %v1400 = vld [vmem:[%s1378 + $0x7c] sm:$0xf]
      %v1401 = vld [vmem:[%s1378 + $0x84] sm:$0xf]
      %v1402 = vld [vmem:[%s1378 + $0x88] sm:$0xf]
      %v1403 = vld [vmem:[%s1378 + $0x90] sm:$0xf]
      %v1404 = vld [vmem:[%s1378 + $0x94] sm:$0xf]
      %v1405 = vld [vmem:[%s1378 + $0x9c] sm:$0xf]
      %v1406 = vld [vmem:[%s1378 + $0xa0] sm:$0xf]
      %v1407 = vld [vmem:[%s1378 + $0xa8] sm:$0xf]
      %v1408 = vld [vmem:[%s1378 + $0xac] sm:$0xf]
      %v1409 = vld [vmem:[%s1378 + $0xb4] sm:$0xf]
      %v1410 = vld [vmem:[%s1378 + $0xb8] sm:$0xf]
      %s1411 = scalar_lea.vmem %s1, 6
      %v1412 = vld [vmem:[%s1411] sm:$0x3]
      %v1445 = vunpack.c.l.b16 %v1379
      %v1446 = vunpack.c.l.b16 %v1380
      %v1447 = vunpack.c.l.b16 %v1381
      %v1448 = vunpack.c.l.b16 %v1382
      %v1449 = vunpack.c.l.b16 %v1383
      %v1450 = vunpack.c.l.b16 %v1384
      %v1451 = vunpack.c.l.b16 %v1385
      %v1452 = vunpack.c.l.b16 %v1386
      %v1453 = vunpack.c.l.b16 %v1387
      %v1454 = vunpack.c.l.b16 %v1388
      %v1455 = vunpack.c.l.b16 %v1389
      %v1456 = vunpack.c.l.b16 %v1390
      %v1457 = vunpack.c.l.b16 %v1391
      %v1458 = vunpack.c.l.b16 %v1392
      %v1459 = vunpack.c.l.b16 %v1393
      %v1460 = vunpack.c.l.b16 %v1394
      %v1461 = vunpack.c.l.b16 %v1395
      %v1462 = vunpack.c.l.b16 %v1396
      %v1463 = vunpack.c.l.b16 %v1397
      %v1464 = vunpack.c.l.b16 %v1398
      %v1465 = vunpack.c.l.b16 %v1399
      %v1466 = vunpack.c.l.b16 %v1400
      %v1467 = vunpack.c.l.b16 %v1401
      %v1468 = vunpack.c.l.b16 %v1402
      %v1469 = vunpack.c.l.b16 %v1403
      %v1470 = vunpack.c.l.b16 %v1404
      %v1471 = vunpack.c.l.b16 %v1405
      %v1472 = vunpack.c.l.b16 %v1406
      %v1473 = vunpack.c.l.b16 %v1407
      %v1474 = vunpack.c.l.b16 %v1408
      %v1475 = vunpack.c.l.b16 %v1409
      %v1476 = vunpack.c.l.b16 %v1410
      %v1477 = vpack.c.b16 %v1446, %v1445
      %v1478 = vpack.c.b16 %v1448, %v1447
      %v1479 = vpack.c.b16 %v1450, %v1449
      %v1480 = vpack.c.b16 %v1452, %v1451
      %v1481 = vpack.c.b16 %v1454, %v1453
      %v1482 = vpack.c.b16 %v1456, %v1455
      %v1483 = vpack.c.b16 %v1458, %v1457
      %v1484 = vpack.c.b16 %v1460, %v1459
      %v1485 = vpack.c.b16 %v1462, %v1461
      %v1486 = vpack.c.b16 %v1464, %v1463
      %v1487 = vpack.c.b16 %v1466, %v1465
      %v1488 = vpack.c.b16 %v1468, %v1467
      %v1489 = vpack.c.b16 %v1470, %v1469
      %v1490 = vpack.c.b16 %v1472, %v1471
      %v1491 = vpack.c.b16 %v1474, %v1473
      %v1492 = vpack.c.b16 %v1476, %v1475
      %v1494 = vsel %vm631, %v1477, 0
      %v1497 = vsel %vm631, %v1478, 0
      %v1500 = vsel %vm631, %v1479, 0
      %v1503 = vsel %vm631, %v1480, 0
      %v1506 = vsel %vm631, %v1481, 0
      %v1509 = vsel %vm631, %v1482, 0
      %v1512 = vsel %vm631, %v1483, 0
      %v1515 = vsel %vm631, %v1484, 0
      %v1518 = vsel %vm631, %v1485, 0
      %v1521 = vsel %vm631, %v1486, 0
      %v1524 = vsel %vm631, %v1487, 0
      %v1527 = vsel %vm631, %v1488, 0
      %v1530 = vsel %vm631, %v1489, 0
      %v1533 = vsel %vm631, %v1490, 0
      %v1536 = vsel %vm631, %v1491, 0
      %v1539 = vsel %vm631, %v1492, 0
      %v1542 = vsel %vm680, %v1412, 0
      %1544 = vmatpush.bf16.msra.mxu0 0
      %1545 = vmatpush.bf16.msra.mxu0 0
      %1546 = vmatpush.bf16.msra.mxu0 0
      %1547 = vmatpush.bf16.msra.mxu0 0
      %1548 = vmatpush.bf16.msra.mxu0 0
      %1549 = vmatpush.bf16.msra.mxu0 0
      %1550 = vmatpush.bf16.msra.mxu0 0
      %1551 = vmatpush.bf16.msra.mxu0 %v1542
      %1552 = vmatmul.bf16.gmra.mxu0 %v1494
      %v1553 = vpop.f32.mrf.mxu0
      %v1554 = vadd.f32 0.0, %v1553
      %v1555 = vpop.f32.mrf.mxu0
      %v1556 = vadd.f32 0.0, %v1555
      %1557 = vmatmul.bf16.gmra.mxu0 %v1497
      %v1558 = vpop.f32.mrf.mxu0
      %v1559 = vadd.f32 0.0, %v1558
      %v1560 = vpop.f32.mrf.mxu0
      %v1561 = vadd.f32 0.0, %v1560
      %1562 = vmatmul.bf16.gmra.mxu0 %v1500
      %v1563 = vpop.f32.mrf.mxu0
      %v1564 = vadd.f32 0.0, %v1563
      %v1565 = vpop.f32.mrf.mxu0
      %v1566 = vadd.f32 0.0, %v1565
      %1567 = vmatmul.bf16.gmra.mxu0 %v1503
      %v1568 = vpop.f32.mrf.mxu0
      %v1569 = vadd.f32 0.0, %v1568
      %v1570 = vpop.f32.mrf.mxu0
      %v1571 = vadd.f32 0.0, %v1570
      %1572 = vmatmul.bf16.gmra.mxu0 %v1506
      %v1573 = vpop.f32.mrf.mxu0
      %v1574 = vadd.f32 0.0, %v1573
      %v1575 = vpop.f32.mrf.mxu0
      %v1576 = vadd.f32 0.0, %v1575
      %1577 = vmatmul.bf16.gmra.mxu0 %v1509
      %v1578 = vpop.f32.mrf.mxu0
      %v1579 = vadd.f32 0.0, %v1578
      %v1580 = vpop.f32.mrf.mxu0
      %v1581 = vadd.f32 0.0, %v1580
      %1582 = vmatmul.bf16.gmra.mxu0 %v1512
      %v1583 = vpop.f32.mrf.mxu0
      %v1584 = vadd.f32 0.0, %v1583
      %v1585 = vpop.f32.mrf.mxu0
      %v1586 = vadd.f32 0.0, %v1585
      %1587 = vmatmul.bf16.gmra.mxu0 %v1515
      %v1588 = vpop.f32.mrf.mxu0
      %v1589 = vadd.f32 0.0, %v1588
      %v1590 = vpop.f32.mrf.mxu0
      %v1591 = vadd.f32 0.0, %v1590
      %1592 = vmatmul.bf16.gmra.mxu0 %v1518
      %v1593 = vpop.f32.mrf.mxu0
      %v1594 = vadd.f32 0.0, %v1593
      %v1595 = vpop.f32.mrf.mxu0
      %v1596 = vadd.f32 0.0, %v1595
      %1597 = vmatmul.bf16.gmra.mxu0 %v1521
      %v1598 = vpop.f32.mrf.mxu0
      %v1599 = vadd.f32 0.0, %v1598
      %v1600 = vpop.f32.mrf.mxu0
      %v1601 = vadd.f32 0.0, %v1600
      %1602 = vmatmul.bf16.gmra.mxu0 %v1524
      %v1603 = vpop.f32.mrf.mxu0
      %v1604 = vadd.f32 0.0, %v1603
      %v1605 = vpop.f32.mrf.mxu0
      %v1606 = vadd.f32 0.0, %v1605
      %1607 = vmatmul.bf16.gmra.mxu0 %v1527
      %v1608 = vpop.f32.mrf.mxu0
      %v1609 = vadd.f32 0.0, %v1608
      %v1610 = vpop.f32.mrf.mxu0
      %v1611 = vadd.f32 0.0, %v1610
      %1612 = vmatmul.bf16.gmra.mxu0 %v1530
      %v1613 = vpop.f32.mrf.mxu0
      %v1614 = vadd.f32 0.0, %v1613
      %v1615 = vpop.f32.mrf.mxu0
      %v1616 = vadd.f32 0.0, %v1615
      %1617 = vmatmul.bf16.gmra.mxu0 %v1533
      %v1618 = vpop.f32.mrf.mxu0
      %v1619 = vadd.f32 0.0, %v1618
      %v1620 = vpop.f32.mrf.mxu0
      %v1621 = vadd.f32 0.0, %v1620
      %1622 = vmatmul.bf16.gmra.mxu0 %v1536
      %v1623 = vpop.f32.mrf.mxu0
      %v1624 = vadd.f32 0.0, %v1623
      %v1625 = vpop.f32.mrf.mxu0
      %v1626 = vadd.f32 0.0, %v1625
      %1627 = vmatmul.bf16.gmra.mxu0 %v1539
      %v1628 = vpop.f32.mrf.mxu0
      %v1629 = vadd.f32 0.0, %v1628
      %v1630 = vpop.f32.mrf.mxu0
      %v1631 = vadd.f32 0.0, %v1630
      %1632 = vdwg.mxu0
      %v1633 = vadd.f32 %v1346, %v1554
      %v1634 = vadd.f32 %v1347, %v1556
      %v1635 = vadd.f32 %v1348, %v1559
      %v1636 = vadd.f32 %v1349, %v1561
      %v1637 = vadd.f32 %v1350, %v1564
      %v1638 = vadd.f32 %v1351, %v1566
      %v1639 = vadd.f32 %v1352, %v1569
      %v1640 = vadd.f32 %v1353, %v1571
      %v1641 = vadd.f32 %v1354, %v1574
      %v1642 = vadd.f32 %v1355, %v1576
      %v1643 = vadd.f32 %v1356, %v1579
      %v1644 = vadd.f32 %v1357, %v1581
      %v1645 = vadd.f32 %v1358, %v1584
      %v1646 = vadd.f32 %v1359, %v1586
      %v1647 = vadd.f32 %v1360, %v1589
      %v1648 = vadd.f32 %v1361, %v1591
      %v1649 = vadd.f32 %v1362, %v1594
      %v1650 = vadd.f32 %v1363, %v1596
      %v1651 = vadd.f32 %v1364, %v1599
      %v1652 = vadd.f32 %v1365, %v1601
      %v1653 = vadd.f32 %v1366, %v1604
      %v1654 = vadd.f32 %v1367, %v1606
      %v1655 = vadd.f32 %v1368, %v1609
      %v1656 = vadd.f32 %v1369, %v1611
      %v1657 = vadd.f32 %v1370, %v1614
      %v1658 = vadd.f32 %v1371, %v1616
      %v1659 = vadd.f32 %v1372, %v1619
      %v1660 = vadd.f32 %v1373, %v1621
      %v1661 = vadd.f32 %v1374, %v1624
      %v1662 = vadd.f32 %v1375, %v1626
      %v1663 = vadd.f32 %v1376, %v1629
      %v1664 = vadd.f32 %v1377, %v1631
      %v1665 = vld [vmem:[%s1378] sm:$0xf]
      %v1666 = vld [vmem:[%s1378 + $0x4] sm:$0xf]
      %v1667 = vld [vmem:[%s1378 + $0x8] sm:$0x1]
      %v1668 = vld [vmem:[%s1378 + $0xc] sm:$0xf]
      %v1669 = vld [vmem:[%s1378 + $0x10] sm:$0xf]
      %v1670 = vld [vmem:[%s1378 + $0x14] sm:$0x1]
      %v1671 = vld [vmem:[%s1378 + $0x18] sm:$0xf]
      %v1672 = vld [vmem:[%s1378 + $0x1c] sm:$0xf]
      %v1673 = vld [vmem:[%s1378 + $0x20] sm:$0x1]
      %v1674 = vld [vmem:[%s1378 + $0x24] sm:$0xf]
      %v1675 = vld [vmem:[%s1378 + $0x28] sm:$0xf]
      %v1676 = vld [vmem:[%s1378 + $0x2c] sm:$0x1]
      %v1677 = vld [vmem:[%s1378 + $0x30] sm:$0xf]
      %v1678 = vld [vmem:[%s1378 + $0x34] sm:$0xf]
      %v1679 = vld [vmem:[%s1378 + $0x38] sm:$0x1]
      %v1680 = vld [vmem:[%s1378 + $0x3c] sm:$0xf]
      %v1681 = vld [vmem:[%s1378 + $0x40] sm:$0xf]
      %v1682 = vld [vmem:[%s1378 + $0x44] sm:$0x1]
      %v1683 = vld [vmem:[%s1378 + $0x48] sm:$0xf]
      %v1684 = vld [vmem:[%s1378 + $0x4c] sm:$0xf]
      %v1685 = vld [vmem:[%s1378 + $0x50] sm:$0x1]
      %v1686 = vld [vmem:[%s1378 + $0x54] sm:$0xf]
      %v1687 = vld [vmem:[%s1378 + $0x58] sm:$0xf]
      %v1688 = vld [vmem:[%s1378 + $0x5c] sm:$0x1]
      %v1689 = vld [vmem:[%s1378 + $0x60] sm:$0xf]
      %v1690 = vld [vmem:[%s1378 + $0x64] sm:$0xf]
      %v1691 = vld [vmem:[%s1378 + $0x68] sm:$0x1]
      %v1692 = vld [vmem:[%s1378 + $0x6c] sm:$0xf]
      %v1693 = vld [vmem:[%s1378 + $0x70] sm:$0xf]
      %v1694 = vld [vmem:[%s1378 + $0x74] sm:$0x1]
      %v1695 = vld [vmem:[%s1378 + $0x78] sm:$0xf]
      %v1696 = vld [vmem:[%s1378 + $0x7c] sm:$0xf]
      %v1697 = vld [vmem:[%s1378 + $0x80] sm:$0x1]
      %v1698 = vld [vmem:[%s1378 + $0x84] sm:$0xf]
      %v1699 = vld [vmem:[%s1378 + $0x88] sm:$0xf]
      %v1700 = vld [vmem:[%s1378 + $0x8c] sm:$0x1]
      %v1701 = vld [vmem:[%s1378 + $0x90] sm:$0xf]
      %v1702 = vld [vmem:[%s1378 + $0x94] sm:$0xf]
      %v1703 = vld [vmem:[%s1378 + $0x98] sm:$0x1]
      %v1704 = vld [vmem:[%s1378 + $0x9c] sm:$0xf]
      %v1705 = vld [vmem:[%s1378 + $0xa0] sm:$0xf]
      %v1706 = vld [vmem:[%s1378 + $0xa4] sm:$0x1]
      %v1707 = vld [vmem:[%s1378 + $0xa8] sm:$0xf]
      %v1708 = vld [vmem:[%s1378 + $0xac] sm:$0xf]
      %v1709 = vld [vmem:[%s1378 + $0xb0] sm:$0x1]
      %v1710 = vld [vmem:[%s1378 + $0xb4] sm:$0xf]
      %v1711 = vld [vmem:[%s1378 + $0xb8] sm:$0xf]
      %v1712 = vld [vmem:[%s1378 + $0xbc] sm:$0x1]
      %v1714 = vshrl.u32 %v1665, 16
      %v1716 = vrot.slane %v1714, 4
      %v1717 = vshll.u32 %v1665, 16
      %v1719 = vrot.slane %v1717, 5
      %v1720 = vor.u32 %v1716, %v1719
      %v1721 = vrot.slane %v1720, 4
      %v1723 = vshll.u32 %v1666, 16
      %v1725 = vrot.slane %v1723, 5
      %v1726 = vsel %vm196, %v1721, %v1725
      %v1727 = vshrl.u32 %v1666, 16
      %v1729 = vrot.slane %v1727, 4
      %v1730 = vor.u32 %v1729, %v1725
      %v1731 = vrot.slane %v1730, 4
      %v1733 = vshll.u32 %v1667, 16
      %v1735 = vrot.slane %v1733, 5
      %v1736 = vsel %vm196, %v1731, %v1735
      %v1738 = vshrl.u32 %v1668, 16
      %v1740 = vrot.slane %v1738, 4
      %v1741 = vshll.u32 %v1668, 16
      %v1743 = vrot.slane %v1741, 5
      %v1744 = vor.u32 %v1740, %v1743
      %v1745 = vrot.slane %v1744, 4
      %v1747 = vshll.u32 %v1669, 16
      %v1749 = vrot.slane %v1747, 5
      %v1750 = vsel %vm196, %v1745, %v1749
      %v1751 = vshrl.u32 %v1669, 16
      %v1753 = vrot.slane %v1751, 4
      %v1754 = vor.u32 %v1753, %v1749
      %v1755 = vrot.slane %v1754, 4
      %v1757 = vshll.u32 %v1670, 16
      %v1759 = vrot.slane %v1757, 5
      %v1760 = vsel %vm196, %v1755, %v1759
      %v1762 = vshrl.u32 %v1671, 16
      %v1764 = vrot.slane %v1762, 4
      %v1765 = vshll.u32 %v1671, 16
      %v1767 = vrot.slane %v1765, 5
      %v1768 = vor.u32 %v1764, %v1767
      %v1769 = vrot.slane %v1768, 4
      %v1771 = vshll.u32 %v1672, 16
      %v1773 = vrot.slane %v1771, 5
      %v1774 = vsel %vm196, %v1769, %v1773
      %v1775 = vshrl.u32 %v1672, 16
      %v1777 = vrot.slane %v1775, 4
      %v1778 = vor.u32 %v1777, %v1773
      %v1779 = vrot.slane %v1778, 4
      %v1781 = vshll.u32 %v1673, 16
      %v1783 = vrot.slane %v1781, 5
      %v1784 = vsel %vm196, %v1779, %v1783
      %v1786 = vshrl.u32 %v1674, 16
      %v1788 = vrot.slane %v1786, 4
      %v1789 = vshll.u32 %v1674, 16
      %v1791 = vrot.slane %v1789, 5
      %v1792 = vor.u32 %v1788, %v1791
      %v1793 = vrot.slane %v1792, 4
      %v1795 = vshll.u32 %v1675, 16
      %v1797 = vrot.slane %v1795, 5
      %v1798 = vsel %vm196, %v1793, %v1797
      %v1799 = vshrl.u32 %v1675, 16
      %v1801 = vrot.slane %v1799, 4
      %v1802 = vor.u32 %v1801, %v1797
      %v1803 = vrot.slane %v1802, 4
      %v1805 = vshll.u32 %v1676, 16
      %v1807 = vrot.slane %v1805, 5
      %v1808 = vsel %vm196, %v1803, %v1807
      %v1810 = vshrl.u32 %v1677, 16
      %v1812 = vrot.slane %v1810, 4
      %v1813 = vshll.u32 %v1677, 16
      %v1815 = vrot.slane %v1813, 5
      %v1816 = vor.u32 %v1812, %v1815
      %v1817 = vrot.slane %v1816, 4
      %v1819 = vshll.u32 %v1678, 16
      %v1821 = vrot.slane %v1819, 5
      %v1822 = vsel %vm196, %v1817, %v1821
      %v1823 = vshrl.u32 %v1678, 16
      %v1825 = vrot.slane %v1823, 4
      %v1826 = vor.u32 %v1825, %v1821
      %v1827 = vrot.slane %v1826, 4
      %v1829 = vshll.u32 %v1679, 16
      %v1831 = vrot.slane %v1829, 5
      %v1832 = vsel %vm196, %v1827, %v1831
      %v1834 = vshrl.u32 %v1680, 16
      %v1836 = vrot.slane %v1834, 4
      %v1837 = vshll.u32 %v1680, 16
      %v1839 = vrot.slane %v1837, 5
      %v1840 = vor.u32 %v1836, %v1839
      %v1841 = vrot.slane %v1840, 4
      %v1843 = vshll.u32 %v1681, 16
      %v1845 = vrot.slane %v1843, 5
      %v1846 = vsel %vm196, %v1841, %v1845
      %v1847 = vshrl.u32 %v1681, 16
      %v1849 = vrot.slane %v1847, 4
      %v1850 = vor.u32 %v1849, %v1845
      %v1851 = vrot.slane %v1850, 4
      %v1853 = vshll.u32 %v1682, 16
      %v1855 = vrot.slane %v1853, 5
      %v1856 = vsel %vm196, %v1851, %v1855
      %v1858 = vshrl.u32 %v1683, 16
      %v1860 = vrot.slane %v1858, 4
      %v1861 = vshll.u32 %v1683, 16
      %v1863 = vrot.slane %v1861, 5
      %v1864 = vor.u32 %v1860, %v1863
      %v1865 = vrot.slane %v1864, 4
      %v1867 = vshll.u32 %v1684, 16
      %v1869 = vrot.slane %v1867, 5
      %v1870 = vsel %vm196, %v1865, %v1869
      %v1871 = vshrl.u32 %v1684, 16
      %v1873 = vrot.slane %v1871, 4
      %v1874 = vor.u32 %v1873, %v1869
      %v1875 = vrot.slane %v1874, 4
      %v1877 = vshll.u32 %v1685, 16
      %v1879 = vrot.slane %v1877, 5
      %v1880 = vsel %vm196, %v1875, %v1879
      %v1882 = vshrl.u32 %v1686, 16
      %v1884 = vrot.slane %v1882, 4
      %v1885 = vshll.u32 %v1686, 16
      %v1887 = vrot.slane %v1885, 5
      %v1888 = vor.u32 %v1884, %v1887
      %v1889 = vrot.slane %v1888, 4
      %v1891 = vshll.u32 %v1687, 16
      %v1893 = vrot.slane %v1891, 5
      %v1894 = vsel %vm196, %v1889, %v1893
      %v1895 = vshrl.u32 %v1687, 16
      %v1897 = vrot.slane %v1895, 4
      %v1898 = vor.u32 %v1897, %v1893
      %v1899 = vrot.slane %v1898, 4
      %v1901 = vshll.u32 %v1688, 16
      %v1903 = vrot.slane %v1901, 5
      %v1904 = vsel %vm196, %v1899, %v1903
      %v1906 = vshrl.u32 %v1689, 16
      %v1908 = vrot.slane %v1906, 4
      %v1909 = vshll.u32 %v1689, 16
      %v1911 = vrot.slane %v1909, 5
      %v1912 = vor.u32 %v1908, %v1911
      %v1913 = vrot.slane %v1912, 4
      %v1915 = vshll.u32 %v1690, 16
      %v1917 = vrot.slane %v1915, 5
      %v1918 = vsel %vm196, %v1913, %v1917
      %v1919 = vshrl.u32 %v1690, 16
      %v1921 = vrot.slane %v1919, 4
      %v1922 = vor.u32 %v1921, %v1917
      %v1923 = vrot.slane %v1922, 4
      %v1925 = vshll.u32 %v1691, 16
      %v1927 = vrot.slane %v1925, 5
      %v1928 = vsel %vm196, %v1923, %v1927
      %v1930 = vshrl.u32 %v1692, 16
      %v1932 = vrot.slane %v1930, 4
      %v1933 = vshll.u32 %v1692, 16
      %v1935 = vrot.slane %v1933, 5
      %v1936 = vor.u32 %v1932, %v1935
      %v1937 = vrot.slane %v1936, 4
      %v1939 = vshll.u32 %v1693, 16
      %v1941 = vrot.slane %v1939, 5
      %v1942 = vsel %vm196, %v1937, %v1941
      %v1943 = vshrl.u32 %v1693, 16
      %v1945 = vrot.slane %v1943, 4
      %v1946 = vor.u32 %v1945, %v1941
      %v1947 = vrot.slane %v1946, 4
      %v1949 = vshll.u32 %v1694, 16
      %v1951 = vrot.slane %v1949, 5
      %v1952 = vsel %vm196, %v1947, %v1951
      %v1954 = vshrl.u32 %v1695, 16
      %v1956 = vrot.slane %v1954, 4
      %v1957 = vshll.u32 %v1695, 16
      %v1959 = vrot.slane %v1957, 5
      %v1960 = vor.u32 %v1956, %v1959
      %v1961 = vrot.slane %v1960, 4
      %v1963 = vshll.u32 %v1696, 16
      %v1965 = vrot.slane %v1963, 5
      %v1966 = vsel %vm196, %v1961, %v1965
      %v1967 = vshrl.u32 %v1696, 16
      %v1969 = vrot.slane %v1967, 4
      %v1970 = vor.u32 %v1969, %v1965
      %v1971 = vrot.slane %v1970, 4
      %v1973 = vshll.u32 %v1697, 16
      %v1975 = vrot.slane %v1973, 5
      %v1976 = vsel %vm196, %v1971, %v1975
      %v1978 = vshrl.u32 %v1698, 16
      %v1980 = vrot.slane %v1978, 4
      %v1981 = vshll.u32 %v1698, 16
      %v1983 = vrot.slane %v1981, 5
      %v1984 = vor.u32 %v1980, %v1983
      %v1985 = vrot.slane %v1984, 4
      %v1987 = vshll.u32 %v1699, 16
      %v1989 = vrot.slane %v1987, 5
      %v1990 = vsel %vm196, %v1985, %v1989
      %v1991 = vshrl.u32 %v1699, 16
      %v1993 = vrot.slane %v1991, 4
      %v1994 = vor.u32 %v1993, %v1989
      %v1995 = vrot.slane %v1994, 4
      %v1997 = vshll.u32 %v1700, 16
      %v1999 = vrot.slane %v1997, 5
      %v2000 = vsel %vm196, %v1995, %v1999
      %v2002 = vshrl.u32 %v1701, 16
      %v2004 = vrot.slane %v2002, 4
      %v2005 = vshll.u32 %v1701, 16
      %v2007 = vrot.slane %v2005, 5
      %v2008 = vor.u32 %v2004, %v2007
      %v2009 = vrot.slane %v2008, 4
      %v2011 = vshll.u32 %v1702, 16
      %v2013 = vrot.slane %v2011, 5
      %v2014 = vsel %vm196, %v2009, %v2013
      %v2015 = vshrl.u32 %v1702, 16
      %v2017 = vrot.slane %v2015, 4
      %v2018 = vor.u32 %v2017, %v2013
      %v2019 = vrot.slane %v2018, 4
      %v2021 = vshll.u32 %v1703, 16
      %v2023 = vrot.slane %v2021, 5
      %v2024 = vsel %vm196, %v2019, %v2023
      %v2026 = vshrl.u32 %v1704, 16
      %v2028 = vrot.slane %v2026, 4
      %v2029 = vshll.u32 %v1704, 16
      %v2031 = vrot.slane %v2029, 5
      %v2032 = vor.u32 %v2028, %v2031
      %v2033 = vrot.slane %v2032, 4
      %v2035 = vshll.u32 %v1705, 16
      %v2037 = vrot.slane %v2035, 5
      %v2038 = vsel %vm196, %v2033, %v2037
      %v2039 = vshrl.u32 %v1705, 16
      %v2041 = vrot.slane %v2039, 4
      %v2042 = vor.u32 %v2041, %v2037
      %v2043 = vrot.slane %v2042, 4
      %v2045 = vshll.u32 %v1706, 16
      %v2047 = vrot.slane %v2045, 5
      %v2048 = vsel %vm196, %v2043, %v2047
      %v2050 = vshrl.u32 %v1707, 16
      %v2052 = vrot.slane %v2050, 4
      %v2053 = vshll.u32 %v1707, 16
      %v2055 = vrot.slane %v2053, 5
      %v2056 = vor.u32 %v2052, %v2055
      %v2057 = vrot.slane %v2056, 4
      %v2059 = vshll.u32 %v1708, 16
      %v2061 = vrot.slane %v2059, 5
      %v2062 = vsel %vm196, %v2057, %v2061
      %v2063 = vshrl.u32 %v1708, 16
      %v2065 = vrot.slane %v2063, 4
      %v2066 = vor.u32 %v2065, %v2061
      %v2067 = vrot.slane %v2066, 4
      %v2069 = vshll.u32 %v1709, 16
      %v2071 = vrot.slane %v2069, 5
      %v2072 = vsel %vm196, %v2067, %v2071
      %v2074 = vshrl.u32 %v1710, 16
      %v2076 = vrot.slane %v2074, 4
      %v2077 = vshll.u32 %v1710, 16
      %v2079 = vrot.slane %v2077, 5
      %v2080 = vor.u32 %v2076, %v2079
      %v2081 = vrot.slane %v2080, 4
      %v2083 = vshll.u32 %v1711, 16
      %v2085 = vrot.slane %v2083, 5
      %v2086 = vsel %vm196, %v2081, %v2085
      %v2087 = vshrl.u32 %v1711, 16
      %v2089 = vrot.slane %v2087, 4
      %v2090 = vor.u32 %v2089, %v2085
      %v2091 = vrot.slane %v2090, 4
      %v2093 = vshll.u32 %v1712, 16
      %v2095 = vrot.slane %v2093, 5
      %v2096 = vsel %vm196, %v2091, %v2095
      %s2097 = scalar_lea.vmem %s1, 8
      %v2098 = vld [vmem:[%s2097] sm:$0x3]
      %v2099 = vunpack.c.l.b16 %v1726
      %v2100 = vunpack.c.l.b16 %v1736
      %v2101 = vunpack.c.l.b16 %v1750
      %v2102 = vunpack.c.l.b16 %v1760
      %v2103 = vunpack.c.l.b16 %v1774
      %v2104 = vunpack.c.l.b16 %v1784
      %v2105 = vunpack.c.l.b16 %v1798
      %v2106 = vunpack.c.l.b16 %v1808
      %v2107 = vunpack.c.l.b16 %v1822
      %v2108 = vunpack.c.l.b16 %v1832
      %v2109 = vunpack.c.l.b16 %v1846
      %v2110 = vunpack.c.l.b16 %v1856
      %v2111 = vunpack.c.l.b16 %v1870
      %v2112 = vunpack.c.l.b16 %v1880
      %v2113 = vunpack.c.l.b16 %v1894
      %v2114 = vunpack.c.l.b16 %v1904
      %v2115 = vunpack.c.l.b16 %v1918
      %v2116 = vunpack.c.l.b16 %v1928
      %v2117 = vunpack.c.l.b16 %v1942
      %v2118 = vunpack.c.l.b16 %v1952
      %v2119 = vunpack.c.l.b16 %v1966
      %v2120 = vunpack.c.l.b16 %v1976
      %v2121 = vunpack.c.l.b16 %v1990
      %v2122 = vunpack.c.l.b16 %v2000
      %v2123 = vunpack.c.l.b16 %v2014
      %v2124 = vunpack.c.l.b16 %v2024
      %v2125 = vunpack.c.l.b16 %v2038
      %v2126 = vunpack.c.l.b16 %v2048
      %v2127 = vunpack.c.l.b16 %v2062
      %v2128 = vunpack.c.l.b16 %v2072
      %v2129 = vunpack.c.l.b16 %v2086
      %v2130 = vunpack.c.l.b16 %v2096
      %v2131 = vpack.c.b16 %v2100, %v2099
      %v2132 = vpack.c.b16 %v2102, %v2101
      %v2133 = vpack.c.b16 %v2104, %v2103
      %v2134 = vpack.c.b16 %v2106, %v2105
      %v2135 = vpack.c.b16 %v2108, %v2107
      %v2136 = vpack.c.b16 %v2110, %v2109
      %v2137 = vpack.c.b16 %v2112, %v2111
      %v2138 = vpack.c.b16 %v2114, %v2113
      %v2139 = vpack.c.b16 %v2116, %v2115
      %v2140 = vpack.c.b16 %v2118, %v2117
      %v2141 = vpack.c.b16 %v2120, %v2119
      %v2142 = vpack.c.b16 %v2122, %v2121
      %v2143 = vpack.c.b16 %v2124, %v2123
      %v2144 = vpack.c.b16 %v2126, %v2125
      %v2145 = vpack.c.b16 %v2128, %v2127
      %v2146 = vpack.c.b16 %v2130, %v2129
      %v2148 = vsel %vm631, %v2131, 0
      %v2151 = vsel %vm631, %v2132, 0
      %v2154 = vsel %vm631, %v2133, 0
      %v2157 = vsel %vm631, %v2134, 0
      %v2160 = vsel %vm631, %v2135, 0
      %v2163 = vsel %vm631, %v2136, 0
      %v2166 = vsel %vm631, %v2137, 0
      %v2169 = vsel %vm631, %v2138, 0
      %v2172 = vsel %vm631, %v2139, 0
      %v2175 = vsel %vm631, %v2140, 0
      %v2178 = vsel %vm631, %v2141, 0
      %v2181 = vsel %vm631, %v2142, 0
      %v2184 = vsel %vm631, %v2143, 0
      %v2187 = vsel %vm631, %v2144, 0
      %v2190 = vsel %vm631, %v2145, 0
      %v2193 = vsel %vm631, %v2146, 0
      %v2196 = vsel %vm680, %v2098, 0
      %2198 = vmatpush.bf16.msra.mxu0 0
      %2199 = vmatpush.bf16.msra.mxu0 0
      %2200 = vmatpush.bf16.msra.mxu0 0
      %2201 = vmatpush.bf16.msra.mxu0 0
      %2202 = vmatpush.bf16.msra.mxu0 0
      %2203 = vmatpush.bf16.msra.mxu0 0
      %2204 = vmatpush.bf16.msra.mxu0 0
      %2205 = vmatpush.bf16.msra.mxu0 %v2196
      %2206 = vmatmul.bf16.gmra.mxu0 %v2148
      %v2207 = vpop.f32.mrf.mxu0
      %v2208 = vadd.f32 0.0, %v2207
      %v2209 = vpop.f32.mrf.mxu0
      %v2210 = vadd.f32 0.0, %v2209
      %2211 = vmatmul.bf16.gmra.mxu0 %v2151
      %v2212 = vpop.f32.mrf.mxu0
      %v2213 = vadd.f32 0.0, %v2212
      %v2214 = vpop.f32.mrf.mxu0
      %v2215 = vadd.f32 0.0, %v2214
      %2216 = vmatmul.bf16.gmra.mxu0 %v2154
      %v2217 = vpop.f32.mrf.mxu0
      %v2218 = vadd.f32 0.0, %v2217
      %v2219 = vpop.f32.mrf.mxu0
      %v2220 = vadd.f32 0.0, %v2219
      %2221 = vmatmul.bf16.gmra.mxu0 %v2157
      %v2222 = vpop.f32.mrf.mxu0
      %v2223 = vadd.f32 0.0, %v2222
      %v2224 = vpop.f32.mrf.mxu0
      %v2225 = vadd.f32 0.0, %v2224
      %2226 = vmatmul.bf16.gmra.mxu0 %v2160
      %v2227 = vpop.f32.mrf.mxu0
      %v2228 = vadd.f32 0.0, %v2227
      %v2229 = vpop.f32.mrf.mxu0
      %v2230 = vadd.f32 0.0, %v2229
      %2231 = vmatmul.bf16.gmra.mxu0 %v2163
      %v2232 = vpop.f32.mrf.mxu0
      %v2233 = vadd.f32 0.0, %v2232
      %v2234 = vpop.f32.mrf.mxu0
      %v2235 = vadd.f32 0.0, %v2234
      %2236 = vmatmul.bf16.gmra.mxu0 %v2166
      %v2237 = vpop.f32.mrf.mxu0
      %v2238 = vadd.f32 0.0, %v2237
      %v2239 = vpop.f32.mrf.mxu0
      %v2240 = vadd.f32 0.0, %v2239
      %2241 = vmatmul.bf16.gmra.mxu0 %v2169
      %v2242 = vpop.f32.mrf.mxu0
      %v2243 = vadd.f32 0.0, %v2242
      %v2244 = vpop.f32.mrf.mxu0
      %v2245 = vadd.f32 0.0, %v2244
      %2246 = vmatmul.bf16.gmra.mxu0 %v2172
      %v2247 = vpop.f32.mrf.mxu0
      %v2248 = vadd.f32 0.0, %v2247
      %v2249 = vpop.f32.mrf.mxu0
      %v2250 = vadd.f32 0.0, %v2249
      %2251 = vmatmul.bf16.gmra.mxu0 %v2175
      %v2252 = vpop.f32.mrf.mxu0
      %v2253 = vadd.f32 0.0, %v2252
      %v2254 = vpop.f32.mrf.mxu0
      %v2255 = vadd.f32 0.0, %v2254
      %2256 = vmatmul.bf16.gmra.mxu0 %v2178
      %v2257 = vpop.f32.mrf.mxu0
      %v2258 = vadd.f32 0.0, %v2257
      %v2259 = vpop.f32.mrf.mxu0
      %v2260 = vadd.f32 0.0, %v2259
      %2261 = vmatmul.bf16.gmra.mxu0 %v2181
      %v2262 = vpop.f32.mrf.mxu0
      %v2263 = vadd.f32 0.0, %v2262
      %v2264 = vpop.f32.mrf.mxu0
      %v2265 = vadd.f32 0.0, %v2264
      %2266 = vmatmul.bf16.gmra.mxu0 %v2184
      %v2267 = vpop.f32.mrf.mxu0
      %v2268 = vadd.f32 0.0, %v2267
      %v2269 = vpop.f32.mrf.mxu0
      %v2270 = vadd.f32 0.0, %v2269
      %2271 = vmatmul.bf16.gmra.mxu0 %v2187
      %v2272 = vpop.f32.mrf.mxu0
      %v2273 = vadd.f32 0.0, %v2272
      %v2274 = vpop.f32.mrf.mxu0
      %v2275 = vadd.f32 0.0, %v2274
      %2276 = vmatmul.bf16.gmra.mxu0 %v2190
      %v2277 = vpop.f32.mrf.mxu0
      %v2278 = vadd.f32 0.0, %v2277
      %v2279 = vpop.f32.mrf.mxu0
      %v2280 = vadd.f32 0.0, %v2279
      %2281 = vmatmul.bf16.gmra.mxu0 %v2193
      %v2282 = vpop.f32.mrf.mxu0
      %v2283 = vadd.f32 0.0, %v2282
      %v2284 = vpop.f32.mrf.mxu0
      %v2285 = vadd.f32 0.0, %v2284
      %2286 = vdwg.mxu0
      %v2287 = vadd.f32 %v1633, %v2208
      %v2288 = vadd.f32 %v1634, %v2210
      %v2289 = vadd.f32 %v1635, %v2213
      %v2290 = vadd.f32 %v1636, %v2215
      %v2291 = vadd.f32 %v1637, %v2218
      %v2292 = vadd.f32 %v1638, %v2220
      %v2293 = vadd.f32 %v1639, %v2223
      %v2294 = vadd.f32 %v1640, %v2225
      %v2295 = vadd.f32 %v1641, %v2228
      %v2296 = vadd.f32 %v1642, %v2230
      %v2297 = vadd.f32 %v1643, %v2233
      %v2298 = vadd.f32 %v1644, %v2235
      %v2299 = vadd.f32 %v1645, %v2238
      %v2300 = vadd.f32 %v1646, %v2240
      %v2301 = vadd.f32 %v1647, %v2243
      %v2302 = vadd.f32 %v1648, %v2245
      %v2303 = vadd.f32 %v1649, %v2248
      %v2304 = vadd.f32 %v1650, %v2250
      %v2305 = vadd.f32 %v1651, %v2253
      %v2306 = vadd.f32 %v1652, %v2255
      %v2307 = vadd.f32 %v1653, %v2258
      %v2308 = vadd.f32 %v1654, %v2260
      %v2309 = vadd.f32 %v1655, %v2263
      %v2310 = vadd.f32 %v1656, %v2265
      %v2311 = vadd.f32 %v1657, %v2268
      %v2312 = vadd.f32 %v1658, %v2270
      %v2313 = vadd.f32 %v1659, %v2273
      %v2314 = vadd.f32 %v1660, %v2275
      %v2315 = vadd.f32 %v1661, %v2278
      %v2316 = vadd.f32 %v1662, %v2280
      %v2317 = vadd.f32 %v1663, %v2283
      %v2318 = vadd.f32 %v1664, %v2285
      %v2319 = vld [vmem:[%s1378] sm:$0xe]
      %v2320 = vld [vmem:[%s1378 + $0xc] sm:$0xe]
      %v2321 = vld [vmem:[%s1378 + $0x18] sm:$0xe]
      %v2322 = vld [vmem:[%s1378 + $0x24] sm:$0xe]
      %v2323 = vld [vmem:[%s1378 + $0x30] sm:$0xe]
      %v2324 = vld [vmem:[%s1378 + $0x3c] sm:$0xe]
      %v2325 = vld [vmem:[%s1378 + $0x48] sm:$0xe]
      %v2326 = vld [vmem:[%s1378 + $0x54] sm:$0xe]
      %v2327 = vld [vmem:[%s1378 + $0x60] sm:$0xe]
      %v2328 = vld [vmem:[%s1378 + $0x6c] sm:$0xe]
      %v2329 = vld [vmem:[%s1378 + $0x78] sm:$0xe]
      %v2330 = vld [vmem:[%s1378 + $0x84] sm:$0xe]
      %v2331 = vld [vmem:[%s1378 + $0x90] sm:$0xe]
      %v2332 = vld [vmem:[%s1378 + $0x9c] sm:$0xe]
      %v2333 = vld [vmem:[%s1378 + $0xa8] sm:$0xe]
      %v2334 = vld [vmem:[%s1378 + $0xb4] sm:$0xe]
      %v2383 = vrot.slane %v2319, 5
      %v2384 = vrot.slane %v2383, 4
      %v2385 = vrot.slane %v1666, 5
      %v2386 = vsel %vm1043, %v2384, %v2385
      %v2387 = vrot.slane %v2385, 4
      %v2388 = vrot.slane %v1667, 5
      %v2389 = vsel %vm1043, %v2387, %v2388
      %v2390 = vrot.slane %v2320, 5
      %v2391 = vrot.slane %v2390, 4
      %v2392 = vrot.slane %v1669, 5
      %v2393 = vsel %vm1043, %v2391, %v2392
      %v2394 = vrot.slane %v2392, 4
      %v2395 = vrot.slane %v1670, 5
      %v2396 = vsel %vm1043, %v2394, %v2395
      %v2397 = vrot.slane %v2321, 5
      %v2398 = vrot.slane %v2397, 4
      %v2399 = vrot.slane %v1672, 5
      %v2400 = vsel %vm1043, %v2398, %v2399
      %v2401 = vrot.slane %v2399, 4
      %v2402 = vrot.slane %v1673, 5
      %v2403 = vsel %vm1043, %v2401, %v2402
      %v2404 = vrot.slane %v2322, 5
      %v2405 = vrot.slane %v2404, 4
      %v2406 = vrot.slane %v1675, 5
      %v2407 = vsel %vm1043, %v2405, %v2406
      %v2408 = vrot.slane %v2406, 4
      %v2409 = vrot.slane %v1676, 5
      %v2410 = vsel %vm1043, %v2408, %v2409
      %v2411 = vrot.slane %v2323, 5
      %v2412 = vrot.slane %v2411, 4
      %v2413 = vrot.slane %v1678, 5
      %v2414 = vsel %vm1043, %v2412, %v2413
      %v2415 = vrot.slane %v2413, 4
      %v2416 = vrot.slane %v1679, 5
      %v2417 = vsel %vm1043, %v2415, %v2416
      %v2418 = vrot.slane %v2324, 5
      %v2419 = vrot.slane %v2418, 4
      %v2420 = vrot.slane %v1681, 5
      %v2421 = vsel %vm1043, %v2419, %v2420
      %v2422 = vrot.slane %v2420, 4
      %v2423 = vrot.slane %v1682, 5
      %v2424 = vsel %vm1043, %v2422, %v2423
      %v2425 = vrot.slane %v2325, 5
      %v2426 = vrot.slane %v2425, 4
      %v2427 = vrot.slane %v1684, 5
      %v2428 = vsel %vm1043, %v2426, %v2427
      %v2429 = vrot.slane %v2427, 4
      %v2430 = vrot.slane %v1685, 5
      %v2431 = vsel %vm1043, %v2429, %v2430
      %v2432 = vrot.slane %v2326, 5
      %v2433 = vrot.slane %v2432, 4
      %v2434 = vrot.slane %v1687, 5
      %v2435 = vsel %vm1043, %v2433, %v2434
      %v2436 = vrot.slane %v2434, 4
      %v2437 = vrot.slane %v1688, 5
      %v2438 = vsel %vm1043, %v2436, %v2437
      %v2439 = vrot.slane %v2327, 5
      %v2440 = vrot.slane %v2439, 4
      %v2441 = vrot.slane %v1690, 5
      %v2442 = vsel %vm1043, %v2440, %v2441
      %v2443 = vrot.slane %v2441, 4
      %v2444 = vrot.slane %v1691, 5
      %v2445 = vsel %vm1043, %v2443, %v2444
      %v2446 = vrot.slane %v2328, 5
      %v2447 = vrot.slane %v2446, 4
      %v2448 = vrot.slane %v1693, 5
      %v2449 = vsel %vm1043, %v2447, %v2448
      %v2450 = vrot.slane %v2448, 4
      %v2451 = vrot.slane %v1694, 5
      %v2452 = vsel %vm1043, %v2450, %v2451
      %v2453 = vrot.slane %v2329, 5
      %v2454 = vrot.slane %v2453, 4
      %v2455 = vrot.slane %v1696, 5
      %v2456 = vsel %vm1043, %v2454, %v2455
      %v2457 = vrot.slane %v2455, 4
      %v2458 = vrot.slane %v1697, 5
      %v2459 = vsel %vm1043, %v2457, %v2458
      %v2460 = vrot.slane %v2330, 5
      %v2461 = vrot.slane %v2460, 4
      %v2462 = vrot.slane %v1699, 5
      %v2463 = vsel %vm1043, %v2461, %v2462
      %v2464 = vrot.slane %v2462, 4
      %v2465 = vrot.slane %v1700, 5
      %v2466 = vsel %vm1043, %v2464, %v2465
      %v2467 = vrot.slane %v2331, 5
      %v2468 = vrot.slane %v2467, 4
      %v2469 = vrot.slane %v1702, 5
      %v2470 = vsel %vm1043, %v2468, %v2469
      %v2471 = vrot.slane %v2469, 4
      %v2472 = vrot.slane %v1703, 5
      %v2473 = vsel %vm1043, %v2471, %v2472
      %v2474 = vrot.slane %v2332, 5
      %v2475 = vrot.slane %v2474, 4
      %v2476 = vrot.slane %v1705, 5
      %v2477 = vsel %vm1043, %v2475, %v2476
      %v2478 = vrot.slane %v2476, 4
      %v2479 = vrot.slane %v1706, 5
      %v2480 = vsel %vm1043, %v2478, %v2479
      %v2481 = vrot.slane %v2333, 5
      %v2482 = vrot.slane %v2481, 4
      %v2483 = vrot.slane %v1708, 5
      %v2484 = vsel %vm1043, %v2482, %v2483
      %v2485 = vrot.slane %v2483, 4
      %v2486 = vrot.slane %v1709, 5
      %v2487 = vsel %vm1043, %v2485, %v2486
      %v2488 = vrot.slane %v2334, 5
      %v2489 = vrot.slane %v2488, 4
      %v2490 = vrot.slane %v1711, 5
      %v2491 = vsel %vm1043, %v2489, %v2490
      %v2492 = vrot.slane %v2490, 4
      %v2493 = vrot.slane %v1712, 5
      %v2494 = vsel %vm1043, %v2492, %v2493
      %s2495 = scalar_lea.vmem %s1, 10
      %v2496 = vld [vmem:[%s2495] sm:$0x3]
      %v2497 = vunpack.c.l.b16 %v2386
      %v2498 = vunpack.c.l.b16 %v2389
      %v2499 = vunpack.c.l.b16 %v2393
      %v2500 = vunpack.c.l.b16 %v2396
      %v2501 = vunpack.c.l.b16 %v2400
      %v2502 = vunpack.c.l.b16 %v2403
      %v2503 = vunpack.c.l.b16 %v2407
      %v2504 = vunpack.c.l.b16 %v2410
      %v2505 = vunpack.c.l.b16 %v2414
      %v2506 = vunpack.c.l.b16 %v2417
      %v2507 = vunpack.c.l.b16 %v2421
      %v2508 = vunpack.c.l.b16 %v2424
      %v2509 = vunpack.c.l.b16 %v2428
      %v2510 = vunpack.c.l.b16 %v2431
      %v2511 = vunpack.c.l.b16 %v2435
      %v2512 = vunpack.c.l.b16 %v2438
      %v2513 = vunpack.c.l.b16 %v2442
      %v2514 = vunpack.c.l.b16 %v2445
      %v2515 = vunpack.c.l.b16 %v2449
      %v2516 = vunpack.c.l.b16 %v2452
      %v2517 = vunpack.c.l.b16 %v2456
      %v2518 = vunpack.c.l.b16 %v2459
      %v2519 = vunpack.c.l.b16 %v2463
      %v2520 = vunpack.c.l.b16 %v2466
      %v2521 = vunpack.c.l.b16 %v2470
      %v2522 = vunpack.c.l.b16 %v2473
      %v2523 = vunpack.c.l.b16 %v2477
      %v2524 = vunpack.c.l.b16 %v2480
      %v2525 = vunpack.c.l.b16 %v2484
      %v2526 = vunpack.c.l.b16 %v2487
      %v2527 = vunpack.c.l.b16 %v2491
      %v2528 = vunpack.c.l.b16 %v2494
      %v2529 = vpack.c.b16 %v2498, %v2497
      %v2530 = vpack.c.b16 %v2500, %v2499
      %v2531 = vpack.c.b16 %v2502, %v2501
      %v2532 = vpack.c.b16 %v2504, %v2503
      %v2533 = vpack.c.b16 %v2506, %v2505
      %v2534 = vpack.c.b16 %v2508, %v2507
      %v2535 = vpack.c.b16 %v2510, %v2509
      %v2536 = vpack.c.b16 %v2512, %v2511
      %v2537 = vpack.c.b16 %v2514, %v2513
      %v2538 = vpack.c.b16 %v2516, %v2515
      %v2539 = vpack.c.b16 %v2518, %v2517
      %v2540 = vpack.c.b16 %v2520, %v2519
      %v2541 = vpack.c.b16 %v2522, %v2521
      %v2542 = vpack.c.b16 %v2524, %v2523
      %v2543 = vpack.c.b16 %v2526, %v2525
      %v2544 = vpack.c.b16 %v2528, %v2527
      %v2546 = vsel %vm631, %v2529, 0
      %v2549 = vsel %vm631, %v2530, 0
      %v2552 = vsel %vm631, %v2531, 0
      %v2555 = vsel %vm631, %v2532, 0
      %v2558 = vsel %vm631, %v2533, 0
      %v2561 = vsel %vm631, %v2534, 0
      %v2564 = vsel %vm631, %v2535, 0
      %v2567 = vsel %vm631, %v2536, 0
      %v2570 = vsel %vm631, %v2537, 0
      %v2573 = vsel %vm631, %v2538, 0
      %v2576 = vsel %vm631, %v2539, 0
      %v2579 = vsel %vm631, %v2540, 0
      %v2582 = vsel %vm631, %v2541, 0
      %v2585 = vsel %vm631, %v2542, 0
      %v2588 = vsel %vm631, %v2543, 0
      %v2591 = vsel %vm631, %v2544, 0
      %v2594 = vsel %vm680, %v2496, 0
      %2596 = vmatpush.bf16.msra.mxu0 0
      %2597 = vmatpush.bf16.msra.mxu0 0
      %2598 = vmatpush.bf16.msra.mxu0 0
      %2599 = vmatpush.bf16.msra.mxu0 0
      %2600 = vmatpush.bf16.msra.mxu0 0
      %2601 = vmatpush.bf16.msra.mxu0 0
      %2602 = vmatpush.bf16.msra.mxu0 0
      %2603 = vmatpush.bf16.msra.mxu0 %v2594
      %2604 = vmatmul.bf16.gmra.mxu0 %v2546
      %v2605 = vpop.f32.mrf.mxu0
      %v2606 = vadd.f32 0.0, %v2605
      %v2607 = vpop.f32.mrf.mxu0
      %v2608 = vadd.f32 0.0, %v2607
      %2609 = vmatmul.bf16.gmra.mxu0 %v2549
      %v2610 = vpop.f32.mrf.mxu0
      %v2611 = vadd.f32 0.0, %v2610
      %v2612 = vpop.f32.mrf.mxu0
      %v2613 = vadd.f32 0.0, %v2612
      %2614 = vmatmul.bf16.gmra.mxu0 %v2552
      %v2615 = vpop.f32.mrf.mxu0
      %v2616 = vadd.f32 0.0, %v2615
      %v2617 = vpop.f32.mrf.mxu0
      %v2618 = vadd.f32 0.0, %v2617
      %2619 = vmatmul.bf16.gmra.mxu0 %v2555
      %v2620 = vpop.f32.mrf.mxu0
      %v2621 = vadd.f32 0.0, %v2620
      %v2622 = vpop.f32.mrf.mxu0
      %v2623 = vadd.f32 0.0, %v2622
      %2624 = vmatmul.bf16.gmra.mxu0 %v2558
      %v2625 = vpop.f32.mrf.mxu0
      %v2626 = vadd.f32 0.0, %v2625
      %v2627 = vpop.f32.mrf.mxu0
      %v2628 = vadd.f32 0.0, %v2627
      %2629 = vmatmul.bf16.gmra.mxu0 %v2561
      %v2630 = vpop.f32.mrf.mxu0
      %v2631 = vadd.f32 0.0, %v2630
      %v2632 = vpop.f32.mrf.mxu0
      %v2633 = vadd.f32 0.0, %v2632
      %2634 = vmatmul.bf16.gmra.mxu0 %v2564
      %v2635 = vpop.f32.mrf.mxu0
      %v2636 = vadd.f32 0.0, %v2635
      %v2637 = vpop.f32.mrf.mxu0
      %v2638 = vadd.f32 0.0, %v2637
      %2639 = vmatmul.bf16.gmra.mxu0 %v2567
      %v2640 = vpop.f32.mrf.mxu0
      %v2641 = vadd.f32 0.0, %v2640
      %v2642 = vpop.f32.mrf.mxu0
      %v2643 = vadd.f32 0.0, %v2642
      %2644 = vmatmul.bf16.gmra.mxu0 %v2570
      %v2645 = vpop.f32.mrf.mxu0
      %v2646 = vadd.f32 0.0, %v2645
      %v2647 = vpop.f32.mrf.mxu0
      %v2648 = vadd.f32 0.0, %v2647
      %2649 = vmatmul.bf16.gmra.mxu0 %v2573
      %v2650 = vpop.f32.mrf.mxu0
      %v2651 = vadd.f32 0.0, %v2650
      %v2652 = vpop.f32.mrf.mxu0
      %v2653 = vadd.f32 0.0, %v2652
      %2654 = vmatmul.bf16.gmra.mxu0 %v2576
      %v2655 = vpop.f32.mrf.mxu0
      %v2656 = vadd.f32 0.0, %v2655
      %v2657 = vpop.f32.mrf.mxu0
      %v2658 = vadd.f32 0.0, %v2657
      %2659 = vmatmul.bf16.gmra.mxu0 %v2579
      %v2660 = vpop.f32.mrf.mxu0
      %v2661 = vadd.f32 0.0, %v2660
      %v2662 = vpop.f32.mrf.mxu0
      %v2663 = vadd.f32 0.0, %v2662
      %2664 = vmatmul.bf16.gmra.mxu0 %v2582
      %v2665 = vpop.f32.mrf.mxu0
      %v2666 = vadd.f32 0.0, %v2665
      %v2667 = vpop.f32.mrf.mxu0
      %v2668 = vadd.f32 0.0, %v2667
      %2669 = vmatmul.bf16.gmra.mxu0 %v2585
      %v2670 = vpop.f32.mrf.mxu0
      %v2671 = vadd.f32 0.0, %v2670
      %v2672 = vpop.f32.mrf.mxu0
      %v2673 = vadd.f32 0.0, %v2672
      %2674 = vmatmul.bf16.gmra.mxu0 %v2588
      %v2675 = vpop.f32.mrf.mxu0
      %v2676 = vadd.f32 0.0, %v2675
      %v2677 = vpop.f32.mrf.mxu0
      %v2678 = vadd.f32 0.0, %v2677
      %2679 = vmatmul.bf16.gmra.mxu0 %v2591
      %v2680 = vpop.f32.mrf.mxu0
      %v2681 = vadd.f32 0.0, %v2680
      %v2682 = vpop.f32.mrf.mxu0
      %v2683 = vadd.f32 0.0, %v2682
      %2684 = vdwg.mxu0
      %v2685 = vadd.f32 %v2287, %v2606
      %v2686 = vadd.f32 %v2288, %v2608
      %v2687 = vadd.f32 %v2289, %v2611
      %v2688 = vadd.f32 %v2290, %v2613
      %v2689 = vadd.f32 %v2291, %v2616
      %v2690 = vadd.f32 %v2292, %v2618
      %v2691 = vadd.f32 %v2293, %v2621
      %v2692 = vadd.f32 %v2294, %v2623
      %v2693 = vadd.f32 %v2295, %v2626
      %v2694 = vadd.f32 %v2296, %v2628
      %v2695 = vadd.f32 %v2297, %v2631
      %v2696 = vadd.f32 %v2298, %v2633
      %v2697 = vadd.f32 %v2299, %v2636
      %v2698 = vadd.f32 %v2300, %v2638
      %v2699 = vadd.f32 %v2301, %v2641
      %v2700 = vadd.f32 %v2302, %v2643
      %v2701 = vadd.f32 %v2303, %v2646
      %v2702 = vadd.f32 %v2304, %v2648
      %v2703 = vadd.f32 %v2305, %v2651
      %v2704 = vadd.f32 %v2306, %v2653
      %v2705 = vadd.f32 %v2307, %v2656
      %v2706 = vadd.f32 %v2308, %v2658
      %v2707 = vadd.f32 %v2309, %v2661
      %v2708 = vadd.f32 %v2310, %v2663
      %v2709 = vadd.f32 %v2311, %v2666
      %v2710 = vadd.f32 %v2312, %v2668
      %v2711 = vadd.f32 %v2313, %v2671
      %v2712 = vadd.f32 %v2314, %v2673
      %v2713 = vadd.f32 %v2315, %v2676
      %v2714 = vadd.f32 %v2316, %v2678
      %v2715 = vadd.f32 %v2317, %v2681
      %v2716 = vadd.f32 %v2318, %v2683
      %s2717 = scalar_lea.vmem %s138, 24
      %v2718 = vld [vmem:[%s2717] sm:$0xf]
      %v2719 = vld [vmem:[%s2717 + $0x4] sm:$0xf]
      %v2720 = vld [vmem:[%s2717 + $0xc] sm:$0xf]
      %v2721 = vld [vmem:[%s2717 + $0x10] sm:$0xf]
      %v2722 = vld [vmem:[%s2717 + $0x18] sm:$0xf]
      %v2723 = vld [vmem:[%s2717 + $0x1c] sm:$0xf]
      %v2724 = vld [vmem:[%s2717 + $0x24] sm:$0xf]
      %v2725 = vld [vmem:[%s2717 + $0x28] sm:$0xf]
      %v2726 = vld [vmem:[%s2717 + $0x30] sm:$0xf]
      %v2727 = vld [vmem:[%s2717 + $0x34] sm:$0xf]
      %v2728 = vld [vmem:[%s2717 + $0x3c] sm:$0xf]
      %v2729 = vld [vmem:[%s2717 + $0x40] sm:$0xf]
      %v2730 = vld [vmem:[%s2717 + $0x48] sm:$0xf]
      %v2731 = vld [vmem:[%s2717 + $0x4c] sm:$0xf]
      %v2732 = vld [vmem:[%s2717 + $0x54] sm:$0xf]
      %v2733 = vld [vmem:[%s2717 + $0x58] sm:$0xf]
      %v2734 = vld [vmem:[%s2717 + $0x60] sm:$0xf]
      %v2735 = vld [vmem:[%s2717 + $0x64] sm:$0xf]
      %v2736 = vld [vmem:[%s2717 + $0x6c] sm:$0xf]
      %v2737 = vld [vmem:[%s2717 + $0x70] sm:$0xf]
      %v2738 = vld [vmem:[%s2717 + $0x78] sm:$0xf]
      %v2739 = vld [vmem:[%s2717 + $0x7c] sm:$0xf]
      %v2740 = vld [vmem:[%s2717 + $0x84] sm:$0xf]
      %v2741 = vld [vmem:[%s2717 + $0x88] sm:$0xf]
      %v2742 = vld [vmem:[%s2717 + $0x90] sm:$0xf]
      %v2743 = vld [vmem:[%s2717 + $0x94] sm:$0xf]
      %v2744 = vld [vmem:[%s2717 + $0x9c] sm:$0xf]
      %v2745 = vld [vmem:[%s2717 + $0xa0] sm:$0xf]
      %v2746 = vld [vmem:[%s2717 + $0xa8] sm:$0xf]
      %v2747 = vld [vmem:[%s2717 + $0xac] sm:$0xf]
      %v2748 = vld [vmem:[%s2717 + $0xb4] sm:$0xf]
      %v2749 = vld [vmem:[%s2717 + $0xb8] sm:$0xf]
      %s2750 = scalar_lea.vmem %s1, 12
      %v2751 = vld [vmem:[%s2750] sm:$0x3]
      %v2784 = vunpack.c.l.b16 %v2718
      %v2785 = vunpack.c.l.b16 %v2719
      %v2786 = vunpack.c.l.b16 %v2720
      %v2787 = vunpack.c.l.b16 %v2721
      %v2788 = vunpack.c.l.b16 %v2722
      %v2789 = vunpack.c.l.b16 %v2723
      %v2790 = vunpack.c.l.b16 %v2724
      %v2791 = vunpack.c.l.b16 %v2725
      %v2792 = vunpack.c.l.b16 %v2726
      %v2793 = vunpack.c.l.b16 %v2727
      %v2794 = vunpack.c.l.b16 %v2728
      %v2795 = vunpack.c.l.b16 %v2729
      %v2796 = vunpack.c.l.b16 %v2730
      %v2797 = vunpack.c.l.b16 %v2731
      %v2798 = vunpack.c.l.b16 %v2732
      %v2799 = vunpack.c.l.b16 %v2733
      %v2800 = vunpack.c.l.b16 %v2734
      %v2801 = vunpack.c.l.b16 %v2735
      %v2802 = vunpack.c.l.b16 %v2736
      %v2803 = vunpack.c.l.b16 %v2737
      %v2804 = vunpack.c.l.b16 %v2738
      %v2805 = vunpack.c.l.b16 %v2739
      %v2806 = vunpack.c.l.b16 %v2740
      %v2807 = vunpack.c.l.b16 %v2741
      %v2808 = vunpack.c.l.b16 %v2742
      %v2809 = vunpack.c.l.b16 %v2743
      %v2810 = vunpack.c.l.b16 %v2744
      %v2811 = vunpack.c.l.b16 %v2745
      %v2812 = vunpack.c.l.b16 %v2746
      %v2813 = vunpack.c.l.b16 %v2747
      %v2814 = vunpack.c.l.b16 %v2748
      %v2815 = vunpack.c.l.b16 %v2749
      %v2816 = vpack.c.b16 %v2785, %v2784
      %v2817 = vpack.c.b16 %v2787, %v2786
      %v2818 = vpack.c.b16 %v2789, %v2788
      %v2819 = vpack.c.b16 %v2791, %v2790
      %v2820 = vpack.c.b16 %v2793, %v2792
      %v2821 = vpack.c.b16 %v2795, %v2794
      %v2822 = vpack.c.b16 %v2797, %v2796
      %v2823 = vpack.c.b16 %v2799, %v2798
      %v2824 = vpack.c.b16 %v2801, %v2800
      %v2825 = vpack.c.b16 %v2803, %v2802
      %v2826 = vpack.c.b16 %v2805, %v2804
      %v2827 = vpack.c.b16 %v2807, %v2806
      %v2828 = vpack.c.b16 %v2809, %v2808
      %v2829 = vpack.c.b16 %v2811, %v2810
      %v2830 = vpack.c.b16 %v2813, %v2812
      %v2831 = vpack.c.b16 %v2815, %v2814
      %v2833 = vsel %vm631, %v2816, 0
      %v2836 = vsel %vm631, %v2817, 0
      %v2839 = vsel %vm631, %v2818, 0
      %v2842 = vsel %vm631, %v2819, 0
      %v2845 = vsel %vm631, %v2820, 0
      %v2848 = vsel %vm631, %v2821, 0
      %v2851 = vsel %vm631, %v2822, 0
      %v2854 = vsel %vm631, %v2823, 0
      %v2857 = vsel %vm631, %v2824, 0
      %v2860 = vsel %vm631, %v2825, 0
      %v2863 = vsel %vm631, %v2826, 0
      %v2866 = vsel %vm631, %v2827, 0
      %v2869 = vsel %vm631, %v2828, 0
      %v2872 = vsel %vm631, %v2829, 0
      %v2875 = vsel %vm631, %v2830, 0
      %v2878 = vsel %vm631, %v2831, 0
      %v2881 = vsel %vm680, %v2751, 0
      %2883 = vmatpush.bf16.msra.mxu0 0
      %2884 = vmatpush.bf16.msra.mxu0 0
      %2885 = vmatpush.bf16.msra.mxu0 0
      %2886 = vmatpush.bf16.msra.mxu0 0
      %2887 = vmatpush.bf16.msra.mxu0 0
      %2888 = vmatpush.bf16.msra.mxu0 0
      %2889 = vmatpush.bf16.msra.mxu0 0
      %2890 = vmatpush.bf16.msra.mxu0 %v2881
      %2891 = vmatmul.bf16.gmra.mxu0 %v2833
      %v2892 = vpop.f32.mrf.mxu0
      %v2893 = vadd.f32 0.0, %v2892
      %v2894 = vpop.f32.mrf.mxu0
      %v2895 = vadd.f32 0.0, %v2894
      %2896 = vmatmul.bf16.gmra.mxu0 %v2836
      %v2897 = vpop.f32.mrf.mxu0
      %v2898 = vadd.f32 0.0, %v2897
      %v2899 = vpop.f32.mrf.mxu0
      %v2900 = vadd.f32 0.0, %v2899
      %2901 = vmatmul.bf16.gmra.mxu0 %v2839
      %v2902 = vpop.f32.mrf.mxu0
      %v2903 = vadd.f32 0.0, %v2902
      %v2904 = vpop.f32.mrf.mxu0
      %v2905 = vadd.f32 0.0, %v2904
      %2906 = vmatmul.bf16.gmra.mxu0 %v2842
      %v2907 = vpop.f32.mrf.mxu0
      %v2908 = vadd.f32 0.0, %v2907
      %v2909 = vpop.f32.mrf.mxu0
      %v2910 = vadd.f32 0.0, %v2909
      %2911 = vmatmul.bf16.gmra.mxu0 %v2845
      %v2912 = vpop.f32.mrf.mxu0
      %v2913 = vadd.f32 0.0, %v2912
      %v2914 = vpop.f32.mrf.mxu0
      %v2915 = vadd.f32 0.0, %v2914
      %2916 = vmatmul.bf16.gmra.mxu0 %v2848
      %v2917 = vpop.f32.mrf.mxu0
      %v2918 = vadd.f32 0.0, %v2917
      %v2919 = vpop.f32.mrf.mxu0
      %v2920 = vadd.f32 0.0, %v2919
      %2921 = vmatmul.bf16.gmra.mxu0 %v2851
      %v2922 = vpop.f32.mrf.mxu0
      %v2923 = vadd.f32 0.0, %v2922
      %v2924 = vpop.f32.mrf.mxu0
      %v2925 = vadd.f32 0.0, %v2924
      %2926 = vmatmul.bf16.gmra.mxu0 %v2854
      %v2927 = vpop.f32.mrf.mxu0
      %v2928 = vadd.f32 0.0, %v2927
      %v2929 = vpop.f32.mrf.mxu0
      %v2930 = vadd.f32 0.0, %v2929
      %2931 = vmatmul.bf16.gmra.mxu0 %v2857
      %v2932 = vpop.f32.mrf.mxu0
      %v2933 = vadd.f32 0.0, %v2932
      %v2934 = vpop.f32.mrf.mxu0
      %v2935 = vadd.f32 0.0, %v2934
      %2936 = vmatmul.bf16.gmra.mxu0 %v2860
      %v2937 = vpop.f32.mrf.mxu0
      %v2938 = vadd.f32 0.0, %v2937
      %v2939 = vpop.f32.mrf.mxu0
      %v2940 = vadd.f32 0.0, %v2939
      %2941 = vmatmul.bf16.gmra.mxu0 %v2863
      %v2942 = vpop.f32.mrf.mxu0
      %v2943 = vadd.f32 0.0, %v2942
      %v2944 = vpop.f32.mrf.mxu0
      %v2945 = vadd.f32 0.0, %v2944
      %2946 = vmatmul.bf16.gmra.mxu0 %v2866
      %v2947 = vpop.f32.mrf.mxu0
      %v2948 = vadd.f32 0.0, %v2947
      %v2949 = vpop.f32.mrf.mxu0
      %v2950 = vadd.f32 0.0, %v2949
      %2951 = vmatmul.bf16.gmra.mxu0 %v2869
      %v2952 = vpop.f32.mrf.mxu0
      %v2953 = vadd.f32 0.0, %v2952
      %v2954 = vpop.f32.mrf.mxu0
      %v2955 = vadd.f32 0.0, %v2954
      %2956 = vmatmul.bf16.gmra.mxu0 %v2872
      %v2957 = vpop.f32.mrf.mxu0
      %v2958 = vadd.f32 0.0, %v2957
      %v2959 = vpop.f32.mrf.mxu0
      %v2960 = vadd.f32 0.0, %v2959
      %2961 = vmatmul.bf16.gmra.mxu0 %v2875
      %v2962 = vpop.f32.mrf.mxu0
      %v2963 = vadd.f32 0.0, %v2962
      %v2964 = vpop.f32.mrf.mxu0
      %v2965 = vadd.f32 0.0, %v2964
      %2966 = vmatmul.bf16.gmra.mxu0 %v2878
      %v2967 = vpop.f32.mrf.mxu0
      %v2968 = vadd.f32 0.0, %v2967
      %v2969 = vpop.f32.mrf.mxu0
      %v2970 = vadd.f32 0.0, %v2969
      %2971 = vdwg.mxu0
      %v2972 = vadd.f32 %v2685, %v2893
      %v2973 = vadd.f32 %v2686, %v2895
      %v2974 = vadd.f32 %v2687, %v2898
      %v2975 = vadd.f32 %v2688, %v2900
      %v2976 = vadd.f32 %v2689, %v2903
      %v2977 = vadd.f32 %v2690, %v2905
      %v2978 = vadd.f32 %v2691, %v2908
      %v2979 = vadd.f32 %v2692, %v2910
      %v2980 = vadd.f32 %v2693, %v2913
      %v2981 = vadd.f32 %v2694, %v2915
      %v2982 = vadd.f32 %v2695, %v2918
      %v2983 = vadd.f32 %v2696, %v2920
      %v2984 = vadd.f32 %v2697, %v2923
      %v2985 = vadd.f32 %v2698, %v2925
      %v2986 = vadd.f32 %v2699, %v2928
      %v2987 = vadd.f32 %v2700, %v2930
      %v2988 = vadd.f32 %v2701, %v2933
      %v2989 = vadd.f32 %v2702, %v2935
      %v2990 = vadd.f32 %v2703, %v2938
      %v2991 = vadd.f32 %v2704, %v2940
      %v2992 = vadd.f32 %v2705, %v2943
      %v2993 = vadd.f32 %v2706, %v2945
      %v2994 = vadd.f32 %v2707, %v2948
      %v2995 = vadd.f32 %v2708, %v2950
      %v2996 = vadd.f32 %v2709, %v2953
      %v2997 = vadd.f32 %v2710, %v2955
      %v2998 = vadd.f32 %v2711, %v2958
      %v2999 = vadd.f32 %v2712, %v2960
      %v3000 = vadd.f32 %v2713, %v2963
      %v3001 = vadd.f32 %v2714, %v2965
      %v3002 = vadd.f32 %v2715, %v2968
      %v3003 = vadd.f32 %v2716, %v2970
      %v3004 = vld [vmem:[%s2717] sm:$0xf]
      %v3005 = vld [vmem:[%s2717 + $0x4] sm:$0xf]
      %v3006 = vld [vmem:[%s2717 + $0x8] sm:$0x1]
      %v3007 = vld [vmem:[%s2717 + $0xc] sm:$0xf]
      %v3008 = vld [vmem:[%s2717 + $0x10] sm:$0xf]
      %v3009 = vld [vmem:[%s2717 + $0x14] sm:$0x1]
      %v3010 = vld [vmem:[%s2717 + $0x18] sm:$0xf]
      %v3011 = vld [vmem:[%s2717 + $0x1c] sm:$0xf]
      %v3012 = vld [vmem:[%s2717 + $0x20] sm:$0x1]
      %v3013 = vld [vmem:[%s2717 + $0x24] sm:$0xf]
      %v3014 = vld [vmem:[%s2717 + $0x28] sm:$0xf]
      %v3015 = vld [vmem:[%s2717 + $0x2c] sm:$0x1]
      %v3016 = vld [vmem:[%s2717 + $0x30] sm:$0xf]
      %v3017 = vld [vmem:[%s2717 + $0x34] sm:$0xf]
      %v3018 = vld [vmem:[%s2717 + $0x38] sm:$0x1]
      %v3019 = vld [vmem:[%s2717 + $0x3c] sm:$0xf]
      %v3020 = vld [vmem:[%s2717 + $0x40] sm:$0xf]
      %v3021 = vld [vmem:[%s2717 + $0x44] sm:$0x1]
      %v3022 = vld [vmem:[%s2717 + $0x48] sm:$0xf]
      %v3023 = vld [vmem:[%s2717 + $0x4c] sm:$0xf]
      %v3024 = vld [vmem:[%s2717 + $0x50] sm:$0x1]
      %v3025 = vld [vmem:[%s2717 + $0x54] sm:$0xf]
      %v3026 = vld [vmem:[%s2717 + $0x58] sm:$0xf]
      %v3027 = vld [vmem:[%s2717 + $0x5c] sm:$0x1]
      %v3028 = vld [vmem:[%s2717 + $0x60] sm:$0xf]
      %v3029 = vld [vmem:[%s2717 + $0x64] sm:$0xf]
      %v3030 = vld [vmem:[%s2717 + $0x68] sm:$0x1]
      %v3031 = vld [vmem:[%s2717 + $0x6c] sm:$0xf]
      %v3032 = vld [vmem:[%s2717 + $0x70] sm:$0xf]
      %v3033 = vld [vmem:[%s2717 + $0x74] sm:$0x1]
      %v3034 = vld [vmem:[%s2717 + $0x78] sm:$0xf]
      %v3035 = vld [vmem:[%s2717 + $0x7c] sm:$0xf]
      %v3036 = vld [vmem:[%s2717 + $0x80] sm:$0x1]
      %v3037 = vld [vmem:[%s2717 + $0x84] sm:$0xf]
      %v3038 = vld [vmem:[%s2717 + $0x88] sm:$0xf]
      %v3039 = vld [vmem:[%s2717 + $0x8c] sm:$0x1]
      %v3040 = vld [vmem:[%s2717 + $0x90] sm:$0xf]
      %v3041 = vld [vmem:[%s2717 + $0x94] sm:$0xf]
      %v3042 = vld [vmem:[%s2717 + $0x98] sm:$0x1]
      %v3043 = vld [vmem:[%s2717 + $0x9c] sm:$0xf]
      %v3044 = vld [vmem:[%s2717 + $0xa0] sm:$0xf]
      %v3045 = vld [vmem:[%s2717 + $0xa4] sm:$0x1]
      %v3046 = vld [vmem:[%s2717 + $0xa8] sm:$0xf]
      %v3047 = vld [vmem:[%s2717 + $0xac] sm:$0xf]
      %v3048 = vld [vmem:[%s2717 + $0xb0] sm:$0x1]
      %v3049 = vld [vmem:[%s2717 + $0xb4] sm:$0xf]
      %v3050 = vld [vmem:[%s2717 + $0xb8] sm:$0xf]
      %v3051 = vld [vmem:[%s2717 + $0xbc] sm:$0x1]
      %v3053 = vshrl.u32 %v3004, 16
      %v3055 = vrot.slane %v3053, 4
      %v3056 = vshll.u32 %v3004, 16
      %v3058 = vrot.slane %v3056, 5
      %v3059 = vor.u32 %v3055, %v3058
      %v3060 = vrot.slane %v3059, 4
      %v3062 = vshll.u32 %v3005, 16
      %v3064 = vrot.slane %v3062, 5
      %v3065 = vsel %vm196, %v3060, %v3064
      %v3066 = vshrl.u32 %v3005, 16
      %v3068 = vrot.slane %v3066, 4
      %v3069 = vor.u32 %v3068, %v3064
      %v3070 = vrot.slane %v3069, 4
      %v3072 = vshll.u32 %v3006, 16
      %v3074 = vrot.slane %v3072, 5
      %v3075 = vsel %vm196, %v3070, %v3074
      %v3077 = vshrl.u32 %v3007, 16
      %v3079 = vrot.slane %v3077, 4
      %v3080 = vshll.u32 %v3007, 16
      %v3082 = vrot.slane %v3080, 5
      %v3083 = vor.u32 %v3079, %v3082
      %v3084 = vrot.slane %v3083, 4
      %v3086 = vshll.u32 %v3008, 16
      %v3088 = vrot.slane %v3086, 5
      %v3089 = vsel %vm196, %v3084, %v3088
      %v3090 = vshrl.u32 %v3008, 16
      %v3092 = vrot.slane %v3090, 4
      %v3093 = vor.u32 %v3092, %v3088
      %v3094 = vrot.slane %v3093, 4
      %v3096 = vshll.u32 %v3009, 16
      %v3098 = vrot.slane %v3096, 5
      %v3099 = vsel %vm196, %v3094, %v3098
      %v3101 = vshrl.u32 %v3010, 16
      %v3103 = vrot.slane %v3101, 4
      %v3104 = vshll.u32 %v3010, 16
      %v3106 = vrot.slane %v3104, 5
      %v3107 = vor.u32 %v3103, %v3106
      %v3108 = vrot.slane %v3107, 4
      %v3110 = vshll.u32 %v3011, 16
      %v3112 = vrot.slane %v3110, 5
      %v3113 = vsel %vm196, %v3108, %v3112
      %v3114 = vshrl.u32 %v3011, 16
      %v3116 = vrot.slane %v3114, 4
      %v3117 = vor.u32 %v3116, %v3112
      %v3118 = vrot.slane %v3117, 4
      %v3120 = vshll.u32 %v3012, 16
      %v3122 = vrot.slane %v3120, 5
      %v3123 = vsel %vm196, %v3118, %v3122
      %v3125 = vshrl.u32 %v3013, 16
      %v3127 = vrot.slane %v3125, 4
      %v3128 = vshll.u32 %v3013, 16
      %v3130 = vrot.slane %v3128, 5
      %v3131 = vor.u32 %v3127, %v3130
      %v3132 = vrot.slane %v3131, 4
      %v3134 = vshll.u32 %v3014, 16
      %v3136 = vrot.slane %v3134, 5
      %v3137 = vsel %vm196, %v3132, %v3136
      %v3138 = vshrl.u32 %v3014, 16
      %v3140 = vrot.slane %v3138, 4
      %v3141 = vor.u32 %v3140, %v3136
      %v3142 = vrot.slane %v3141, 4
      %v3144 = vshll.u32 %v3015, 16
      %v3146 = vrot.slane %v3144, 5
      %v3147 = vsel %vm196, %v3142, %v3146
      %v3149 = vshrl.u32 %v3016, 16
      %v3151 = vrot.slane %v3149, 4
      %v3152 = vshll.u32 %v3016, 16
      %v3154 = vrot.slane %v3152, 5
      %v3155 = vor.u32 %v3151, %v3154
      %v3156 = vrot.slane %v3155, 4
      %v3158 = vshll.u32 %v3017, 16
      %v3160 = vrot.slane %v3158, 5
      %v3161 = vsel %vm196, %v3156, %v3160
      %v3162 = vshrl.u32 %v3017, 16
      %v3164 = vrot.slane %v3162, 4
      %v3165 = vor.u32 %v3164, %v3160
      %v3166 = vrot.slane %v3165, 4
      %v3168 = vshll.u32 %v3018, 16
      %v3170 = vrot.slane %v3168, 5
      %v3171 = vsel %vm196, %v3166, %v3170
      %v3173 = vshrl.u32 %v3019, 16
      %v3175 = vrot.slane %v3173, 4
      %v3176 = vshll.u32 %v3019, 16
      %v3178 = vrot.slane %v3176, 5
      %v3179 = vor.u32 %v3175, %v3178
      %v3180 = vrot.slane %v3179, 4
      %v3182 = vshll.u32 %v3020, 16
      %v3184 = vrot.slane %v3182, 5
      %v3185 = vsel %vm196, %v3180, %v3184
      %v3186 = vshrl.u32 %v3020, 16
      %v3188 = vrot.slane %v3186, 4
      %v3189 = vor.u32 %v3188, %v3184
      %v3190 = vrot.slane %v3189, 4
      %v3192 = vshll.u32 %v3021, 16
      %v3194 = vrot.slane %v3192, 5
      %v3195 = vsel %vm196, %v3190, %v3194
      %v3197 = vshrl.u32 %v3022, 16
      %v3199 = vrot.slane %v3197, 4
      %v3200 = vshll.u32 %v3022, 16
      %v3202 = vrot.slane %v3200, 5
      %v3203 = vor.u32 %v3199, %v3202
      %v3204 = vrot.slane %v3203, 4
      %v3206 = vshll.u32 %v3023, 16
      %v3208 = vrot.slane %v3206, 5
      %v3209 = vsel %vm196, %v3204, %v3208
      %v3210 = vshrl.u32 %v3023, 16
      %v3212 = vrot.slane %v3210, 4
      %v3213 = vor.u32 %v3212, %v3208
      %v3214 = vrot.slane %v3213, 4
      %v3216 = vshll.u32 %v3024, 16
      %v3218 = vrot.slane %v3216, 5
      %v3219 = vsel %vm196, %v3214, %v3218
      %v3221 = vshrl.u32 %v3025, 16
      %v3223 = vrot.slane %v3221, 4
      %v3224 = vshll.u32 %v3025, 16
      %v3226 = vrot.slane %v3224, 5
      %v3227 = vor.u32 %v3223, %v3226
      %v3228 = vrot.slane %v3227, 4
      %v3230 = vshll.u32 %v3026, 16
      %v3232 = vrot.slane %v3230, 5
      %v3233 = vsel %vm196, %v3228, %v3232
      %v3234 = vshrl.u32 %v3026, 16
      %v3236 = vrot.slane %v3234, 4
      %v3237 = vor.u32 %v3236, %v3232
      %v3238 = vrot.slane %v3237, 4
      %v3240 = vshll.u32 %v3027, 16
      %v3242 = vrot.slane %v3240, 5
      %v3243 = vsel %vm196, %v3238, %v3242
      %v3245 = vshrl.u32 %v3028, 16
      %v3247 = vrot.slane %v3245, 4
      %v3248 = vshll.u32 %v3028, 16
      %v3250 = vrot.slane %v3248, 5
      %v3251 = vor.u32 %v3247, %v3250
      %v3252 = vrot.slane %v3251, 4
      %v3254 = vshll.u32 %v3029, 16
      %v3256 = vrot.slane %v3254, 5
      %v3257 = vsel %vm196, %v3252, %v3256
      %v3258 = vshrl.u32 %v3029, 16
      %v3260 = vrot.slane %v3258, 4
      %v3261 = vor.u32 %v3260, %v3256
      %v3262 = vrot.slane %v3261, 4
      %v3264 = vshll.u32 %v3030, 16
      %v3266 = vrot.slane %v3264, 5
      %v3267 = vsel %vm196, %v3262, %v3266
      %v3269 = vshrl.u32 %v3031, 16
      %v3271 = vrot.slane %v3269, 4
      %v3272 = vshll.u32 %v3031, 16
      %v3274 = vrot.slane %v3272, 5
      %v3275 = vor.u32 %v3271, %v3274
      %v3276 = vrot.slane %v3275, 4
      %v3278 = vshll.u32 %v3032, 16
      %v3280 = vrot.slane %v3278, 5
      %v3281 = vsel %vm196, %v3276, %v3280
      %v3282 = vshrl.u32 %v3032, 16
      %v3284 = vrot.slane %v3282, 4
      %v3285 = vor.u32 %v3284, %v3280
      %v3286 = vrot.slane %v3285, 4
      %v3288 = vshll.u32 %v3033, 16
      %v3290 = vrot.slane %v3288, 5
      %v3291 = vsel %vm196, %v3286, %v3290
      %v3293 = vshrl.u32 %v3034, 16
      %v3295 = vrot.slane %v3293, 4
      %v3296 = vshll.u32 %v3034, 16
      %v3298 = vrot.slane %v3296, 5
      %v3299 = vor.u32 %v3295, %v3298
      %v3300 = vrot.slane %v3299, 4
      %v3302 = vshll.u32 %v3035, 16
      %v3304 = vrot.slane %v3302, 5
      %v3305 = vsel %vm196, %v3300, %v3304
      %v3306 = vshrl.u32 %v3035, 16
      %v3308 = vrot.slane %v3306, 4
      %v3309 = vor.u32 %v3308, %v3304
      %v3310 = vrot.slane %v3309, 4
      %v3312 = vshll.u32 %v3036, 16
      %v3314 = vrot.slane %v3312, 5
      %v3315 = vsel %vm196, %v3310, %v3314
      %v3317 = vshrl.u32 %v3037, 16
      %v3319 = vrot.slane %v3317, 4
      %v3320 = vshll.u32 %v3037, 16
      %v3322 = vrot.slane %v3320, 5
      %v3323 = vor.u32 %v3319, %v3322
      %v3324 = vrot.slane %v3323, 4
      %v3326 = vshll.u32 %v3038, 16
      %v3328 = vrot.slane %v3326, 5
      %v3329 = vsel %vm196, %v3324, %v3328
      %v3330 = vshrl.u32 %v3038, 16
      %v3332 = vrot.slane %v3330, 4
      %v3333 = vor.u32 %v3332, %v3328
      %v3334 = vrot.slane %v3333, 4
      %v3336 = vshll.u32 %v3039, 16
      %v3338 = vrot.slane %v3336, 5
      %v3339 = vsel %vm196, %v3334, %v3338
      %v3341 = vshrl.u32 %v3040, 16
      %v3343 = vrot.slane %v3341, 4
      %v3344 = vshll.u32 %v3040, 16
      %v3346 = vrot.slane %v3344, 5
      %v3347 = vor.u32 %v3343, %v3346
      %v3348 = vrot.slane %v3347, 4
      %v3350 = vshll.u32 %v3041, 16
      %v3352 = vrot.slane %v3350, 5
      %v3353 = vsel %vm196, %v3348, %v3352
      %v3354 = vshrl.u32 %v3041, 16
      %v3356 = vrot.slane %v3354, 4
      %v3357 = vor.u32 %v3356, %v3352
      %v3358 = vrot.slane %v3357, 4
      %v3360 = vshll.u32 %v3042, 16
      %v3362 = vrot.slane %v3360, 5
      %v3363 = vsel %vm196, %v3358, %v3362
      %v3365 = vshrl.u32 %v3043, 16
      %v3367 = vrot.slane %v3365, 4
      %v3368 = vshll.u32 %v3043, 16
      %v3370 = vrot.slane %v3368, 5
      %v3371 = vor.u32 %v3367, %v3370
      %v3372 = vrot.slane %v3371, 4
      %v3374 = vshll.u32 %v3044, 16
      %v3376 = vrot.slane %v3374, 5
      %v3377 = vsel %vm196, %v3372, %v3376
      %v3378 = vshrl.u32 %v3044, 16
      %v3380 = vrot.slane %v3378, 4
      %v3381 = vor.u32 %v3380, %v3376
      %v3382 = vrot.slane %v3381, 4
      %v3384 = vshll.u32 %v3045, 16
      %v3386 = vrot.slane %v3384, 5
      %v3387 = vsel %vm196, %v3382, %v3386
      %v3389 = vshrl.u32 %v3046, 16
      %v3391 = vrot.slane %v3389, 4
      %v3392 = vshll.u32 %v3046, 16
      %v3394 = vrot.slane %v3392, 5
      %v3395 = vor.u32 %v3391, %v3394
      %v3396 = vrot.slane %v3395, 4
      %v3398 = vshll.u32 %v3047, 16
      %v3400 = vrot.slane %v3398, 5
      %v3401 = vsel %vm196, %v3396, %v3400
      %v3402 = vshrl.u32 %v3047, 16
      %v3404 = vrot.slane %v3402, 4
      %v3405 = vor.u32 %v3404, %v3400
      %v3406 = vrot.slane %v3405, 4
      %v3408 = vshll.u32 %v3048, 16
      %v3410 = vrot.slane %v3408, 5
      %v3411 = vsel %vm196, %v3406, %v3410
      %v3413 = vshrl.u32 %v3049, 16
      %v3415 = vrot.slane %v3413, 4
      %v3416 = vshll.u32 %v3049, 16
      %v3418 = vrot.slane %v3416, 5
      %v3419 = vor.u32 %v3415, %v3418
      %v3420 = vrot.slane %v3419, 4
      %v3422 = vshll.u32 %v3050, 16
      %v3424 = vrot.slane %v3422, 5
      %v3425 = vsel %vm196, %v3420, %v3424
      %v3426 = vshrl.u32 %v3050, 16
      %v3428 = vrot.slane %v3426, 4
      %v3429 = vor.u32 %v3428, %v3424
      %v3430 = vrot.slane %v3429, 4
      %v3432 = vshll.u32 %v3051, 16
      %v3434 = vrot.slane %v3432, 5
      %v3435 = vsel %vm196, %v3430, %v3434
      %s3436 = scalar_lea.vmem %s1, 14
      %v3437 = vld [vmem:[%s3436] sm:$0x3]
      %v3438 = vunpack.c.l.b16 %v3065
      %v3439 = vunpack.c.l.b16 %v3075
      %v3440 = vunpack.c.l.b16 %v3089
      %v3441 = vunpack.c.l.b16 %v3099
      %v3442 = vunpack.c.l.b16 %v3113
      %v3443 = vunpack.c.l.b16 %v3123
      %v3444 = vunpack.c.l.b16 %v3137
      %v3445 = vunpack.c.l.b16 %v3147
      %v3446 = vunpack.c.l.b16 %v3161
      %v3447 = vunpack.c.l.b16 %v3171
      %v3448 = vunpack.c.l.b16 %v3185
      %v3449 = vunpack.c.l.b16 %v3195
      %v3450 = vunpack.c.l.b16 %v3209
      %v3451 = vunpack.c.l.b16 %v3219
      %v3452 = vunpack.c.l.b16 %v3233
      %v3453 = vunpack.c.l.b16 %v3243
      %v3454 = vunpack.c.l.b16 %v3257
      %v3455 = vunpack.c.l.b16 %v3267
      %v3456 = vunpack.c.l.b16 %v3281
      %v3457 = vunpack.c.l.b16 %v3291
      %v3458 = vunpack.c.l.b16 %v3305
      %v3459 = vunpack.c.l.b16 %v3315
      %v3460 = vunpack.c.l.b16 %v3329
      %v3461 = vunpack.c.l.b16 %v3339
      %v3462 = vunpack.c.l.b16 %v3353
      %v3463 = vunpack.c.l.b16 %v3363
      %v3464 = vunpack.c.l.b16 %v3377
      %v3465 = vunpack.c.l.b16 %v3387
      %v3466 = vunpack.c.l.b16 %v3401
      %v3467 = vunpack.c.l.b16 %v3411
      %v3468 = vunpack.c.l.b16 %v3425
      %v3469 = vunpack.c.l.b16 %v3435
      %v3470 = vpack.c.b16 %v3439, %v3438
      %v3471 = vpack.c.b16 %v3441, %v3440
      %v3472 = vpack.c.b16 %v3443, %v3442
      %v3473 = vpack.c.b16 %v3445, %v3444
      %v3474 = vpack.c.b16 %v3447, %v3446
      %v3475 = vpack.c.b16 %v3449, %v3448
      %v3476 = vpack.c.b16 %v3451, %v3450
      %v3477 = vpack.c.b16 %v3453, %v3452
      %v3478 = vpack.c.b16 %v3455, %v3454
      %v3479 = vpack.c.b16 %v3457, %v3456
      %v3480 = vpack.c.b16 %v3459, %v3458
      %v3481 = vpack.c.b16 %v3461, %v3460
      %v3482 = vpack.c.b16 %v3463, %v3462
      %v3483 = vpack.c.b16 %v3465, %v3464
      %v3484 = vpack.c.b16 %v3467, %v3466
      %v3485 = vpack.c.b16 %v3469, %v3468
      %v3487 = vsel %vm631, %v3470, 0
      %v3490 = vsel %vm631, %v3471, 0
      %v3493 = vsel %vm631, %v3472, 0
      %v3496 = vsel %vm631, %v3473, 0
      %v3499 = vsel %vm631, %v3474, 0
      %v3502 = vsel %vm631, %v3475, 0
      %v3505 = vsel %vm631, %v3476, 0
      %v3508 = vsel %vm631, %v3477, 0
      %v3511 = vsel %vm631, %v3478, 0
      %v3514 = vsel %vm631, %v3479, 0
      %v3517 = vsel %vm631, %v3480, 0
      %v3520 = vsel %vm631, %v3481, 0
      %v3523 = vsel %vm631, %v3482, 0
      %v3526 = vsel %vm631, %v3483, 0
      %v3529 = vsel %vm631, %v3484, 0
      %v3532 = vsel %vm631, %v3485, 0
      %v3535 = vsel %vm680, %v3437, 0
      %3537 = vmatpush.bf16.msra.mxu0 0
      %3538 = vmatpush.bf16.msra.mxu0 0
      %3539 = vmatpush.bf16.msra.mxu0 0
      %3540 = vmatpush.bf16.msra.mxu0 0
      %3541 = vmatpush.bf16.msra.mxu0 0
      %3542 = vmatpush.bf16.msra.mxu0 0
      %3543 = vmatpush.bf16.msra.mxu0 0
      %3544 = vmatpush.bf16.msra.mxu0 %v3535
      %3545 = vmatmul.bf16.gmra.mxu0 %v3487
      %v3546 = vpop.f32.mrf.mxu0
      %v3547 = vadd.f32 0.0, %v3546
      %v3548 = vpop.f32.mrf.mxu0
      %v3549 = vadd.f32 0.0, %v3548
      %3550 = vmatmul.bf16.gmra.mxu0 %v3490
      %v3551 = vpop.f32.mrf.mxu0
      %v3552 = vadd.f32 0.0, %v3551
      %v3553 = vpop.f32.mrf.mxu0
      %v3554 = vadd.f32 0.0, %v3553
      %3555 = vmatmul.bf16.gmra.mxu0 %v3493
      %v3556 = vpop.f32.mrf.mxu0
      %v3557 = vadd.f32 0.0, %v3556
      %v3558 = vpop.f32.mrf.mxu0
      %v3559 = vadd.f32 0.0, %v3558
      %3560 = vmatmul.bf16.gmra.mxu0 %v3496
      %v3561 = vpop.f32.mrf.mxu0
      %v3562 = vadd.f32 0.0, %v3561
      %v3563 = vpop.f32.mrf.mxu0
      %v3564 = vadd.f32 0.0, %v3563
      %3565 = vmatmul.bf16.gmra.mxu0 %v3499
      %v3566 = vpop.f32.mrf.mxu0
      %v3567 = vadd.f32 0.0, %v3566
      %v3568 = vpop.f32.mrf.mxu0
      %v3569 = vadd.f32 0.0, %v3568
      %3570 = vmatmul.bf16.gmra.mxu0 %v3502
      %v3571 = vpop.f32.mrf.mxu0
      %v3572 = vadd.f32 0.0, %v3571
      %v3573 = vpop.f32.mrf.mxu0
      %v3574 = vadd.f32 0.0, %v3573
      %3575 = vmatmul.bf16.gmra.mxu0 %v3505
      %v3576 = vpop.f32.mrf.mxu0
      %v3577 = vadd.f32 0.0, %v3576
      %v3578 = vpop.f32.mrf.mxu0
      %v3579 = vadd.f32 0.0, %v3578
      %3580 = vmatmul.bf16.gmra.mxu0 %v3508
      %v3581 = vpop.f32.mrf.mxu0
      %v3582 = vadd.f32 0.0, %v3581
      %v3583 = vpop.f32.mrf.mxu0
      %v3584 = vadd.f32 0.0, %v3583
      %3585 = vmatmul.bf16.gmra.mxu0 %v3511
      %v3586 = vpop.f32.mrf.mxu0
      %v3587 = vadd.f32 0.0, %v3586
      %v3588 = vpop.f32.mrf.mxu0
      %v3589 = vadd.f32 0.0, %v3588
      %3590 = vmatmul.bf16.gmra.mxu0 %v3514
      %v3591 = vpop.f32.mrf.mxu0
      %v3592 = vadd.f32 0.0, %v3591
      %v3593 = vpop.f32.mrf.mxu0
      %v3594 = vadd.f32 0.0, %v3593
      %3595 = vmatmul.bf16.gmra.mxu0 %v3517
      %v3596 = vpop.f32.mrf.mxu0
      %v3597 = vadd.f32 0.0, %v3596
      %v3598 = vpop.f32.mrf.mxu0
      %v3599 = vadd.f32 0.0, %v3598
      %3600 = vmatmul.bf16.gmra.mxu0 %v3520
      %v3601 = vpop.f32.mrf.mxu0
      %v3602 = vadd.f32 0.0, %v3601
      %v3603 = vpop.f32.mrf.mxu0
      %v3604 = vadd.f32 0.0, %v3603
      %3605 = vmatmul.bf16.gmra.mxu0 %v3523
      %v3606 = vpop.f32.mrf.mxu0
      %v3607 = vadd.f32 0.0, %v3606
      %v3608 = vpop.f32.mrf.mxu0
      %v3609 = vadd.f32 0.0, %v3608
      %3610 = vmatmul.bf16.gmra.mxu0 %v3526
      %v3611 = vpop.f32.mrf.mxu0
      %v3612 = vadd.f32 0.0, %v3611
      %v3613 = vpop.f32.mrf.mxu0
      %v3614 = vadd.f32 0.0, %v3613
      %3615 = vmatmul.bf16.gmra.mxu0 %v3529
      %v3616 = vpop.f32.mrf.mxu0
      %v3617 = vadd.f32 0.0, %v3616
      %v3618 = vpop.f32.mrf.mxu0
      %v3619 = vadd.f32 0.0, %v3618
      %3620 = vmatmul.bf16.gmra.mxu0 %v3532
      %v3621 = vpop.f32.mrf.mxu0
      %v3622 = vadd.f32 0.0, %v3621
      %v3623 = vpop.f32.mrf.mxu0
      %v3624 = vadd.f32 0.0, %v3623
      %3625 = vdwg.mxu0
      %v3626 = vadd.f32 %v2972, %v3547
      %v3627 = vadd.f32 %v2973, %v3549
      %v3628 = vadd.f32 %v2974, %v3552
      %v3629 = vadd.f32 %v2975, %v3554
      %v3630 = vadd.f32 %v2976, %v3557
      %v3631 = vadd.f32 %v2977, %v3559
      %v3632 = vadd.f32 %v2978, %v3562
      %v3633 = vadd.f32 %v2979, %v3564
      %v3634 = vadd.f32 %v2980, %v3567
      %v3635 = vadd.f32 %v2981, %v3569
      %v3636 = vadd.f32 %v2982, %v3572
      %v3637 = vadd.f32 %v2983, %v3574
      %v3638 = vadd.f32 %v2984, %v3577
      %v3639 = vadd.f32 %v2985, %v3579
      %v3640 = vadd.f32 %v2986, %v3582
      %v3641 = vadd.f32 %v2987, %v3584
      %v3642 = vadd.f32 %v2988, %v3587
      %v3643 = vadd.f32 %v2989, %v3589
      %v3644 = vadd.f32 %v2990, %v3592
      %v3645 = vadd.f32 %v2991, %v3594
      %v3646 = vadd.f32 %v2992, %v3597
      %v3647 = vadd.f32 %v2993, %v3599
      %v3648 = vadd.f32 %v2994, %v3602
      %v3649 = vadd.f32 %v2995, %v3604
      %v3650 = vadd.f32 %v2996, %v3607
      %v3651 = vadd.f32 %v2997, %v3609
      %v3652 = vadd.f32 %v2998, %v3612
      %v3653 = vadd.f32 %v2999, %v3614
      %v3654 = vadd.f32 %v3000, %v3617
      %v3655 = vadd.f32 %v3001, %v3619
      %v3656 = vadd.f32 %v3002, %v3622
      %v3657 = vadd.f32 %v3003, %v3624
      %v3658 = vld [vmem:[%s2717] sm:$0xe]
      %v3659 = vld [vmem:[%s2717 + $0xc] sm:$0xe]
      %v3660 = vld [vmem:[%s2717 + $0x18] sm:$0xe]
      %v3661 = vld [vmem:[%s2717 + $0x24] sm:$0xe]
      %v3662 = vld [vmem:[%s2717 + $0x30] sm:$0xe]
      %v3663 = vld [vmem:[%s2717 + $0x3c] sm:$0xe]
      %v3664 = vld [vmem:[%s2717 + $0x48] sm:$0xe]
      %v3665 = vld [vmem:[%s2717 + $0x54] sm:$0xe]
      %v3666 = vld [vmem:[%s2717 + $0x60] sm:$0xe]
      %v3667 = vld [vmem:[%s2717 + $0x6c] sm:$0xe]
      %v3668 = vld [vmem:[%s2717 + $0x78] sm:$0xe]
      %v3669 = vld [vmem:[%s2717 + $0x84] sm:$0xe]
      %v3670 = vld [vmem:[%s2717 + $0x90] sm:$0xe]
      %v3671 = vld [vmem:[%s2717 + $0x9c] sm:$0xe]
      %v3672 = vld [vmem:[%s2717 + $0xa8] sm:$0xe]
      %v3673 = vld [vmem:[%s2717 + $0xb4] sm:$0xe]
      %v3722 = vrot.slane %v3658, 5
      %v3723 = vrot.slane %v3722, 4
      %v3724 = vrot.slane %v3005, 5
      %v3725 = vsel %vm1043, %v3723, %v3724
      %v3726 = vrot.slane %v3724, 4
      %v3727 = vrot.slane %v3006, 5
      %v3728 = vsel %vm1043, %v3726, %v3727
      %v3729 = vrot.slane %v3659, 5
      %v3730 = vrot.slane %v3729, 4
      %v3731 = vrot.slane %v3008, 5
      %v3732 = vsel %vm1043, %v3730, %v3731
      %v3733 = vrot.slane %v3731, 4
      %v3734 = vrot.slane %v3009, 5
      %v3735 = vsel %vm1043, %v3733, %v3734
      %v3736 = vrot.slane %v3660, 5
      %v3737 = vrot.slane %v3736, 4
      %v3738 = vrot.slane %v3011, 5
      %v3739 = vsel %vm1043, %v3737, %v3738
      %v3740 = vrot.slane %v3738, 4
      %v3741 = vrot.slane %v3012, 5
      %v3742 = vsel %vm1043, %v3740, %v3741
      %v3743 = vrot.slane %v3661, 5
      %v3744 = vrot.slane %v3743, 4
      %v3745 = vrot.slane %v3014, 5
      %v3746 = vsel %vm1043, %v3744, %v3745
      %v3747 = vrot.slane %v3745, 4
      %v3748 = vrot.slane %v3015, 5
      %v3749 = vsel %vm1043, %v3747, %v3748
      %v3750 = vrot.slane %v3662, 5
      %v3751 = vrot.slane %v3750, 4
      %v3752 = vrot.slane %v3017, 5
      %v3753 = vsel %vm1043, %v3751, %v3752
      %v3754 = vrot.slane %v3752, 4
      %v3755 = vrot.slane %v3018, 5
      %v3756 = vsel %vm1043, %v3754, %v3755
      %v3757 = vrot.slane %v3663, 5
      %v3758 = vrot.slane %v3757, 4
      %v3759 = vrot.slane %v3020, 5
      %v3760 = vsel %vm1043, %v3758, %v3759
      %v3761 = vrot.slane %v3759, 4
      %v3762 = vrot.slane %v3021, 5
      %v3763 = vsel %vm1043, %v3761, %v3762
      %v3764 = vrot.slane %v3664, 5
      %v3765 = vrot.slane %v3764, 4
      %v3766 = vrot.slane %v3023, 5
      %v3767 = vsel %vm1043, %v3765, %v3766
      %v3768 = vrot.slane %v3766, 4
      %v3769 = vrot.slane %v3024, 5
      %v3770 = vsel %vm1043, %v3768, %v3769
      %v3771 = vrot.slane %v3665, 5
      %v3772 = vrot.slane %v3771, 4
      %v3773 = vrot.slane %v3026, 5
      %v3774 = vsel %vm1043, %v3772, %v3773
      %v3775 = vrot.slane %v3773, 4
      %v3776 = vrot.slane %v3027, 5
      %v3777 = vsel %vm1043, %v3775, %v3776
      %v3778 = vrot.slane %v3666, 5
      %v3779 = vrot.slane %v3778, 4
      %v3780 = vrot.slane %v3029, 5
      %v3781 = vsel %vm1043, %v3779, %v3780
      %v3782 = vrot.slane %v3780, 4
      %v3783 = vrot.slane %v3030, 5
      %v3784 = vsel %vm1043, %v3782, %v3783
      %v3785 = vrot.slane %v3667, 5
      %v3786 = vrot.slane %v3785, 4
      %v3787 = vrot.slane %v3032, 5
      %v3788 = vsel %vm1043, %v3786, %v3787
      %v3789 = vrot.slane %v3787, 4
      %v3790 = vrot.slane %v3033, 5
      %v3791 = vsel %vm1043, %v3789, %v3790
      %v3792 = vrot.slane %v3668, 5
      %v3793 = vrot.slane %v3792, 4
      %v3794 = vrot.slane %v3035, 5
      %v3795 = vsel %vm1043, %v3793, %v3794
      %v3796 = vrot.slane %v3794, 4
      %v3797 = vrot.slane %v3036, 5
      %v3798 = vsel %vm1043, %v3796, %v3797
      %v3799 = vrot.slane %v3669, 5
      %v3800 = vrot.slane %v3799, 4
      %v3801 = vrot.slane %v3038, 5
      %v3802 = vsel %vm1043, %v3800, %v3801
      %v3803 = vrot.slane %v3801, 4
      %v3804 = vrot.slane %v3039, 5
      %v3805 = vsel %vm1043, %v3803, %v3804
      %v3806 = vrot.slane %v3670, 5
      %v3807 = vrot.slane %v3806, 4
      %v3808 = vrot.slane %v3041, 5
      %v3809 = vsel %vm1043, %v3807, %v3808
      %v3810 = vrot.slane %v3808, 4
      %v3811 = vrot.slane %v3042, 5
      %v3812 = vsel %vm1043, %v3810, %v3811
      %v3813 = vrot.slane %v3671, 5
      %v3814 = vrot.slane %v3813, 4
      %v3815 = vrot.slane %v3044, 5
      %v3816 = vsel %vm1043, %v3814, %v3815
      %v3817 = vrot.slane %v3815, 4
      %v3818 = vrot.slane %v3045, 5
      %v3819 = vsel %vm1043, %v3817, %v3818
      %v3820 = vrot.slane %v3672, 5
      %v3821 = vrot.slane %v3820, 4
      %v3822 = vrot.slane %v3047, 5
      %v3823 = vsel %vm1043, %v3821, %v3822
      %v3824 = vrot.slane %v3822, 4
      %v3825 = vrot.slane %v3048, 5
      %v3826 = vsel %vm1043, %v3824, %v3825
      %v3827 = vrot.slane %v3673, 5
      %v3828 = vrot.slane %v3827, 4
      %v3829 = vrot.slane %v3050, 5
      %v3830 = vsel %vm1043, %v3828, %v3829
      %v3831 = vrot.slane %v3829, 4
      %v3832 = vrot.slane %v3051, 5
      %v3833 = vsel %vm1043, %v3831, %v3832
      %s3834 = scalar_lea.vmem %s1, 16
      %v3835 = vld [vmem:[%s3834] sm:$0x3]
      %v3836 = vunpack.c.l.b16 %v3725
      %v3837 = vunpack.c.l.b16 %v3728
      %v3838 = vunpack.c.l.b16 %v3732
      %v3839 = vunpack.c.l.b16 %v3735
      %v3840 = vunpack.c.l.b16 %v3739
      %v3841 = vunpack.c.l.b16 %v3742
      %v3842 = vunpack.c.l.b16 %v3746
      %v3843 = vunpack.c.l.b16 %v3749
      %v3844 = vunpack.c.l.b16 %v3753
      %v3845 = vunpack.c.l.b16 %v3756
      %v3846 = vunpack.c.l.b16 %v3760
      %v3847 = vunpack.c.l.b16 %v3763
      %v3848 = vunpack.c.l.b16 %v3767
      %v3849 = vunpack.c.l.b16 %v3770
      %v3850 = vunpack.c.l.b16 %v3774
      %v3851 = vunpack.c.l.b16 %v3777
      %v3852 = vunpack.c.l.b16 %v3781
      %v3853 = vunpack.c.l.b16 %v3784
      %v3854 = vunpack.c.l.b16 %v3788
      %v3855 = vunpack.c.l.b16 %v3791
      %v3856 = vunpack.c.l.b16 %v3795
      %v3857 = vunpack.c.l.b16 %v3798
      %v3858 = vunpack.c.l.b16 %v3802
      %v3859 = vunpack.c.l.b16 %v3805
      %v3860 = vunpack.c.l.b16 %v3809
      %v3861 = vunpack.c.l.b16 %v3812
      %v3862 = vunpack.c.l.b16 %v3816
      %v3863 = vunpack.c.l.b16 %v3819
      %v3864 = vunpack.c.l.b16 %v3823
      %v3865 = vunpack.c.l.b16 %v3826
      %v3866 = vunpack.c.l.b16 %v3830
      %v3867 = vunpack.c.l.b16 %v3833
      %v3868 = vpack.c.b16 %v3837, %v3836
      %v3869 = vpack.c.b16 %v3839, %v3838
      %v3870 = vpack.c.b16 %v3841, %v3840
      %v3871 = vpack.c.b16 %v3843, %v3842
      %v3872 = vpack.c.b16 %v3845, %v3844
      %v3873 = vpack.c.b16 %v3847, %v3846
      %v3874 = vpack.c.b16 %v3849, %v3848
      %v3875 = vpack.c.b16 %v3851, %v3850
      %v3876 = vpack.c.b16 %v3853, %v3852
      %v3877 = vpack.c.b16 %v3855, %v3854
      %v3878 = vpack.c.b16 %v3857, %v3856
      %v3879 = vpack.c.b16 %v3859, %v3858
      %v3880 = vpack.c.b16 %v3861, %v3860
      %v3881 = vpack.c.b16 %v3863, %v3862
      %v3882 = vpack.c.b16 %v3865, %v3864
      %v3883 = vpack.c.b16 %v3867, %v3866
      %v3885 = vsel %vm631, %v3868, 0
      %v3888 = vsel %vm631, %v3869, 0
      %v3891 = vsel %vm631, %v3870, 0
      %v3894 = vsel %vm631, %v3871, 0
      %v3897 = vsel %vm631, %v3872, 0
      %v3900 = vsel %vm631, %v3873, 0
      %v3903 = vsel %vm631, %v3874, 0
      %v3906 = vsel %vm631, %v3875, 0
      %v3909 = vsel %vm631, %v3876, 0
      %v3912 = vsel %vm631, %v3877, 0
      %v3915 = vsel %vm631, %v3878, 0
      %v3918 = vsel %vm631, %v3879, 0
      %v3921 = vsel %vm631, %v3880, 0
      %v3924 = vsel %vm631, %v3881, 0
      %v3927 = vsel %vm631, %v3882, 0
      %v3930 = vsel %vm631, %v3883, 0
      %v3933 = vsel %vm680, %v3835, 0
      %3935 = vmatpush.bf16.msra.mxu0 0
      %3936 = vmatpush.bf16.msra.mxu0 0
      %3937 = vmatpush.bf16.msra.mxu0 0
      %3938 = vmatpush.bf16.msra.mxu0 0
      %3939 = vmatpush.bf16.msra.mxu0 0
      %3940 = vmatpush.bf16.msra.mxu0 0
      %3941 = vmatpush.bf16.msra.mxu0 0
      %3942 = vmatpush.bf16.msra.mxu0 %v3933
      %3943 = vmatmul.bf16.gmra.mxu0 %v3885
      %v3944 = vpop.f32.mrf.mxu0
      %v3945 = vadd.f32 0.0, %v3944
      %v3946 = vpop.f32.mrf.mxu0
      %v3947 = vadd.f32 0.0, %v3946
      %3948 = vmatmul.bf16.gmra.mxu0 %v3888
      %v3949 = vpop.f32.mrf.mxu0
      %v3950 = vadd.f32 0.0, %v3949
      %v3951 = vpop.f32.mrf.mxu0
      %v3952 = vadd.f32 0.0, %v3951
      %3953 = vmatmul.bf16.gmra.mxu0 %v3891
      %v3954 = vpop.f32.mrf.mxu0
      %v3955 = vadd.f32 0.0, %v3954
      %v3956 = vpop.f32.mrf.mxu0
      %v3957 = vadd.f32 0.0, %v3956
      %3958 = vmatmul.bf16.gmra.mxu0 %v3894
      %v3959 = vpop.f32.mrf.mxu0
      %v3960 = vadd.f32 0.0, %v3959
      %v3961 = vpop.f32.mrf.mxu0
      %v3962 = vadd.f32 0.0, %v3961
      %3963 = vmatmul.bf16.gmra.mxu0 %v3897
      %v3964 = vpop.f32.mrf.mxu0
      %v3965 = vadd.f32 0.0, %v3964
      %v3966 = vpop.f32.mrf.mxu0
      %v3967 = vadd.f32 0.0, %v3966
      %3968 = vmatmul.bf16.gmra.mxu0 %v3900
      %v3969 = vpop.f32.mrf.mxu0
      %v3970 = vadd.f32 0.0, %v3969
      %v3971 = vpop.f32.mrf.mxu0
      %v3972 = vadd.f32 0.0, %v3971
      %3973 = vmatmul.bf16.gmra.mxu0 %v3903
      %v3974 = vpop.f32.mrf.mxu0
      %v3975 = vadd.f32 0.0, %v3974
      %v3976 = vpop.f32.mrf.mxu0
      %v3977 = vadd.f32 0.0, %v3976
      %3978 = vmatmul.bf16.gmra.mxu0 %v3906
      %v3979 = vpop.f32.mrf.mxu0
      %v3980 = vadd.f32 0.0, %v3979
      %v3981 = vpop.f32.mrf.mxu0
      %v3982 = vadd.f32 0.0, %v3981
      %3983 = vmatmul.bf16.gmra.mxu0 %v3909
      %v3984 = vpop.f32.mrf.mxu0
      %v3985 = vadd.f32 0.0, %v3984
      %v3986 = vpop.f32.mrf.mxu0
      %v3987 = vadd.f32 0.0, %v3986
      %3988 = vmatmul.bf16.gmra.mxu0 %v3912
      %v3989 = vpop.f32.mrf.mxu0
      %v3990 = vadd.f32 0.0, %v3989
      %v3991 = vpop.f32.mrf.mxu0
      %v3992 = vadd.f32 0.0, %v3991
      %3993 = vmatmul.bf16.gmra.mxu0 %v3915
      %v3994 = vpop.f32.mrf.mxu0
      %v3995 = vadd.f32 0.0, %v3994
      %v3996 = vpop.f32.mrf.mxu0
      %v3997 = vadd.f32 0.0, %v3996
      %3998 = vmatmul.bf16.gmra.mxu0 %v3918
      %v3999 = vpop.f32.mrf.mxu0
      %v4000 = vadd.f32 0.0, %v3999
      %v4001 = vpop.f32.mrf.mxu0
      %v4002 = vadd.f32 0.0, %v4001
      %4003 = vmatmul.bf16.gmra.mxu0 %v3921
      %v4004 = vpop.f32.mrf.mxu0
      %v4005 = vadd.f32 0.0, %v4004
      %v4006 = vpop.f32.mrf.mxu0
      %v4007 = vadd.f32 0.0, %v4006
      %4008 = vmatmul.bf16.gmra.mxu0 %v3924
      %v4009 = vpop.f32.mrf.mxu0
      %v4010 = vadd.f32 0.0, %v4009
      %v4011 = vpop.f32.mrf.mxu0
      %v4012 = vadd.f32 0.0, %v4011
      %4013 = vmatmul.bf16.gmra.mxu0 %v3927
      %v4014 = vpop.f32.mrf.mxu0
      %v4015 = vadd.f32 0.0, %v4014
      %v4016 = vpop.f32.mrf.mxu0
      %v4017 = vadd.f32 0.0, %v4016
      %4018 = vmatmul.bf16.gmra.mxu0 %v3930
      %v4019 = vpop.f32.mrf.mxu0
      %v4020 = vadd.f32 0.0, %v4019
      %v4021 = vpop.f32.mrf.mxu0
      %v4022 = vadd.f32 0.0, %v4021
      %4023 = vdwg.mxu0
      %v4024 = vadd.f32 %v3626, %v3945
      %v4025 = vadd.f32 %v3627, %v3947
      %v4026 = vadd.f32 %v3628, %v3950
      %v4027 = vadd.f32 %v3629, %v3952
      %v4028 = vadd.f32 %v3630, %v3955
      %v4029 = vadd.f32 %v3631, %v3957
      %v4030 = vadd.f32 %v3632, %v3960
      %v4031 = vadd.f32 %v3633, %v3962
      %v4032 = vadd.f32 %v3634, %v3965
      %v4033 = vadd.f32 %v3635, %v3967
      %v4034 = vadd.f32 %v3636, %v3970
      %v4035 = vadd.f32 %v3637, %v3972
      %v4036 = vadd.f32 %v3638, %v3975
      %v4037 = vadd.f32 %v3639, %v3977
      %v4038 = vadd.f32 %v3640, %v3980
      %v4039 = vadd.f32 %v3641, %v3982
      %v4040 = vadd.f32 %v3642, %v3985
      %v4041 = vadd.f32 %v3643, %v3987
      %v4042 = vadd.f32 %v3644, %v3990
      %v4043 = vadd.f32 %v3645, %v3992
      %v4044 = vadd.f32 %v3646, %v3995
      %v4045 = vadd.f32 %v3647, %v3997
      %v4046 = vadd.f32 %v3648, %v4000
      %v4047 = vadd.f32 %v3649, %v4002
      %v4048 = vadd.f32 %v3650, %v4005
      %v4049 = vadd.f32 %v3651, %v4007
      %v4050 = vadd.f32 %v3652, %v4010
      %v4051 = vadd.f32 %v3653, %v4012
      %v4052 = vadd.f32 %v3654, %v4015
      %v4053 = vadd.f32 %v3655, %v4017
      %v4054 = vadd.f32 %v3656, %v4020
      %v4055 = vadd.f32 %v3657, %v4022
      %4056 = vst [vmem:[%s143] sm:$0xff] %v4024
      %4057 = vst [vmem:[%s143 + $0x8] sm:$0xff] %v4025
      %4058 = vst [vmem:[%s143 + $0x10] sm:$0xff] %v4026
      %4059 = vst [vmem:[%s143 + $0x18] sm:$0xff] %v4027
      %4060 = vst [vmem:[%s143 + $0x20] sm:$0xff] %v4028
      %4061 = vst [vmem:[%s143 + $0x28] sm:$0xff] %v4029
      %4062 = vst [vmem:[%s143 + $0x30] sm:$0xff] %v4030
      %4063 = vst [vmem:[%s143 + $0x38] sm:$0xff] %v4031
      %4064 = vst [vmem:[%s143 + $0x40] sm:$0xff] %v4032
      %4065 = vst [vmem:[%s143 + $0x48] sm:$0xff] %v4033
      %4066 = vst [vmem:[%s143 + $0x50] sm:$0xff] %v4034
      %4067 = vst [vmem:[%s143 + $0x58] sm:$0xff] %v4035
      %4068 = vst [vmem:[%s143 + $0x60] sm:$0xff] %v4036
      %4069 = vst [vmem:[%s143 + $0x68] sm:$0xff] %v4037
      %4070 = vst [vmem:[%s143 + $0x70] sm:$0xff] %v4038
      %4071 = vst [vmem:[%s143 + $0x78] sm:$0xff] %v4039
      %4072 = vst [vmem:[%s143 + $0x80] sm:$0xff] %v4040
      %4073 = vst [vmem:[%s143 + $0x88] sm:$0xff] %v4041
      %4074 = vst [vmem:[%s143 + $0x90] sm:$0xff] %v4042
      %4075 = vst [vmem:[%s143 + $0x98] sm:$0xff] %v4043
      %4076 = vst [vmem:[%s143 + $0xa0] sm:$0xff] %v4044
      %4077 = vst [vmem:[%s143 + $0xa8] sm:$0xff] %v4045
      %4078 = vst [vmem:[%s143 + $0xb0] sm:$0xff] %v4046
      %4079 = vst [vmem:[%s143 + $0xb8] sm:$0xff] %v4047
      %4080 = vst [vmem:[%s143 + $0xc0] sm:$0xff] %v4048
      %4081 = vst [vmem:[%s143 + $0xc8] sm:$0xff] %v4049
      %4082 = vst [vmem:[%s143 + $0xd0] sm:$0xff] %v4050
      %4083 = vst [vmem:[%s143 + $0xd8] sm:$0xff] %v4051
      %4084 = vst [vmem:[%s143 + $0xe0] sm:$0xff] %v4052
      %4085 = vst [vmem:[%s143 + $0xe8] sm:$0xff] %v4053
      %4086 = vst [vmem:[%s143 + $0xf0] sm:$0xff] %v4054
      %4087 = vst [vmem:[%s143 + $0xf8] sm:$0xff] %v4055
      %p4088 = scmp.lt.s32.totalorder %s13, 1
      %s4089 = scalar_select %p4088, %s13, 1
      %s4090 = smul.addr %s4089, 32
      %s4091 = smul.addr %s4090, 8
      %s4092 = scalar_lea.vmem %s2, %s4091
      // Predicated region
      $region29: #{my_conv_forward.1} parent=27 // pred_check
        %p4093 = pneg %p78
      $region30: #{my_conv_forward.1} parent=27 // pred_check_branch
        %4095 = sbr.rel (%p4093) target = $region32
      $region31: #{my_conv_forward.1} parent=27 // pred_region
        _
      $region32: #{my_conv_forward.1} parent=27 // pred_fallthru
        _
    $region28: #{my_conv_forward.1} parent=5 // pred_fallthru
      _
    %p4096 = scmp.le.s32.totalorder 2, %s8
    // Predicated region
    $region33: #{my_conv_forward.1} parent=5 // pred_check
      %p4097 = pneg %p4096
    $region34: #{my_conv_forward.1} parent=5 // pred_check_branch
      %4099 = sbr.rel (%p4097) target = $region36
    $region35: #{my_conv_forward.1} parent=5 // pred_region
      %s4100 = ssub.s32 %s8, 2
      // Predicated region
      $region37: #{my_conv_forward.1} parent=35 // pred_check
        %p4101 = pneg %p84
      $region38: #{my_conv_forward.1} parent=35 // pred_check_branch
        %4103 = sbr.rel (%p4101) target = $region40
      $region39: #{my_conv_forward.1} parent=35 // pred_region
        %p4104 = scmp.lt.s32.totalorder %s14, 1
        %s4105 = scalar_select %p4104, %s14, 1
        %s4106 = smul.addr %s4105, 32
        %s4107 = smul.addr %s4106, 8
        %s4108 = scalar_lea.vmem %s2, %s4107
      $region40: #{my_conv_forward.1} parent=35 // pred_fallthru
        _
    $region36: #{my_conv_forward.1} parent=5 // pred_fallthru
      _
  $region6: #{my_conv_forward.1} parent=0 // loop_footer
    %s12 = sadd.s32 1, %s8
  $region7: #{my_conv_forward.1} parent=0 // loop_footer_branch
    %7 = sbr.rel target = $region3
  $region8: #{my_conv_forward.1} parent=0 // loop_exit
    _

</llo_original>
